<compile_context>
chip_gen: v7x
topology: tpu7x:2x2x1
jax: 0.10.0
libtpu: 0.0.40
codegen_flags: <defaults>
</compile_context>

<pallas_src>
import functools

import jax
import jax.numpy as jnp
from jax import lax
from jax.experimental import pallas as pl
from jax.experimental.pallas import tpu as pltpu

VARIANCE = 1.0
LENGTHSCALE = 1.0
JITTER = 1e-4
MAX_TILE_N = 2048                  # per-step VMEM ~1 MiB, nowhere near limits
MXU_DIST_MIN_D = 8                 # below this the unrolled VPU loop wins
_VMEM_LIMIT = 32 * 1024 * 1024


def _round_up(x, m):
    return ((x + m - 1) // m) * m


def _choose_tile(np_cols, max_tile=MAX_TILE_N):
    """np_cols is a multiple of 128.  Pick the largest 128-multiple divisor of
    np_cols that is <= max_tile; split once more if that leaves a single grid
    step so the "parallel" axis can shard across v7x's 2 TensorCores."""
    k = np_cols // 128
    d = 1
    for cand in range(1, min(k, max_tile // 128) + 1):
        if k % cand == 0:
            d = cand
    tile = d * 128
    if tile == np_cols and k % 2 == 0 and k >= 2:
        tile = np_cols // 2
    return tile


def lower_cholesky_transform(Lu_raw):
    # torch.distributions.transform_to(constraints.lower_cholesky):
    #   tril(x, -1) + diag_embed(exp(diag(x)))
    return jnp.tril(Lu_raw, -1) + jnp.diag(jnp.exp(jnp.diag(Lu_raw)))


# --------------------------------------------------------------------------
# Kernel 1 (tiny, single shot): Kzz + jitter*I and diff = Lu Lu^T - Kzz.
#   No host-side Z.T input; distances via clamped MXU form (no transposes).
# --------------------------------------------------------------------------
def _kzz_diff_body(z_ref, lu_ref, kzz_ref, diff_ref, *, variance, inv_ls2,
                   jitter, m):
    z = z_ref[...]                                            # (M, D)
    zsq = z * z
    zz_col = jnp.sum(zsq, axis=1, keepdims=True)              # (M, 1)
    ones = jnp.ones((1, z.shape[1]), jnp.float32)
    zz_row = lax.dot_general(ones, zsq, (((1,), (1,)), ((), ())),
                             preferred_element_type=jnp.float32,
                             precision=lax.Precision.HIGHEST)  # (1, M), no transpose
    gram = lax.dot_general(z, z, (((1,), (1,)), ((), ())),     # Z @ Z^T
                           preferred_element_type=jnp.float32,
                           precision=lax.Precision.HIGHEST)
    sq = jnp.maximum(zz_col + zz_row - 2.0 * gram, 0.0)        # cancellation guard
    kzz = variance * jnp.exp(-0.5 * sq * inv_ls2)
    eye = (lax.broadcasted_iota(jnp.int32, (m, m), 0)
           == lax.broadcasted_iota(jnp.int32, (m, m), 1)).astype(jnp.float32)
    kzz_ref[...] = kzz + jitter * eye                          # Cholesky-ready
    lu = lu_ref[...]                                           # (M, M)
    s = lax.dot_general(lu, lu, (((1,), (1,)), ((), ())),      # Lu @ Lu^T
                        preferred_element_type=jnp.float32,
                        precision=lax.Precision.HIGHEST)
    diff_ref[...] = s - kzz


def kzz_jittered_and_diff(Z, Lu, variance=VARIANCE, lengthscale=LENGTHSCALE,
                          jitter=JITTER):
    M = Z.shape[0]
    body = functools.partial(_kzz_diff_body, variance=variance,
                             inv_ls2=1.0 / (lengthscale * lengthscale),
                             jitter=jitter, m=M)
    return pl.pallas_call(
        body,
        out_shape=(jax.ShapeDtypeStruct((M, M), jnp.float32),
                   jax.ShapeDtypeStruct((M, M), jnp.float32)),
        in_specs=[pl.BlockSpec(memory_space=pltpu.MemorySpace.VMEM)] * 2,
        out_specs=(pl.BlockSpec(memory_space=pltpu.MemorySpace.VMEM),
                   pl.BlockSpec(memory_space=pltpu.MemorySpace.VMEM)),
    )(Z.astype(jnp.float32), Lu.astype(jnp.float32))


# --------------------------------------------------------------------------
# Kernel 2 (fused, N-tiled): per tile compute Kzx on the fly, one MXU dot
# C @ Kzx (C = [B; alpha^T]) gives dw rows + mean row, cov from a VPU
# multiply + XLU column sum.  Output is a single (2, tile) lane-dense slab.
# --------------------------------------------------------------------------
def _fused_predictive_body(z_ref, xt_ref, c_ref, out_ref, *, variance, inv_ls2,
                           dim, m, use_mxu):
    z = z_ref[...]                                            # (M, D)
    xt = xt_ref[...]                                          # (D, T)
    if use_mxu:
        zz = jnp.sum(z * z, axis=1, keepdims=True)            # (M, 1)
        xx = jnp.sum(xt * xt, axis=0, keepdims=True)          # (1, T)
        gram = lax.dot_general(z, xt, (((1,), (0,)), ((), ())),
                               preferred_element_type=jnp.float32,
                               precision=lax.Precision.HIGHEST)
        sq = jnp.maximum(zz + xx - 2.0 * gram, 0.0)           # cancellation guard
    else:
        sq = jnp.zeros((z.shape[0], xt.shape[1]), jnp.float32)
        for d in range(dim):                                   # D tiny; unrolled
            delta = z[:, d:d + 1] - xt[d:d + 1, :]             # (M,1)-(1,T)->(M,T)
            sq = sq + delta * delta
    kzx = variance * jnp.exp(-0.5 * sq * inv_ls2)              # (M, T), VMEM only
    cw = lax.dot_general(c_ref[...], kzx, (((1,), (0,)), ((), ())),
                         preferred_element_type=jnp.float32,
                         precision=lax.Precision.HIGHEST)      # (M+1, T)
    dw = cw[:m, :]                                             # B @ Kzx
    mean = cw[m:m + 1, :]                                      # alpha^T Kzx
    cov = variance + jnp.sum(dw * kzx, axis=0, keepdims=True)  # (1, T)
    out_ref[...] = jnp.concatenate([mean, cov], axis=0)        # (2, T)


def fused_predictive(Z, Xt, C, tile, variance=VARIANCE, lengthscale=LENGTHSCALE):
    M, D = Z.shape
    Np = Xt.shape[1]
    use_mxu = D >= MXU_DIST_MIN_D
    body = functools.partial(_fused_predictive_body, variance=variance,
                             inv_ls2=1.0 / (lengthscale * lengthscale),
                             dim=D, m=M, use_mxu=use_mxu)
    cost = pl.CostEstimate(
        flops=2 * M * D * Np + 2 * (M + 1) * M * Np + 6 * M * Np,
        transcendentals=M * Np,
        bytes_accessed=4 * (M * D + D * Np + (M + 1) * M + 2 * Np))
    return pl.pallas_call(
        body,
        out_shape=jax.ShapeDtypeStruct((2, Np), jnp.float32),
        grid=(Np // tile,),
        in_specs=[pl.BlockSpec((M, D), lambda j: (0, 0)),        # Z resident
                  pl.BlockSpec((D, tile), lambda j: (0, j)),     # X streamed, lane-dense
                  pl.BlockSpec((M + 1, M), lambda j: (0, 0))],   # [B; alpha^T] resident
        out_specs=pl.BlockSpec((2, tile), lambda j: (0, j)),     # [mean; cov]
        compiler_params=pltpu.CompilerParams(
            dimension_semantics=("parallel",),
            vmem_limit_bytes=_VMEM_LIMIT),
        cost_estimate=cost,
    )(Z.astype(jnp.float32), Xt.astype(jnp.float32), C.astype(jnp.float32))


# --------------------------------------------------------------------------
# SVGP forward (tiny M x M glue in plain JAX, N-proportional work in Pallas)
# --------------------------------------------------------------------------
def svgp_forward(X, Z, Lu_raw, mu, jitter=JITTER):
    N, D = X.shape
    M = Z.shape[0]

    # 128-granular lane padding, decoupled from the tile size.
    Np = _round_up(max(N, 128), 128)
    tile = _choose_tile(Np)
    Xt = X.T.astype(jnp.float32)                               # (D, N) lane-major
    if Np != N:
        Xt = jnp.pad(Xt, ((0, 0), (0, Np - N)))

    Lu = lower_cholesky_transform(Lu_raw.astype(jnp.float32))  # (M, M)

    # Tiny M x M pieces, computed once: Kzz + jitter*I and diff = Lu Lu^T - Kzz.
    Kzz_jit, diff = kzz_jittered_and_diff(Z, Lu, jitter=jitter)

    # TODO(synk): Cholesky / triangular solves have no Pallas equivalent; they
    # are M x M (tiny) so they stay in plain JAX.
    with jax.default_matmul_precision("highest"):
        L = jnp.linalg.cholesky(Kzz_jit)
        alpha = jax.scipy.linalg.cho_solve(
            (L, True), mu.reshape(M, 1).astype(jnp.float32))    # Kzz^{-1} mu
        B = jax.scipy.linalg.cho_solve(
            (L, True), jax.scipy.linalg.cho_solve((L, True), diff).T)
        C = jnp.concatenate([B, alpha.T], axis=0)               # (M+1, M)

    out = fused_predictive(Z, Xt, C, tile)                      # (2, Np)
    mean = out[0, :N]
    cov_diag = jnp.maximum(out[1, :N], 0.0)                     # f32 roundoff guard
    std = jnp.sqrt(cov_diag)

    # qF = Normal(mean, std); qU = MVN(mu, scale_tril=Lu); pU = MVN(0, scale_tril=L)
    qF = (mean, std)
    qU = (mu, Lu)
    pU = (jnp.zeros_like(mu), L)
    return qF, qU, pU


# --------------------------------------------------------------------------
# Pure-JAX reference (sanity check)
# --------------------------------------------------------------------------
def _ref_forward(X, Z, Lu_raw, mu, jitter=JITTER):
    with jax.default_matmul_precision("highest"):
        def gram(A, B):
            sq = (jnp.sum(A * A, -1)[:, None] + jnp.sum(B * B, -1)[None, :]
                  - 2.0 * A @ B.T)
            return VARIANCE * jnp.exp(-0.5 * jnp.maximum(sq, 0.0) / LENGTHSCALE ** 2)

        M = Z.shape[0]
        Kxx = jnp.full((X.shape[0],), VARIANCE, jnp.float32)
        Kzx = gram(Z, X)
        Kzz = gram(Z, Z)
        L = jnp.linalg.cholesky(Kzz + jitter * jnp.eye(M))
        W = jax.scipy.linalg.cho_solve((L, True), Kzx).T
        Lu = lower_cholesky_transform(Lu_raw)
        S = Lu @ Lu.T
        diff = S - Kzz
        mean = (W @ mu[:, None])[:, 0]
        cov_diag = Kxx + jnp.sum((W @ diff) * W, axis=-1)
        return mean, cov_diag


if __name__ == "__main__":
    key = jax.random.PRNGKey(0)
    kx, kz, kl, km = jax.random.split(key, 4)

    # Small demo that still exercises the grid (N=1000 -> Np=1024, tile=512,
    # 2 grid steps); M/D mirror the torch module (M inducing points, tiny dim).
    N, D, M = 1000, 4, 16
    X = jax.random.normal(kx, (N, D), dtype=jnp.float32)
    Z = jax.random.normal(kz, (M, D), dtype=jnp.float32)        # nn.Parameter(randn(M, dim))
    Lu_raw = jax.random.normal(kl, (M, M), dtype=jnp.float32)   # nn.Parameter(randn(M, M))
    mu = 0.1 * jax.random.normal(km, (M,), dtype=jnp.float32)   # mu parameter (nonzero to exercise mean path)

    fwd = jax.jit(svgp_forward)
    (mean, std), (qU_mu, qU_Lu), (pU_mu, pU_L) = jax.block_until_ready(
        fwd(X, Z, Lu_raw, mu))

    # Sanity check against plain-JAX reference.
    ref_mean, ref_cov = _ref_forward(X, Z, Lu_raw, mu)
    assert jnp.allclose(mean, ref_mean, atol=2e-3, rtol=2e-3)
    assert jnp.allclose(std ** 2, jnp.maximum(ref_cov, 0.0), atol=2e-3, rtol=2e-3)

    print("KERNEL_OK")
</pallas_src>

<mosaic_0001>
module attributes {stable_mosaic.version = 11 : i64} {
  func.func @_kzz_diff_body(%arg0: memref<16x4xf32, #tpu.memory_space<vmem>>, %arg1: memref<16x16xf32, #tpu.memory_space<vmem>>, %arg2: memref<16x16xf32, #tpu.memory_space<vmem>>, %arg3: memref<16x16xf32, #tpu.memory_space<vmem>>) attributes {dimension_semantics = [], scalar_prefetch = 0 : i64, scratch_operands = 0 : i64, tpu.core_type = #tpu.core_type<tc>} {
    %c0 = arith.constant 0 : index
    %c0_0 = arith.constant 0 : index
    %0 = vector.load %arg0[%c0, %c0_0] : memref<16x4xf32, #tpu.memory_space<vmem>>, vector<16x4xf32>
    %1 = arith.mulf %0, %0 : vector<16x4xf32>
    %cst = arith.constant dense<0.000000e+00> : vector<16xf32>
    %2 = vector.multi_reduction <add>, %1, %cst [1] : vector<16x4xf32> to vector<16xf32>
    %3 = vector.shape_cast %2 : vector<16xf32> to vector<16x1xf32>
    %cst_1 = arith.constant 1.000000e+00 : f32
    %4 = vector.broadcast %cst_1 : f32 to vector<1x4xf32>
    %cst_2 = arith.constant dense<0.000000e+00> : vector<1x16xf32>
    %5 = tpu.matmul %4, %1, %cst_2 {dimension_numbers = #tpu.dot_dimension_numbers<[1], [1], [0], [0], [0, 0, 1, 0], [], []>, precision = #tpu.contract_precision<fp32>} : vector<1x4xf32>, vector<16x4xf32>, vector<1x16xf32> -> vector<1x16xf32>
    %cst_3 = arith.constant dense<0.000000e+00> : vector<16x16xf32>
    %6 = tpu.matmul %0, %0, %cst_3 {dimension_numbers = #tpu.dot_dimension_numbers<[1], [1], [0], [0], [0, 0, 1, 0], [], []>, precision = #tpu.contract_precision<fp32>} : vector<16x4xf32>, vector<16x4xf32>, vector<16x16xf32> -> vector<16x16xf32>
    %7 = vector.broadcast %3 : vector<16x1xf32> to vector<16x16xf32>
    %8 = vector.broadcast %5 : vector<1x16xf32> to vector<16x16xf32>
    %9 = arith.addf %7, %8 : vector<16x16xf32>
    %cst_4 = arith.constant 2.000000e+00 : f32
    %10 = vector.broadcast %cst_4 : f32 to vector<16x16xf32>
    %11 = arith.mulf %10, %6 : vector<16x16xf32>
    %12 = arith.subf %9, %11 : vector<16x16xf32>
    %cst_5 = arith.constant 0.000000e+00 : f32
    %13 = vector.broadcast %cst_5 : f32 to vector<16x16xf32>
    %14 = arith.maximumf %12, %13 : vector<16x16xf32>
    %cst_6 = arith.constant -5.000000e-01 : f32
    %15 = vector.broadcast %cst_6 : f32 to vector<16x16xf32>
    %16 = arith.mulf %15, %14 : vector<16x16xf32>
    %cst_7 = arith.constant 1.000000e+00 : f32
    %17 = vector.broadcast %cst_7 : f32 to vector<16x16xf32>
    %18 = arith.mulf %16, %17 : vector<16x16xf32>
    %19 = math.exp %18 : vector<16x16xf32>
    %cst_8 = arith.constant 1.000000e+00 : f32
    %20 = vector.broadcast %cst_8 : f32 to vector<16x16xf32>
    %21 = arith.mulf %20, %19 : vector<16x16xf32>
    %22 = tpu.iota {dimensions = array<i32: 0>} : vector<16x16xi32>
    %23 = tpu.iota {dimensions = array<i32: 1>} : vector<16x16xi32>
    %24 = arith.cmpi eq, %22, %23 : vector<16x16xi32>
    %25 = arith.extui %24 : vector<16x16xi1> to vector<16x16xi32>
    %26 = arith.sitofp %25 : vector<16x16xi32> to vector<16x16xf32>
    %cst_9 = arith.constant 9.99999974E-5 : f32
    %27 = vector.broadcast %cst_9 : f32 to vector<16x16xf32>
    %28 = arith.mulf %27, %26 : vector<16x16xf32>
    %29 = arith.addf %21, %28 : vector<16x16xf32>
    %c0_10 = arith.constant 0 : index
    %c0_11 = arith.constant 0 : index
    %30 = vector.load %arg2[%c0_10, %c0_11] : memref<16x16xf32, #tpu.memory_space<vmem>>, vector<16x16xf32>
    tpu.vector_store %arg2[%c0_10, %c0_11], %29 {strides = array<i32>} : memref<16x16xf32, #tpu.memory_space<vmem>>, vector<16x16xf32>,
    %c0_12 = arith.constant 0 : index
    %c0_13 = arith.constant 0 : index
    %31 = vector.load %arg1[%c0_12, %c0_13] : memref<16x16xf32, #tpu.memory_space<vmem>>, vector<16x16xf32>
    %cst_14 = arith.constant dense<0.000000e+00> : vector<16x16xf32>
    %32 = tpu.matmul %31, %31, %cst_14 {dimension_numbers = #tpu.dot_dimension_numbers<[1], [1], [0], [0], [0, 0, 1, 0], [], []>, precision = #tpu.contract_precision<fp32>} : vector<16x16xf32>, vector<16x16xf32>, vector<16x16xf32> -> vector<16x16xf32>
    %33 = arith.subf %32, %21 : vector<16x16xf32>
    %c0_15 = arith.constant 0 : index
    %c0_16 = arith.constant 0 : index
    %34 = vector.load %arg3[%c0_15, %c0_16] : memref<16x16xf32, #tpu.memory_space<vmem>>, vector<16x16xf32>
    tpu.vector_store %arg3[%c0_15, %c0_16], %33 {strides = array<i32>} : memref<16x16xf32, #tpu.memory_space<vmem>>, vector<16x16xf32>,
    return
  }
}

module attributes {stable_mosaic.version = 11 : i64} {
  func.func @_fused_predictive_body(%arg0: i32, %arg1: memref<16x4xf32, #tpu.memory_space<vmem>>, %arg2: memref<4x512xf32, #tpu.memory_space<vmem>>, %arg3: memref<17x16xf32, #tpu.memory_space<vmem>>, %arg4: memref<2x512xf32, #tpu.memory_space<vmem>>) attributes {dimension_semantics = [#tpu.dimension_semantics<parallel>], iteration_bounds = array<i64: 2>, scalar_prefetch = 0 : i64, scratch_operands = 0 : i64, tpu.core_type = #tpu.core_type<tc>, window_params = [{pipeline_mode = #tpu.pipeline_mode<synchronous>, transform_indices = @transform_0, window_bounds = array<i64: 16, 4>}, {transform_indices = @transform_1, window_bounds = array<i64: 4, 512>}, {pipeline_mode = #tpu.pipeline_mode<synchronous>, transform_indices = @transform_2, window_bounds = array<i64: 17, 16>}, {transform_indices = @transform_3, window_bounds = array<i64: 2, 512>}]} {
    %c0 = arith.constant 0 : index
    %c0_0 = arith.constant 0 : index
    %0 = vector.load %arg1[%c0, %c0_0] : memref<16x4xf32, #tpu.memory_space<vmem>>, vector<16x4xf32>
    %c0_1 = arith.constant 0 : index
    %c0_2 = arith.constant 0 : index
    %1 = vector.load %arg2[%c0_1, %c0_2] : memref<4x512xf32, #tpu.memory_space<vmem>>, vector<4x512xf32>
    %cst = arith.constant 0.000000e+00 : f32
    %2 = vector.broadcast %cst : f32 to vector<16x512xf32>
    %3 = vector.extract_strided_slice %0 {offsets = [0, 0], sizes = [16, 1], strides = [1, 1]} : vector<16x4xf32> to vector<16x1xf32>
    %4 = vector.extract_strided_slice %1 {offsets = [0, 0], sizes = [1, 512], strides = [1, 1]} : vector<4x512xf32> to vector<1x512xf32>
    %5 = vector.broadcast %3 : vector<16x1xf32> to vector<16x512xf32>
    %6 = vector.broadcast %4 : vector<1x512xf32> to vector<16x512xf32>
    %7 = arith.subf %5, %6 : vector<16x512xf32>
    %8 = arith.mulf %7, %7 : vector<16x512xf32>
    %9 = arith.addf %2, %8 : vector<16x512xf32>
    %10 = vector.extract_strided_slice %0 {offsets = [0, 1], sizes = [16, 1], strides = [1, 1]} : vector<16x4xf32> to vector<16x1xf32>
    %11 = vector.extract_strided_slice %1 {offsets = [1, 0], sizes = [1, 512], strides = [1, 1]} : vector<4x512xf32> to vector<1x512xf32>
    %12 = vector.broadcast %10 : vector<16x1xf32> to vector<16x512xf32>
    %13 = vector.broadcast %11 : vector<1x512xf32> to vector<16x512xf32>
    %14 = arith.subf %12, %13 : vector<16x512xf32>
    %15 = arith.mulf %14, %14 : vector<16x512xf32>
    %16 = arith.addf %9, %15 : vector<16x512xf32>
    %17 = vector.extract_strided_slice %0 {offsets = [0, 2], sizes = [16, 1], strides = [1, 1]} : vector<16x4xf32> to vector<16x1xf32>
    %18 = vector.extract_strided_slice %1 {offsets = [2, 0], sizes = [1, 512], strides = [1, 1]} : vector<4x512xf32> to vector<1x512xf32>
    %19 = vector.broadcast %17 : vector<16x1xf32> to vector<16x512xf32>
    %20 = vector.broadcast %18 : vector<1x512xf32> to vector<16x512xf32>
    %21 = arith.subf %19, %20 : vector<16x512xf32>
    %22 = arith.mulf %21, %21 : vector<16x512xf32>
    %23 = arith.addf %16, %22 : vector<16x512xf32>
    %24 = vector.extract_strided_slice %0 {offsets = [0, 3], sizes = [16, 1], strides = [1, 1]} : vector<16x4xf32> to vector<16x1xf32>
    %25 = vector.extract_strided_slice %1 {offsets = [3, 0], sizes = [1, 512], strides = [1, 1]} : vector<4x512xf32> to vector<1x512xf32>
    %26 = vector.broadcast %24 : vector<16x1xf32> to vector<16x512xf32>
    %27 = vector.broadcast %25 : vector<1x512xf32> to vector<16x512xf32>
    %28 = arith.subf %26, %27 : vector<16x512xf32>
    %29 = arith.mulf %28, %28 : vector<16x512xf32>
    %30 = arith.addf %23, %29 : vector<16x512xf32>
    %cst_3 = arith.constant -5.000000e-01 : f32
    %31 = vector.broadcast %cst_3 : f32 to vector<16x512xf32>
    %32 = arith.mulf %31, %30 : vector<16x512xf32>
    %cst_4 = arith.constant 1.000000e+00 : f32
    %33 = vector.broadcast %cst_4 : f32 to vector<16x512xf32>
    %34 = arith.mulf %32, %33 : vector<16x512xf32>
    %35 = math.exp %34 : vector<16x512xf32>
    %cst_5 = arith.constant 1.000000e+00 : f32
    %36 = vector.broadcast %cst_5 : f32 to vector<16x512xf32>
    %37 = arith.mulf %36, %35 : vector<16x512xf32>
    %c0_6 = arith.constant 0 : index
    %c0_7 = arith.constant 0 : index
    %38 = vector.load %arg3[%c0_6, %c0_7] : memref<17x16xf32, #tpu.memory_space<vmem>>, vector<17x16xf32>
    %cst_8 = arith.constant dense<0.000000e+00> : vector<17x512xf32>
    %39 = tpu.matmul %38, %37, %cst_8 {dimension_numbers = #tpu.dot_dimension_numbers<[1], [0], [0], [1], [0, 0, 1, 1], [], []>, precision = #tpu.contract_precision<fp32>} : vector<17x16xf32>, vector<16x512xf32>, vector<17x512xf32> -> vector<17x512xf32>
    %40 = vector.extract_strided_slice %39 {offsets = [0, 0], sizes = [16, 512], strides = [1, 1]} : vector<17x512xf32> to vector<16x512xf32>
    %41 = vector.extract_strided_slice %39 {offsets = [16, 0], sizes = [1, 512], strides = [1, 1]} : vector<17x512xf32> to vector<1x512xf32>
    %42 = arith.mulf %40, %37 : vector<16x512xf32>
    %cst_9 = arith.constant dense<0.000000e+00> : vector<512xf32>
    %43 = vector.multi_reduction <add>, %42, %cst_9 [0] : vector<16x512xf32> to vector<512xf32>
    %44 = vector.shape_cast %43 : vector<512xf32> to vector<1x512xf32>
    %cst_10 = arith.constant 1.000000e+00 : f32
    %45 = vector.broadcast %cst_10 : f32 to vector<1x512xf32>
    %46 = arith.addf %45, %44 : vector<1x512xf32>
    %47 = tpu.concatenate %41, %46 in 0 : vector<1x512xf32>, vector<1x512xf32> -> vector<2x512xf32>
    %c0_11 = arith.constant 0 : index
    %c0_12 = arith.constant 0 : index
    %48 = vector.load %arg4[%c0_11, %c0_12] : memref<2x512xf32, #tpu.memory_space<vmem>>, vector<2x512xf32>
    tpu.vector_store %arg4[%c0_11, %c0_12], %47 {strides = array<i32>} : memref<2x512xf32, #tpu.memory_space<vmem>>, vector<2x512xf32>,
    return
  }
  func.func @transform_0(%arg0: i32) -> (i32, i32) {
    %c0_i32 = arith.constant 0 : i32
    %c0_i32_0 = arith.constant 0 : i32
    %c0_i32_1 = arith.constant 0 : i32
    return %c0_i32, %c0_i32_0 : i32, i32
  }
  func.func @transform_1(%arg0: i32) -> (i32, i32) {
    %c0_i32 = arith.constant 0 : i32
    %c0_i32_0 = arith.constant 0 : i32
    return %c0_i32, %arg0 : i32, i32
  }
  func.func @transform_2(%arg0: i32) -> (i32, i32) {
    %c0_i32 = arith.constant 0 : i32
    %c0_i32_0 = arith.constant 0 : i32
    %c0_i32_1 = arith.constant 0 : i32
    return %c0_i32, %c0_i32_0 : i32, i32
  }
  func.func @transform_3(%arg0: i32) -> (i32, i32) {
    %c0_i32 = arith.constant 0 : i32
    %c0_i32_0 = arith.constant 0 : i32
    return %c0_i32, %arg0 : i32, i32
  }
}

</mosaic_0001>

<llo_original>
// kernel: custom-call.10
$region0: #{custom-call.10}
  %s0 = inlined_call_operand.vmem [shape: f32[16,16], index: 0, kind: input, shape index: {}]
  %s1 = inlined_call_operand.vmem [shape: f32[16,16], index: 1, kind: output, shape index: {}]
  $region1: #{custom-call.10} parent=0
    #allocation0 [shape = 'u8[8192]{0}', space=vmem, size = 0x2000, scoped, tag = 'operand span for operand 0']
    #allocation1 [shape = 'u8[8192]{0}', space=vmem, size = 0x2000, scoped, tag = 'operand span for operand 1']
    // Predicated region
    $region2: #{custom-call.10} parent=1 // pred_check
      _
    $region3: #{custom-call.10} parent=1 // pred_check_branch
      %3 = sbr.rel (0) target = $region5
    $region4: #{custom-call.10} parent=1 // pred_region
      // Predicated region
      $region6: #{custom-call.10} parent=4 // pred_check
        _
      $region7: #{custom-call.10} parent=4 // pred_check_branch
        %5 = sbr.rel (0) target = $region9
      $region8: #{custom-call.10} parent=4 // pred_region
        // Predicated region
        $region21: #{custom-call.10} parent=8 // pred_check
          _
        $region22: #{custom-call.10} parent=8 // pred_check_branch
          %22 = sbr.rel (0) target = $region24
        $region23: #{custom-call.10} parent=8 // pred_region
          loop: start=0, step=1, limit=1
          $region25: #{custom-call.10} parent=23 // loop_pre_header
            _
          $region26: #{custom-call.10} parent=23 // loop_header
            %s24 = sphi 0, %s28
            %p25 = scmp.ge.s32.totalorder %s24, 1
            %s29 = sphi %s0, %s0
            %s30 = sphi [#allocation0], [#allocation0]
          $region27: #{custom-call.10} parent=23 // loop_header_branch
            %27 = sbr.rel (%p25) target = $region31
          $region28: #{custom-call.10} parent=23 // loop_body
            %v31 = vld [vmem:[%s29] sm:$0xff]
            %32 = vst [vmem:[%s30] sm:$0xff] %v31
            %v33 = vld [vmem:[%s29 + $0x8] sm:$0xff]
            %34 = vst [vmem:[%s30 + $0x8] sm:$0xff] %v33
          $region29: #{custom-call.10} parent=23 // loop_footer
            %s28 = sadd.s32 1, %s24
          $region30: #{custom-call.10} parent=23 // loop_footer_branch
            %23 = sbr.rel target = $region26
          $region31: #{custom-call.10} parent=23 // loop_exit
            _
        $region24: #{custom-call.10} parent=8 // pred_fallthru
          _
        // Predicated region
        $region32: #{custom-call.10} parent=8 // pred_check
          _
        $region33: #{custom-call.10} parent=8 // pred_check_branch
          %36 = sbr.rel target = $region35
        $region34: #{custom-call.10} parent=8 // pred_region
          _
        $region35: #{custom-call.10} parent=8 // pred_fallthru
          _
      $region9: #{custom-call.10} parent=4 // pred_fallthru
        _
      // Predicated region
      $region10: #{custom-call.10} parent=4 // pred_check
        _
      $region11: #{custom-call.10} parent=4 // pred_check_branch
        %7 = sbr.rel target = $region13
      $region12: #{custom-call.10} parent=4 // pred_region
        loop: start=0, step=1, limit=1
        $region14: #{custom-call.10} parent=12 // loop_pre_header
          _
        $region15: #{custom-call.10} parent=12 // loop_header
          %s10 = sphi 0, %s14
          %p11 = scmp.ge.s32.totalorder %s10, 1
          %s15 = sphi %s0, %s0
          %s16 = sphi [#allocation0], [#allocation0]
        $region16: #{custom-call.10} parent=12 // loop_header_branch
          %13 = sbr.rel (%p11) target = $region20
        $region17: #{custom-call.10} parent=12 // loop_body
          %v17 = vld [vmem:[%s15] sm:$0xff]
          %18 = vst [vmem:[%s16] sm:$0xff] %v17
          %v19 = vld [vmem:[%s15 + $0x8] sm:$0xff]
          %20 = vst [vmem:[%s16 + $0x8] sm:$0xff] %v19
        $region18: #{custom-call.10} parent=12 // loop_footer
          %s14 = sadd.s32 1, %s10
        $region19: #{custom-call.10} parent=12 // loop_footer_branch
          %9 = sbr.rel target = $region15
        $region20: #{custom-call.10} parent=12 // loop_exit
          _
      $region13: #{custom-call.10} parent=4 // pred_fallthru
        _
    $region5: #{custom-call.10} parent=1 // pred_fallthru
      _
    %37 = vnop
    %38 = vst [vmem:[#allocation1] sm:$0xff] 0.0
    %s39 = scalar_lea.vmem [#allocation1], 8
    %40 = vst [vmem:[%s39] sm:$0xff] 0.0
    %vm41 = vcmask 7168
    %v42 = vld [vmem:[#allocation1] ss:$0 sm:$0xff]
    %v43 = vld [vmem:[#allocation0] ss:$0 sm:$0xff]
    %v44 = vmul.f32 %v42, %v42
    %45 = vadd.xlane.f32.xlu0 %v44
    %v46 = vpop.xlane.xlu0 %45
    %v47 = vsub.f32 %v43, %v46
    %v48 = vrsqrt.pop %v47
    %v49 = vld [vmem:[#allocation0] sm:$0xff]
    %v50 = vld [vmem:[#allocation1] sm:$0xff]
    %v51 = vmul.f32 %v50, %v42
    %52 = vadd.xlane.f32.xlu0 %v51
    %v53 = vpop.xlane.xlu0 %52
    %v54 = vsub.f32 %v49, %v53
    %v55 = vmul.f32 %v54, %v48
    %v56 = vsel %vm41, %v55, 0.0
    %v57 = vadd.f32 %v50, %v56
    %58 = vst [vmem:[#allocation1] sm:$0xff] %v57
    %s59 = scalar_lea.vmem [#allocation0], 8
    %v60 = vld [vmem:[%s59] sm:$0xff]
    %s61 = scalar_lea.vmem [#allocation1], 8
    %v62 = vld [vmem:[%s61] sm:$0xff]
    %v63 = vmul.f32 %v62, %v42
    %64 = vadd.xlane.f32.xlu0 %v63
    %v65 = vpop.xlane.xlu0 %64
    %v66 = vsub.f32 %v60, %v65
    %v67 = vmul.f32 %v66, %v48
    %v68 = vsel %vm41, %v67, 0.0
    %v69 = vadd.f32 %v62, %v68
    %s70 = scalar_lea.vmem [#allocation1], 8
    %71 = vst [vmem:[%s70] sm:$0xff] %v69
    %vm72 = vcmask 15368
    %s73 = scalar_lea.vmem [#allocation1], 1
    %v74 = vld [vmem:[%s73] ss:$0 sm:$0xff]
    %s75 = scalar_lea.vmem [#allocation0], 1
    %v76 = vld [vmem:[%s75] ss:$0 sm:$0xff]
    %v77 = vmul.f32 %v74, %v74
    %78 = vadd.xlane.f32.xlu0 %v77
    %v79 = vpop.xlane.xlu0 %78
    %v80 = vsub.f32 %v76, %v79
    %v81 = vrsqrt.pop %v80
    %v82 = vld [vmem:[#allocation0] sm:$0xff]
    %v83 = vld [vmem:[#allocation1] sm:$0xff]
    %v84 = vmul.f32 %v83, %v74
    %85 = vadd.xlane.f32.xlu0 %v84
    %v86 = vpop.xlane.xlu0 %85
    %v87 = vsub.f32 %v82, %v86
    %v88 = vmul.f32 %v87, %v81
    %vm89 = vcmask 1047553
    %vm90 = vmand %vm72, %vm89
    %v91 = vsel %vm90, %v88, 0.0
    %v92 = vadd.f32 %v83, %v91
    %93 = vst [vmem:[#allocation1] sm:$0xff] %v92
    %s94 = scalar_lea.vmem [#allocation0], 8
    %v95 = vld [vmem:[%s94] sm:$0xff]
    %s96 = scalar_lea.vmem [#allocation1], 8
    %v97 = vld [vmem:[%s96] sm:$0xff]
    %v98 = vmul.f32 %v97, %v74
    %99 = vadd.xlane.f32.xlu0 %v98
    %v100 = vpop.xlane.xlu0 %99
    %v101 = vsub.f32 %v95, %v100
    %v102 = vmul.f32 %v101, %v81
    %v103 = vsel %vm72, %v102, 0.0
    %v104 = vadd.f32 %v97, %v103
    %s105 = scalar_lea.vmem [#allocation1], 8
    %106 = vst [vmem:[%s105] sm:$0xff] %v104
    %vm107 = vcmask 23568
    %s108 = scalar_lea.vmem [#allocation1], 2
    %v109 = vld [vmem:[%s108] ss:$0 sm:$0xff]
    %s110 = scalar_lea.vmem [#allocation0], 2
    %v111 = vld [vmem:[%s110] ss:$0 sm:$0xff]
    %v112 = vmul.f32 %v109, %v109
    %113 = vadd.xlane.f32.xlu0 %v112
    %v114 = vpop.xlane.xlu0 %113
    %v115 = vsub.f32 %v111, %v114
    %v116 = vrsqrt.pop %v115
    %v117 = vld [vmem:[#allocation0] sm:$0xff]
    %v118 = vld [vmem:[#allocation1] sm:$0xff]
    %v119 = vmul.f32 %v118, %v109
    %120 = vadd.xlane.f32.xlu0 %v119
    %v121 = vpop.xlane.xlu0 %120
    %v122 = vsub.f32 %v117, %v121
    %v123 = vmul.f32 %v122, %v116
    %vm124 = vcmask 1047554
    %vm125 = vmand %vm107, %vm124
    %v126 = vsel %vm125, %v123, 0.0
    %v127 = vadd.f32 %v118, %v126
    %128 = vst [vmem:[#allocation1] sm:$0xff] %v127
    %s129 = scalar_lea.vmem [#allocation0], 8
    %v130 = vld [vmem:[%s129] sm:$0xff]
    %s131 = scalar_lea.vmem [#allocation1], 8
    %v132 = vld [vmem:[%s131] sm:$0xff]
    %v133 = vmul.f32 %v132, %v109
    %134 = vadd.xlane.f32.xlu0 %v133
    %v135 = vpop.xlane.xlu0 %134
    %v136 = vsub.f32 %v130, %v135
    %v137 = vmul.f32 %v136, %v116
    %v138 = vsel %vm107, %v137, 0.0
    %v139 = vadd.f32 %v132, %v138
    %s140 = scalar_lea.vmem [#allocation1], 8
    %141 = vst [vmem:[%s140] sm:$0xff] %v139
    %vm142 = vcmask 31768
    %s143 = scalar_lea.vmem [#allocation1], 3
    %v144 = vld [vmem:[%s143] ss:$0 sm:$0xff]
    %s145 = scalar_lea.vmem [#allocation0], 3
    %v146 = vld [vmem:[%s145] ss:$0 sm:$0xff]
    %v147 = vmul.f32 %v144, %v144
    %148 = vadd.xlane.f32.xlu0 %v147
    %v149 = vpop.xlane.xlu0 %148
    %v150 = vsub.f32 %v146, %v149
    %v151 = vrsqrt.pop %v150
    %v152 = vld [vmem:[#allocation0] sm:$0xff]
    %v153 = vld [vmem:[#allocation1] sm:$0xff]
    %v154 = vmul.f32 %v153, %v144
    %155 = vadd.xlane.f32.xlu0 %v154
    %v156 = vpop.xlane.xlu0 %155
    %v157 = vsub.f32 %v152, %v156
    %v158 = vmul.f32 %v157, %v151
    %vm159 = vcmask 1047555
    %vm160 = vmand %vm142, %vm159
    %v161 = vsel %vm160, %v158, 0.0
    %v162 = vadd.f32 %v153, %v161
    %163 = vst [vmem:[#allocation1] sm:$0xff] %v162
    %s164 = scalar_lea.vmem [#allocation0], 8
    %v165 = vld [vmem:[%s164] sm:$0xff]
    %s166 = scalar_lea.vmem [#allocation1], 8
    %v167 = vld [vmem:[%s166] sm:$0xff]
    %v168 = vmul.f32 %v167, %v144
    %169 = vadd.xlane.f32.xlu0 %v168
    %v170 = vpop.xlane.xlu0 %169
    %v171 = vsub.f32 %v165, %v170
    %v172 = vmul.f32 %v171, %v151
    %v173 = vsel %vm142, %v172, 0.0
    %v174 = vadd.f32 %v167, %v173
    %s175 = scalar_lea.vmem [#allocation1], 8
    %176 = vst [vmem:[%s175] sm:$0xff] %v174
    %vm177 = vcmask 39968
    %s178 = scalar_lea.vmem [#allocation1], 4
    %v179 = vld [vmem:[%s178] ss:$0 sm:$0xff]
    %s180 = scalar_lea.vmem [#allocation0], 4
    %v181 = vld [vmem:[%s180] ss:$0 sm:$0xff]
    %v182 = vmul.f32 %v179, %v179
    %183 = vadd.xlane.f32.xlu0 %v182
    %v184 = vpop.xlane.xlu0 %183
    %v185 = vsub.f32 %v181, %v184
    %v186 = vrsqrt.pop %v185
    %v187 = vld [vmem:[#allocation0] sm:$0xff]
    %v188 = vld [vmem:[#allocation1] sm:$0xff]
    %v189 = vmul.f32 %v188, %v179
    %190 = vadd.xlane.f32.xlu0 %v189
    %v191 = vpop.xlane.xlu0 %190
    %v192 = vsub.f32 %v187, %v191
    %v193 = vmul.f32 %v192, %v186
    %vm194 = vcmask 1047556
    %vm195 = vmand %vm177, %vm194
    %v196 = vsel %vm195, %v193, 0.0
    %v197 = vadd.f32 %v188, %v196
    %198 = vst [vmem:[#allocation1] sm:$0xff] %v197
    %s199 = scalar_lea.vmem [#allocation0], 8
    %v200 = vld [vmem:[%s199] sm:$0xff]
    %s201 = scalar_lea.vmem [#allocation1], 8
    %v202 = vld [vmem:[%s201] sm:$0xff]
    %v203 = vmul.f32 %v202, %v179
    %204 = vadd.xlane.f32.xlu0 %v203
    %v205 = vpop.xlane.xlu0 %204
    %v206 = vsub.f32 %v200, %v205
    %v207 = vmul.f32 %v206, %v186
    %v208 = vsel %vm177, %v207, 0.0
    %v209 = vadd.f32 %v202, %v208
    %s210 = scalar_lea.vmem [#allocation1], 8
    %211 = vst [vmem:[%s210] sm:$0xff] %v209
    %vm212 = vcmask 48168
    %s213 = scalar_lea.vmem [#allocation1], 5
    %v214 = vld [vmem:[%s213] ss:$0 sm:$0xff]
    %s215 = scalar_lea.vmem [#allocation0], 5
    %v216 = vld [vmem:[%s215] ss:$0 sm:$0xff]
    %v217 = vmul.f32 %v214, %v214
    %218 = vadd.xlane.f32.xlu0 %v217
    %v219 = vpop.xlane.xlu0 %218
    %v220 = vsub.f32 %v216, %v219
    %v221 = vrsqrt.pop %v220
    %v222 = vld [vmem:[#allocation0] sm:$0xff]
    %v223 = vld [vmem:[#allocation1] sm:$0xff]
    %v224 = vmul.f32 %v223, %v214
    %225 = vadd.xlane.f32.xlu0 %v224
    %v226 = vpop.xlane.xlu0 %225
    %v227 = vsub.f32 %v222, %v226
    %v228 = vmul.f32 %v227, %v221
    %vm229 = vcmask 1047557
    %vm230 = vmand %vm212, %vm229
    %v231 = vsel %vm230, %v228, 0.0
    %v232 = vadd.f32 %v223, %v231
    %233 = vst [vmem:[#allocation1] sm:$0xff] %v232
    %s234 = scalar_lea.vmem [#allocation0], 8
    %v235 = vld [vmem:[%s234] sm:$0xff]
    %s236 = scalar_lea.vmem [#allocation1], 8
    %v237 = vld [vmem:[%s236] sm:$0xff]
    %v238 = vmul.f32 %v237, %v214
    %239 = vadd.xlane.f32.xlu0 %v238
    %v240 = vpop.xlane.xlu0 %239
    %v241 = vsub.f32 %v235, %v240
    %v242 = vmul.f32 %v241, %v221
    %v243 = vsel %vm212, %v242, 0.0
    %v244 = vadd.f32 %v237, %v243
    %s245 = scalar_lea.vmem [#allocation1], 8
    %246 = vst [vmem:[%s245] sm:$0xff] %v244
    %vm247 = vcmask 56368
    %s248 = scalar_lea.vmem [#allocation1], 6
    %v249 = vld [vmem:[%s248] ss:$0 sm:$0xff]
    %s250 = scalar_lea.vmem [#allocation0], 6
    %v251 = vld [vmem:[%s250] ss:$0 sm:$0xff]
    %v252 = vmul.f32 %v249, %v249
    %253 = vadd.xlane.f32.xlu0 %v252
    %v254 = vpop.xlane.xlu0 %253
    %v255 = vsub.f32 %v251, %v254
    %v256 = vrsqrt.pop %v255
    %v257 = vld [vmem:[#allocation0] sm:$0xff]
    %v258 = vld [vmem:[#allocation1] sm:$0xff]
    %v259 = vmul.f32 %v258, %v249
    %260 = vadd.xlane.f32.xlu0 %v259
    %v261 = vpop.xlane.xlu0 %260
    %v262 = vsub.f32 %v257, %v261
    %v263 = vmul.f32 %v262, %v256
    %vm264 = vcmask 1047558
    %vm265 = vmand %vm247, %vm264
    %v266 = vsel %vm265, %v263, 0.0
    %v267 = vadd.f32 %v258, %v266
    %268 = vst [vmem:[#allocation1] sm:$0xff] %v267
    %s269 = scalar_lea.vmem [#allocation0], 8
    %v270 = vld [vmem:[%s269] sm:$0xff]
    %s271 = scalar_lea.vmem [#allocation1], 8
    %v272 = vld [vmem:[%s271] sm:$0xff]
    %v273 = vmul.f32 %v272, %v249
    %274 = vadd.xlane.f32.xlu0 %v273
    %v275 = vpop.xlane.xlu0 %274
    %v276 = vsub.f32 %v270, %v275
    %v277 = vmul.f32 %v276, %v256
    %v278 = vsel %vm247, %v277, 0.0
    %v279 = vadd.f32 %v272, %v278
    %s280 = scalar_lea.vmem [#allocation1], 8
    %281 = vst [vmem:[%s280] sm:$0xff] %v279
    %vm282 = vcmask 64568
    %s283 = scalar_lea.vmem [#allocation1], 7
    %v284 = vld [vmem:[%s283] ss:$0 sm:$0xff]
    %s285 = scalar_lea.vmem [#allocation0], 7
    %v286 = vld [vmem:[%s285] ss:$0 sm:$0xff]
    %v287 = vmul.f32 %v284, %v284
    %288 = vadd.xlane.f32.xlu0 %v287
    %v289 = vpop.xlane.xlu0 %288
    %v290 = vsub.f32 %v286, %v289
    %v291 = vrsqrt.pop %v290
    %v292 = vld [vmem:[#allocation0] sm:$0xff]
    %v293 = vld [vmem:[#allocation1] sm:$0xff]
    %v294 = vmul.f32 %v293, %v284
    %295 = vadd.xlane.f32.xlu0 %v294
    %v296 = vpop.xlane.xlu0 %295
    %v297 = vsub.f32 %v292, %v296
    %v298 = vmul.f32 %v297, %v291
    %vm299 = vcmask 1047559
    %vm300 = vmand %vm282, %vm299
    %v301 = vsel %vm300, %v298, 0.0
    %v302 = vadd.f32 %v293, %v301
    %303 = vst [vmem:[#allocation1] sm:$0xff] %v302
    %s304 = scalar_lea.vmem [#allocation0], 8
    %v305 = vld [vmem:[%s304] sm:$0xff]
    %s306 = scalar_lea.vmem [#allocation1], 8
    %v307 = vld [vmem:[%s306] sm:$0xff]
    %v308 = vmul.f32 %v307, %v284
    %309 = vadd.xlane.f32.xlu0 %v308
    %v310 = vpop.xlane.xlu0 %309
    %v311 = vsub.f32 %v305, %v310
    %v312 = vmul.f32 %v311, %v291
    %v313 = vsel %vm282, %v312, 0.0
    %v314 = vadd.f32 %v307, %v313
    %s315 = scalar_lea.vmem [#allocation1], 8
    %316 = vst [vmem:[%s315] sm:$0xff] %v314
    %vm317 = vcmask 72768
    %s318 = scalar_lea.vmem [#allocation1], 8
    %v319 = vld [vmem:[%s318] ss:$0 sm:$0xff]
    %s320 = scalar_lea.vmem [#allocation0], 8
    %v321 = vld [vmem:[%s320] ss:$0 sm:$0xff]
    %v322 = vmul.f32 %v319, %v319
    %323 = vadd.xlane.f32.xlu0 %v322
    %v324 = vpop.xlane.xlu0 %323
    %v325 = vsub.f32 %v321, %v324
    %v326 = vrsqrt.pop %v325
    %s327 = scalar_lea.vmem [#allocation0], 8
    %v328 = vld [vmem:[%s327] sm:$0xff]
    %s329 = scalar_lea.vmem [#allocation1], 8
    %v330 = vld [vmem:[%s329] sm:$0xff]
    %v331 = vmul.f32 %v330, %v319
    %332 = vadd.xlane.f32.xlu0 %v331
    %v333 = vpop.xlane.xlu0 %332
    %v334 = vsub.f32 %v328, %v333
    %v335 = vmul.f32 %v334, %v326
    %v336 = vsel %vm317, %v335, 0.0
    %v337 = vadd.f32 %v330, %v336
    %s338 = scalar_lea.vmem [#allocation1], 8
    %339 = vst [vmem:[%s338] sm:$0xff] %v337
    %vm340 = vcmask 80968
    %s341 = scalar_lea.vmem [#allocation1], 9
    %v342 = vld [vmem:[%s341] ss:$0 sm:$0xff]
    %s343 = scalar_lea.vmem [#allocation0], 9
    %v344 = vld [vmem:[%s343] ss:$0 sm:$0xff]
    %v345 = vmul.f32 %v342, %v342
    %346 = vadd.xlane.f32.xlu0 %v345
    %v347 = vpop.xlane.xlu0 %346
    %v348 = vsub.f32 %v344, %v347
    %v349 = vrsqrt.pop %v348
    %s350 = scalar_lea.vmem [#allocation0], 8
    %v351 = vld [vmem:[%s350] sm:$0xff]
    %s352 = scalar_lea.vmem [#allocation1], 8
    %v353 = vld [vmem:[%s352] sm:$0xff]
    %v354 = vmul.f32 %v353, %v342
    %355 = vadd.xlane.f32.xlu0 %v354
    %v356 = vpop.xlane.xlu0 %355
    %v357 = vsub.f32 %v351, %v356
    %v358 = vmul.f32 %v357, %v349
    %vm359 = vcmask 1047553
    %vm360 = vmand %vm340, %vm359
    %v361 = vsel %vm360, %v358, 0.0
    %v362 = vadd.f32 %v353, %v361
    %s363 = scalar_lea.vmem [#allocation1], 8
    %364 = vst [vmem:[%s363] sm:$0xff] %v362
    %vm365 = vcmask 89168
    %s366 = scalar_lea.vmem [#allocation1], 10
    %v367 = vld [vmem:[%s366] ss:$0 sm:$0xff]
    %s368 = scalar_lea.vmem [#allocation0], 10
    %v369 = vld [vmem:[%s368] ss:$0 sm:$0xff]
    %v370 = vmul.f32 %v367, %v367
    %371 = vadd.xlane.f32.xlu0 %v370
    %v372 = vpop.xlane.xlu0 %371
    %v373 = vsub.f32 %v369, %v372
    %v374 = vrsqrt.pop %v373
    %s375 = scalar_lea.vmem [#allocation0], 8
    %v376 = vld [vmem:[%s375] sm:$0xff]
    %s377 = scalar_lea.vmem [#allocation1], 8
    %v378 = vld [vmem:[%s377] sm:$0xff]
    %v379 = vmul.f32 %v378, %v367
    %380 = vadd.xlane.f32.xlu0 %v379
    %v381 = vpop.xlane.xlu0 %380
    %v382 = vsub.f32 %v376, %v381
    %v383 = vmul.f32 %v382, %v374
    %vm384 = vcmask 1047554
    %vm385 = vmand %vm365, %vm384
    %v386 = vsel %vm385, %v383, 0.0
    %v387 = vadd.f32 %v378, %v386
    %s388 = scalar_lea.vmem [#allocation1], 8
    %389 = vst [vmem:[%s388] sm:$0xff] %v387
    %vm390 = vcmask 97368
    %s391 = scalar_lea.vmem [#allocation1], 11
    %v392 = vld [vmem:[%s391] ss:$0 sm:$0xff]
    %s393 = scalar_lea.vmem [#allocation0], 11
    %v394 = vld [vmem:[%s393] ss:$0 sm:$0xff]
    %v395 = vmul.f32 %v392, %v392
    %396 = vadd.xlane.f32.xlu0 %v395
    %v397 = vpop.xlane.xlu0 %396
    %v398 = vsub.f32 %v394, %v397
    %v399 = vrsqrt.pop %v398
    %s400 = scalar_lea.vmem [#allocation0], 8
    %v401 = vld [vmem:[%s400] sm:$0xff]
    %s402 = scalar_lea.vmem [#allocation1], 8
    %v403 = vld [vmem:[%s402] sm:$0xff]
    %v404 = vmul.f32 %v403, %v392
    %405 = vadd.xlane.f32.xlu0 %v404
    %v406 = vpop.xlane.xlu0 %405
    %v407 = vsub.f32 %v401, %v406
    %v408 = vmul.f32 %v407, %v399
    %vm409 = vcmask 1047555
    %vm410 = vmand %vm390, %vm409
    %v411 = vsel %vm410, %v408, 0.0
    %v412 = vadd.f32 %v403, %v411
    %s413 = scalar_lea.vmem [#allocation1], 8
    %414 = vst [vmem:[%s413] sm:$0xff] %v412
    %vm415 = vcmask 105568
    %s416 = scalar_lea.vmem [#allocation1], 12
    %v417 = vld [vmem:[%s416] ss:$0 sm:$0xff]
    %s418 = scalar_lea.vmem [#allocation0], 12
    %v419 = vld [vmem:[%s418] ss:$0 sm:$0xff]
    %v420 = vmul.f32 %v417, %v417
    %421 = vadd.xlane.f32.xlu0 %v420
    %v422 = vpop.xlane.xlu0 %421
    %v423 = vsub.f32 %v419, %v422
    %v424 = vrsqrt.pop %v423
    %s425 = scalar_lea.vmem [#allocation0], 8
    %v426 = vld [vmem:[%s425] sm:$0xff]
    %s427 = scalar_lea.vmem [#allocation1], 8
    %v428 = vld [vmem:[%s427] sm:$0xff]
    %v429 = vmul.f32 %v428, %v417
    %430 = vadd.xlane.f32.xlu0 %v429
    %v431 = vpop.xlane.xlu0 %430
    %v432 = vsub.f32 %v426, %v431
    %v433 = vmul.f32 %v432, %v424
    %vm434 = vcmask 1047556
    %vm435 = vmand %vm415, %vm434
    %v436 = vsel %vm435, %v433, 0.0
    %v437 = vadd.f32 %v428, %v436
    %s438 = scalar_lea.vmem [#allocation1], 8
    %439 = vst [vmem:[%s438] sm:$0xff] %v437
    %vm440 = vcmask 113768
    %s441 = scalar_lea.vmem [#allocation1], 13
    %v442 = vld [vmem:[%s441] ss:$0 sm:$0xff]
    %s443 = scalar_lea.vmem [#allocation0], 13
    %v444 = vld [vmem:[%s443] ss:$0 sm:$0xff]
    %v445 = vmul.f32 %v442, %v442
    %446 = vadd.xlane.f32.xlu0 %v445
    %v447 = vpop.xlane.xlu0 %446
    %v448 = vsub.f32 %v444, %v447
    %v449 = vrsqrt.pop %v448
    %s450 = scalar_lea.vmem [#allocation0], 8
    %v451 = vld [vmem:[%s450] sm:$0xff]
    %s452 = scalar_lea.vmem [#allocation1], 8
    %v453 = vld [vmem:[%s452] sm:$0xff]
    %v454 = vmul.f32 %v453, %v442
    %455 = vadd.xlane.f32.xlu0 %v454
    %v456 = vpop.xlane.xlu0 %455
    %v457 = vsub.f32 %v451, %v456
    %v458 = vmul.f32 %v457, %v449
    %vm459 = vcmask 1047557
    %vm460 = vmand %vm440, %vm459
    %v461 = vsel %vm460, %v458, 0.0
    %v462 = vadd.f32 %v453, %v461
    %s463 = scalar_lea.vmem [#allocation1], 8
    %464 = vst [vmem:[%s463] sm:$0xff] %v462
    %vm465 = vcmask 121968
    %s466 = scalar_lea.vmem [#allocation1], 14
    %v467 = vld [vmem:[%s466] ss:$0 sm:$0xff]
    %s468 = scalar_lea.vmem [#allocation0], 14
    %v469 = vld [vmem:[%s468] ss:$0 sm:$0xff]
    %v470 = vmul.f32 %v467, %v467
    %471 = vadd.xlane.f32.xlu0 %v470
    %v472 = vpop.xlane.xlu0 %471
    %v473 = vsub.f32 %v469, %v472
    %v474 = vrsqrt.pop %v473
    %s475 = scalar_lea.vmem [#allocation0], 8
    %v476 = vld [vmem:[%s475] sm:$0xff]
    %s477 = scalar_lea.vmem [#allocation1], 8
    %v478 = vld [vmem:[%s477] sm:$0xff]
    %v479 = vmul.f32 %v478, %v467
    %480 = vadd.xlane.f32.xlu0 %v479
    %v481 = vpop.xlane.xlu0 %480
    %v482 = vsub.f32 %v476, %v481
    %v483 = vmul.f32 %v482, %v474
    %vm484 = vcmask 1047558
    %vm485 = vmand %vm465, %vm484
    %v486 = vsel %vm485, %v483, 0.0
    %v487 = vadd.f32 %v478, %v486
    %s488 = scalar_lea.vmem [#allocation1], 8
    %489 = vst [vmem:[%s488] sm:$0xff] %v487
    %vm490 = vcmask 130168
    %s491 = scalar_lea.vmem [#allocation1], 15
    %v492 = vld [vmem:[%s491] ss:$0 sm:$0xff]
    %s493 = scalar_lea.vmem [#allocation0], 15
    %v494 = vld [vmem:[%s493] ss:$0 sm:$0xff]
    %v495 = vmul.f32 %v492, %v492
    %496 = vadd.xlane.f32.xlu0 %v495
    %v497 = vpop.xlane.xlu0 %496
    %v498 = vsub.f32 %v494, %v497
    %v499 = vrsqrt.pop %v498
    %s500 = scalar_lea.vmem [#allocation0], 8
    %v501 = vld [vmem:[%s500] sm:$0xff]
    %s502 = scalar_lea.vmem [#allocation1], 8
    %v503 = vld [vmem:[%s502] sm:$0xff]
    %v504 = vmul.f32 %v503, %v492
    %505 = vadd.xlane.f32.xlu0 %v504
    %v506 = vpop.xlane.xlu0 %505
    %v507 = vsub.f32 %v501, %v506
    %v508 = vmul.f32 %v507, %v499
    %vm509 = vcmask 1047559
    %vm510 = vmand %vm490, %vm509
    %v511 = vsel %vm510, %v508, 0.0
    %v512 = vadd.f32 %v503, %v511
    %s513 = scalar_lea.vmem [#allocation1], 8
    %514 = vst [vmem:[%s513] sm:$0xff] %v512
    // Predicated region
    $region36: #{custom-call.10} parent=1 // pred_check
      _
    $region37: #{custom-call.10} parent=1 // pred_check_branch
      %516 = sbr.rel (0) target = $region39
    $region38: #{custom-call.10} parent=1 // pred_region
      // Predicated region
      $region40: #{custom-call.10} parent=38 // pred_check
        _
      $region41: #{custom-call.10} parent=38 // pred_check_branch
        %518 = sbr.rel (0) target = $region43
      $region42: #{custom-call.10} parent=38 // pred_region
        // Predicated region
        $region55: #{custom-call.10} parent=42 // pred_check
          _
        $region56: #{custom-call.10} parent=42 // pred_check_branch
          %535 = sbr.rel (0) target = $region58
        $region57: #{custom-call.10} parent=42 // pred_region
          loop: start=0, step=1, limit=1
          $region59: #{custom-call.10} parent=57 // loop_pre_header
            _
          $region60: #{custom-call.10} parent=57 // loop_header
            %s537 = sphi 0, %s541
            %p538 = scmp.ge.s32.totalorder %s537, 1
            %s542 = sphi [#allocation1], [#allocation1]
            %s543 = sphi %s1, %s1
          $region61: #{custom-call.10} parent=57 // loop_header_branch
            %540 = sbr.rel (%p538) target = $region65
          $region62: #{custom-call.10} parent=57 // loop_body
            %v544 = vld [vmem:[%s542] sm:$0xff]
            %545 = vst [vmem:[%s543] sm:$0xff] %v544
            %v546 = vld [vmem:[%s542 + $0x8] sm:$0xff]
            %547 = vst [vmem:[%s543 + $0x8] sm:$0xff] %v546
          $region63: #{custom-call.10} parent=57 // loop_footer
            %s541 = sadd.s32 1, %s537
          $region64: #{custom-call.10} parent=57 // loop_footer_branch
            %536 = sbr.rel target = $region60
          $region65: #{custom-call.10} parent=57 // loop_exit
            _
        $region58: #{custom-call.10} parent=42 // pred_fallthru
          _
        // Predicated region
        $region66: #{custom-call.10} parent=42 // pred_check
          _
        $region67: #{custom-call.10} parent=42 // pred_check_branch
          %549 = sbr.rel target = $region69
        $region68: #{custom-call.10} parent=42 // pred_region
          _
        $region69: #{custom-call.10} parent=42 // pred_fallthru
          _
      $region43: #{custom-call.10} parent=38 // pred_fallthru
        _
      // Predicated region
      $region44: #{custom-call.10} parent=38 // pred_check
        _
      $region45: #{custom-call.10} parent=38 // pred_check_branch
        %520 = sbr.rel target = $region47
      $region46: #{custom-call.10} parent=38 // pred_region
        loop: start=0, step=1, limit=1
        $region48: #{custom-call.10} parent=46 // loop_pre_header
          _
        $region49: #{custom-call.10} parent=46 // loop_header
          %s523 = sphi 0, %s527
          %p524 = scmp.ge.s32.totalorder %s523, 1
          %s528 = sphi [#allocation1], [#allocation1]
          %s529 = sphi %s1, %s1
        $region50: #{custom-call.10} parent=46 // loop_header_branch
          %526 = sbr.rel (%p524) target = $region54
        $region51: #{custom-call.10} parent=46 // loop_body
          %v530 = vld [vmem:[%s528] sm:$0xff]
          %531 = vst [vmem:[%s529] sm:$0xff] %v530
          %v532 = vld [vmem:[%s528 + $0x8] sm:$0xff]
          %533 = vst [vmem:[%s529 + $0x8] sm:$0xff] %v532
        $region52: #{custom-call.10} parent=46 // loop_footer
          %s527 = sadd.s32 1, %s523
        $region53: #{custom-call.10} parent=46 // loop_footer_branch
          %522 = sbr.rel target = $region49
        $region54: #{custom-call.10} parent=46 // loop_exit
          _
      $region47: #{custom-call.10} parent=38 // pred_fallthru
        _
    $region39: #{custom-call.10} parent=1 // pred_fallthru
      _
    %550 = vnop

// kernel: custom-call.17
$region0: #{custom-call.17}
  %s0 = inlined_call_operand.vmem [shape: f32[1,16,16], index: 0, kind: input, shape index: {}]
  %s1 = inlined_call_operand.vmem [shape: f32[1,16,16], index: 1, kind: output, shape index: {}]
  $region1: #{custom-call.17} parent=0
    #allocation0 [shape = 'u8[8192]{0}', space=vmem, size = 0x2000, scoped, tag = 'operand span for operand 0']
    #allocation1 [shape = 'u8[8192]{0}', space=vmem, size = 0x2000, scoped, tag = 'operand span for operand 1']
    #allocation2 [shape = 'f32[16,16]{1,0}', space=vmem, size = 0x2000, scoped, tag = 'rescaled input a']
    // Predicated region
    $region2: #{custom-call.17} parent=1 // pred_check
      _
    $region3: #{custom-call.17} parent=1 // pred_check_branch
      %3 = sbr.rel (0) target = $region5
    $region4: #{custom-call.17} parent=1 // pred_region
      // Predicated region
      $region6: #{custom-call.17} parent=4 // pred_check
        _
      $region7: #{custom-call.17} parent=4 // pred_check_branch
        %5 = sbr.rel (0) target = $region9
      $region8: #{custom-call.17} parent=4 // pred_region
        // Predicated region
        $region21: #{custom-call.17} parent=8 // pred_check
          _
        $region22: #{custom-call.17} parent=8 // pred_check_branch
          %22 = sbr.rel (0) target = $region24
        $region23: #{custom-call.17} parent=8 // pred_region
          loop: start=0, step=1, limit=1
          $region25: #{custom-call.17} parent=23 // loop_pre_header
            _
          $region26: #{custom-call.17} parent=23 // loop_header
            %s24 = sphi 0, %s28
            %p25 = scmp.ge.s32.totalorder %s24, 1
            %s29 = sphi %s0, %s0
            %s30 = sphi [#allocation0], [#allocation0]
          $region27: #{custom-call.17} parent=23 // loop_header_branch
            %27 = sbr.rel (%p25) target = $region31
          $region28: #{custom-call.17} parent=23 // loop_body
            %v31 = vld [vmem:[%s29] sm:$0xff]
            %32 = vst [vmem:[%s30] sm:$0xff] %v31
            %v33 = vld [vmem:[%s29 + $0x8] sm:$0xff]
            %34 = vst [vmem:[%s30 + $0x8] sm:$0xff] %v33
          $region29: #{custom-call.17} parent=23 // loop_footer
            %s28 = sadd.s32 1, %s24
          $region30: #{custom-call.17} parent=23 // loop_footer_branch
            %23 = sbr.rel target = $region26
          $region31: #{custom-call.17} parent=23 // loop_exit
            _
        $region24: #{custom-call.17} parent=8 // pred_fallthru
          _
        // Predicated region
        $region32: #{custom-call.17} parent=8 // pred_check
          _
        $region33: #{custom-call.17} parent=8 // pred_check_branch
          %36 = sbr.rel target = $region35
        $region34: #{custom-call.17} parent=8 // pred_region
          _
        $region35: #{custom-call.17} parent=8 // pred_fallthru
          _
      $region9: #{custom-call.17} parent=4 // pred_fallthru
        _
      // Predicated region
      $region10: #{custom-call.17} parent=4 // pred_check
        _
      $region11: #{custom-call.17} parent=4 // pred_check_branch
        %7 = sbr.rel target = $region13
      $region12: #{custom-call.17} parent=4 // pred_region
        loop: start=0, step=1, limit=1
        $region14: #{custom-call.17} parent=12 // loop_pre_header
          _
        $region15: #{custom-call.17} parent=12 // loop_header
          %s10 = sphi 0, %s14
          %p11 = scmp.ge.s32.totalorder %s10, 1
          %s15 = sphi %s0, %s0
          %s16 = sphi [#allocation0], [#allocation0]
        $region16: #{custom-call.17} parent=12 // loop_header_branch
          %13 = sbr.rel (%p11) target = $region20
        $region17: #{custom-call.17} parent=12 // loop_body
          %v17 = vld [vmem:[%s15] sm:$0xff]
          %18 = vst [vmem:[%s16] sm:$0xff] %v17
          %v19 = vld [vmem:[%s15 + $0x8] sm:$0xff]
          %20 = vst [vmem:[%s16 + $0x8] sm:$0xff] %v19
        $region18: #{custom-call.17} parent=12 // loop_footer
          %s14 = sadd.s32 1, %s10
        $region19: #{custom-call.17} parent=12 // loop_footer_branch
          %9 = sbr.rel target = $region15
        $region20: #{custom-call.17} parent=12 // loop_exit
          _
      $region13: #{custom-call.17} parent=4 // pred_fallthru
        _
    $region5: #{custom-call.17} parent=1 // pred_fallthru
      _
    %37 = vnop
    %v38 = vlaneseq
    %v39 = vand.u32 %v38, 127
    %vm40 = vcmp.lt.s32.totalorder %v39, 16
    %v41 = vlaneseq
    %v42 = vshrl.u32 %v41, 7
    %vm44 = vcmp.eq.s32.totalorder %v42, %v39
    %v45 = vld [vmem:[#allocation0] sm:$0xff]
    %v46 = vsel %vm44, %v45, 0.0
    %47 = vadd.xlane.f32.xlu0 %v46
    %v48 = vpop.xlane.xlu0 %47
    %vm49 = vcmp.ge.s32.totalorder %v42, %v39
    %vm50 = vmand %vm49, %vm40
    %v51 = vsel %vm50, %v45, 0.0
    %v52 = vrcp.pop %v48
    %v53 = vmul.f32 %v51, %v52
    %54 = vst [vmem:[#allocation2] sm:$0xff] %v53
    %s55 = scalar_lea.vmem [#allocation0], 8
    %s56 = scalar_lea.vmem [#allocation2], 8
    %v57 = vlaneseq
    %v58 = vshrl.u32 %v57, 7
    %v59 = vadd.s32 %v58, 8
    %vm60 = vcmp.eq.s32.totalorder %v59, %v39
    %v61 = vld [vmem:[%s55] sm:$0xff]
    %v62 = vsel %vm60, %v61, 0.0
    %63 = vadd.xlane.f32.xlu0 %v62
    %v64 = vpop.xlane.xlu0 %63
    %vm65 = vcmp.ge.s32.totalorder %v59, %v39
    %vm66 = vmand %vm65, %vm40
    %v67 = vsel %vm66, %v61, 0.0
    %v68 = vrcp.pop %v64
    %v69 = vmul.f32 %v67, %v68
    %70 = vst [vmem:[%s56] sm:$0xff] %v69
    %v71 = vlaneseq
    %v72 = vand.u32 %v71, 127
    %v73 = vlaneseq
    %v74 = vshrl.u32 %v73, 7
    %vm76 = vcmp.eq.s32.totalorder %v72, %v74
    %v77 = vlaneseq
    %v78 = vand.u32 %v77, 127
    %vm79 = vcmp.eq.s32.totalorder %v78, 0
    %v80 = vsel %vm79, 1.0, -1.0
    %v81 = vsel %vm76, %v80, 0.0
    %v82 = vlaneseq
    %v83 = vand.u32 %v82, 127
    %v84 = vlaneseq
    %v85 = vshrl.u32 %v84, 7
    %v86 = vadd.s32 %v85, 8
    %vm87 = vcmp.eq.s32.totalorder %v83, %v86
    %v88 = vsel %vm87, -1.0, 0.0
    %s89 = scalar_lea.vmem [#allocation2], 1
    %v90 = vld [vmem:[%s89] ss:$0 sm:$0xff]
    %v91 = vxor.u32 %v90, 2147483648
    %v92 = vlaneseq
    %v93 = vand.u32 %v92, 127
    %vm94 = vcmp.eq.s32.totalorder %v93, 1
    %v95 = vmul.f32 %v91, %v81
    %96 = vadd.xlane.f32.xlu0 %v95
    %v97 = vpop.xlane.xlu0 %96
    %v98 = vsel %vm94, %v97, %v81
    %s99 = scalar_lea.vmem [#allocation2], 2
    %v100 = vld [vmem:[%s99] ss:$0 sm:$0xff]
    %v101 = vxor.u32 %v100, 2147483648
    %v102 = vlaneseq
    %v103 = vand.u32 %v102, 127
    %vm104 = vcmp.eq.s32.totalorder %v103, 2
    %v105 = vmul.f32 %v101, %v98
    %106 = vadd.xlane.f32.xlu0 %v105
    %v107 = vpop.xlane.xlu0 %106
    %v108 = vsel %vm104, %v107, %v98
    %s109 = scalar_lea.vmem [#allocation2], 3
    %v110 = vld [vmem:[%s109] ss:$0 sm:$0xff]
    %v111 = vxor.u32 %v110, 2147483648
    %v112 = vlaneseq
    %v113 = vand.u32 %v112, 127
    %vm114 = vcmp.eq.s32.totalorder %v113, 3
    %v115 = vmul.f32 %v111, %v108
    %116 = vadd.xlane.f32.xlu0 %v115
    %v117 = vpop.xlane.xlu0 %116
    %v118 = vsel %vm114, %v117, %v108
    %s119 = scalar_lea.vmem [#allocation2], 4
    %v120 = vld [vmem:[%s119] ss:$0 sm:$0xff]
    %v121 = vxor.u32 %v120, 2147483648
    %v122 = vlaneseq
    %v123 = vand.u32 %v122, 127
    %vm124 = vcmp.eq.s32.totalorder %v123, 4
    %v125 = vmul.f32 %v121, %v118
    %126 = vadd.xlane.f32.xlu0 %v125
    %v127 = vpop.xlane.xlu0 %126
    %v128 = vsel %vm124, %v127, %v118
    %s129 = scalar_lea.vmem [#allocation2], 5
    %v130 = vld [vmem:[%s129] ss:$0 sm:$0xff]
    %v131 = vxor.u32 %v130, 2147483648
    %v132 = vlaneseq
    %v133 = vand.u32 %v132, 127
    %vm134 = vcmp.eq.s32.totalorder %v133, 5
    %v135 = vmul.f32 %v131, %v128
    %136 = vadd.xlane.f32.xlu0 %v135
    %v137 = vpop.xlane.xlu0 %136
    %v138 = vsel %vm134, %v137, %v128
    %s139 = scalar_lea.vmem [#allocation2], 6
    %v140 = vld [vmem:[%s139] ss:$0 sm:$0xff]
    %v141 = vxor.u32 %v140, 2147483648
    %v142 = vlaneseq
    %v143 = vand.u32 %v142, 127
    %vm144 = vcmp.eq.s32.totalorder %v143, 6
    %v145 = vmul.f32 %v141, %v138
    %146 = vadd.xlane.f32.xlu0 %v145
    %v147 = vpop.xlane.xlu0 %146
    %v148 = vsel %vm144, %v147, %v138
    %s149 = scalar_lea.vmem [#allocation2], 7
    %v150 = vld [vmem:[%s149] ss:$0 sm:$0xff]
    %v151 = vxor.u32 %v150, 2147483648
    %v152 = vlaneseq
    %v153 = vand.u32 %v152, 127
    %vm154 = vcmp.eq.s32.totalorder %v153, 7
    %v155 = vmul.f32 %v151, %v148
    %156 = vadd.xlane.f32.xlu0 %v155
    %v157 = vpop.xlane.xlu0 %156
    %v158 = vsel %vm154, %v157, %v148
    %s159 = scalar_lea.vmem [#allocation2], 8
    %v160 = vld [vmem:[%s159] ss:$0 sm:$0xff]
    %v161 = vxor.u32 %v160, 2147483648
    %v162 = vlaneseq
    %v163 = vand.u32 %v162, 127
    %vm164 = vcmp.eq.s32.totalorder %v163, 8
    %v165 = vmul.f32 %v161, %v158
    %166 = vadd.xlane.f32.xlu0 %v165
    %v167 = vpop.xlane.xlu0 %166
    %v168 = vsel %vm164, %v167, %v158
    %v169 = vmul.f32 %v161, %v88
    %170 = vadd.xlane.f32.xlu0 %v169
    %v171 = vpop.xlane.xlu0 %170
    %v172 = vsel %vm164, %v171, %v88
    %s173 = scalar_lea.vmem [#allocation2], 9
    %v174 = vld [vmem:[%s173] ss:$0 sm:$0xff]
    %v175 = vxor.u32 %v174, 2147483648
    %v176 = vlaneseq
    %v177 = vand.u32 %v176, 127
    %vm178 = vcmp.eq.s32.totalorder %v177, 9
    %v179 = vmul.f32 %v175, %v168
    %180 = vadd.xlane.f32.xlu0 %v179
    %v181 = vpop.xlane.xlu0 %180
    %v182 = vsel %vm178, %v181, %v168
    %v183 = vmul.f32 %v175, %v172
    %184 = vadd.xlane.f32.xlu0 %v183
    %v185 = vpop.xlane.xlu0 %184
    %v186 = vsel %vm178, %v185, %v172
    %s187 = scalar_lea.vmem [#allocation2], 10
    %v188 = vld [vmem:[%s187] ss:$0 sm:$0xff]
    %v189 = vxor.u32 %v188, 2147483648
    %v190 = vlaneseq
    %v191 = vand.u32 %v190, 127
    %vm192 = vcmp.eq.s32.totalorder %v191, 10
    %v193 = vmul.f32 %v189, %v182
    %194 = vadd.xlane.f32.xlu0 %v193
    %v195 = vpop.xlane.xlu0 %194
    %v196 = vsel %vm192, %v195, %v182
    %v197 = vmul.f32 %v189, %v186
    %198 = vadd.xlane.f32.xlu0 %v197
    %v199 = vpop.xlane.xlu0 %198
    %v200 = vsel %vm192, %v199, %v186
    %s201 = scalar_lea.vmem [#allocation2], 11
    %v202 = vld [vmem:[%s201] ss:$0 sm:$0xff]
    %v203 = vxor.u32 %v202, 2147483648
    %v204 = vlaneseq
    %v205 = vand.u32 %v204, 127
    %vm206 = vcmp.eq.s32.totalorder %v205, 11
    %v207 = vmul.f32 %v203, %v196
    %208 = vadd.xlane.f32.xlu0 %v207
    %v209 = vpop.xlane.xlu0 %208
    %v210 = vsel %vm206, %v209, %v196
    %v211 = vmul.f32 %v203, %v200
    %212 = vadd.xlane.f32.xlu0 %v211
    %v213 = vpop.xlane.xlu0 %212
    %v214 = vsel %vm206, %v213, %v200
    %s215 = scalar_lea.vmem [#allocation2], 12
    %v216 = vld [vmem:[%s215] ss:$0 sm:$0xff]
    %v217 = vxor.u32 %v216, 2147483648
    %v218 = vlaneseq
    %v219 = vand.u32 %v218, 127
    %vm220 = vcmp.eq.s32.totalorder %v219, 12
    %v221 = vmul.f32 %v217, %v210
    %222 = vadd.xlane.f32.xlu0 %v221
    %v223 = vpop.xlane.xlu0 %222
    %v224 = vsel %vm220, %v223, %v210
    %v225 = vmul.f32 %v217, %v214
    %226 = vadd.xlane.f32.xlu0 %v225
    %v227 = vpop.xlane.xlu0 %226
    %v228 = vsel %vm220, %v227, %v214
    %s229 = scalar_lea.vmem [#allocation2], 13
    %v230 = vld [vmem:[%s229] ss:$0 sm:$0xff]
    %v231 = vxor.u32 %v230, 2147483648
    %v232 = vlaneseq
    %v233 = vand.u32 %v232, 127
    %vm234 = vcmp.eq.s32.totalorder %v233, 13
    %v235 = vmul.f32 %v231, %v224
    %236 = vadd.xlane.f32.xlu0 %v235
    %v237 = vpop.xlane.xlu0 %236
    %v238 = vsel %vm234, %v237, %v224
    %v239 = vmul.f32 %v231, %v228
    %240 = vadd.xlane.f32.xlu0 %v239
    %v241 = vpop.xlane.xlu0 %240
    %v242 = vsel %vm234, %v241, %v228
    %s243 = scalar_lea.vmem [#allocation2], 14
    %v244 = vld [vmem:[%s243] ss:$0 sm:$0xff]
    %v245 = vxor.u32 %v244, 2147483648
    %v246 = vlaneseq
    %v247 = vand.u32 %v246, 127
    %vm248 = vcmp.eq.s32.totalorder %v247, 14
    %v249 = vmul.f32 %v245, %v238
    %250 = vadd.xlane.f32.xlu0 %v249
    %v251 = vpop.xlane.xlu0 %250
    %v252 = vsel %vm248, %v251, %v238
    %v253 = vmul.f32 %v245, %v242
    %254 = vadd.xlane.f32.xlu0 %v253
    %v255 = vpop.xlane.xlu0 %254
    %v256 = vsel %vm248, %v255, %v242
    %s257 = scalar_lea.vmem [#allocation2], 15
    %v258 = vld [vmem:[%s257] ss:$0 sm:$0xff]
    %v259 = vxor.u32 %v258, 2147483648
    %v260 = vlaneseq
    %v261 = vand.u32 %v260, 127
    %vm262 = vcmp.eq.s32.totalorder %v261, 15
    %v263 = vmul.f32 %v259, %v252
    %264 = vadd.xlane.f32.xlu0 %v263
    %v265 = vpop.xlane.xlu0 %264
    %v266 = vsel %vm262, %v265, %v252
    %v267 = vmul.f32 %v259, %v256
    %268 = vadd.xlane.f32.xlu0 %v267
    %v269 = vpop.xlane.xlu0 %268
    %v270 = vsel %vm262, %v269, %v256
    %v271 = vrcp.pop %v48
    %v272 = vmul.f32 %v266, %v271
    %vm273 = vweird.f32 %v48
    %v274 = vsel %vm273, %v266, %v272
    %275 = vst [vmem:[#allocation1] sm:$0xff] %v274
    %v276 = vrcp.pop %v64
    %v277 = vmul.f32 %v270, %v276
    %vm278 = vweird.f32 %v64
    %v279 = vsel %vm278, %v270, %v277
    %s280 = scalar_lea.vmem [#allocation1], 8
    %281 = vst [vmem:[%s280] sm:$0xff] %v279
    // Predicated region
    $region36: #{custom-call.17} parent=1 // pred_check
      _
    $region37: #{custom-call.17} parent=1 // pred_check_branch
      %283 = sbr.rel (0) target = $region39
    $region38: #{custom-call.17} parent=1 // pred_region
      // Predicated region
      $region40: #{custom-call.17} parent=38 // pred_check
        _
      $region41: #{custom-call.17} parent=38 // pred_check_branch
        %285 = sbr.rel (0) target = $region43
      $region42: #{custom-call.17} parent=38 // pred_region
        // Predicated region
        $region55: #{custom-call.17} parent=42 // pred_check
          _
        $region56: #{custom-call.17} parent=42 // pred_check_branch
          %302 = sbr.rel (0) target = $region58
        $region57: #{custom-call.17} parent=42 // pred_region
          loop: start=0, step=1, limit=1
          $region59: #{custom-call.17} parent=57 // loop_pre_header
            _
          $region60: #{custom-call.17} parent=57 // loop_header
            %s304 = sphi 0, %s308
            %p305 = scmp.ge.s32.totalorder %s304, 1
            %s309 = sphi [#allocation1], [#allocation1]
            %s310 = sphi %s1, %s1
          $region61: #{custom-call.17} parent=57 // loop_header_branch
            %307 = sbr.rel (%p305) target = $region65
          $region62: #{custom-call.17} parent=57 // loop_body
            %v311 = vld [vmem:[%s309] sm:$0xff]
            %312 = vst [vmem:[%s310] sm:$0xff] %v311
            %v313 = vld [vmem:[%s309 + $0x8] sm:$0xff]
            %314 = vst [vmem:[%s310 + $0x8] sm:$0xff] %v313
          $region63: #{custom-call.17} parent=57 // loop_footer
            %s308 = sadd.s32 1, %s304
          $region64: #{custom-call.17} parent=57 // loop_footer_branch
            %303 = sbr.rel target = $region60
          $region65: #{custom-call.17} parent=57 // loop_exit
            _
        $region58: #{custom-call.17} parent=42 // pred_fallthru
          _
        // Predicated region
        $region66: #{custom-call.17} parent=42 // pred_check
          _
        $region67: #{custom-call.17} parent=42 // pred_check_branch
          %316 = sbr.rel target = $region69
        $region68: #{custom-call.17} parent=42 // pred_region
          _
        $region69: #{custom-call.17} parent=42 // pred_fallthru
          _
      $region43: #{custom-call.17} parent=38 // pred_fallthru
        _
      // Predicated region
      $region44: #{custom-call.17} parent=38 // pred_check
        _
      $region45: #{custom-call.17} parent=38 // pred_check_branch
        %287 = sbr.rel target = $region47
      $region46: #{custom-call.17} parent=38 // pred_region
        loop: start=0, step=1, limit=1
        $region48: #{custom-call.17} parent=46 // loop_pre_header
          _
        $region49: #{custom-call.17} parent=46 // loop_header
          %s290 = sphi 0, %s294
          %p291 = scmp.ge.s32.totalorder %s290, 1
          %s295 = sphi [#allocation1], [#allocation1]
          %s296 = sphi %s1, %s1
        $region50: #{custom-call.17} parent=46 // loop_header_branch
          %293 = sbr.rel (%p291) target = $region54
        $region51: #{custom-call.17} parent=46 // loop_body
          %v297 = vld [vmem:[%s295] sm:$0xff]
          %298 = vst [vmem:[%s296] sm:$0xff] %v297
          %v299 = vld [vmem:[%s295 + $0x8] sm:$0xff]
          %300 = vst [vmem:[%s296 + $0x8] sm:$0xff] %v299
        $region52: #{custom-call.17} parent=46 // loop_footer
          %s294 = sadd.s32 1, %s290
        $region53: #{custom-call.17} parent=46 // loop_footer_branch
          %289 = sbr.rel target = $region49
        $region54: #{custom-call.17} parent=46 // loop_exit
          _
      $region47: #{custom-call.17} parent=38 // pred_fallthru
        _
    $region39: #{custom-call.17} parent=1 // pred_fallthru
      _
    %317 = vnop

// kernel: svgp_forward.2
$region0: #{svgp_forward.2}
  #allocation0 [shape = 'u32[]', space=smem, size = 0x4, offset = 0x4, fixed_abs, tag = 'smem constant byte address 0x4 - core index']
  #allocation1 [shape = 'u32[144,128]{1,0:T(1,128)}', space=vmem, size = 0x12000, scoped, tag = 'internal scratch']
  %s0 = inlined_call_operand.vmem [shape: f32[16,4], index: 0, kind: input, shape index: {}]
  %s1 = inlined_call_operand.vmem [shape: f32[16,16], index: 1, kind: input, shape index: {}]
  %s2 = inlined_call_operand.vmem [shape: f32[16,16], index: 2, kind: output, shape index: {0}]
  %s3 = inlined_call_operand.vmem [shape: f32[16,16], index: 3, kind: output, shape index: {1}]
  %4 = xla_tuple %s2, %s3
  %s5 = sld [smem:[#allocation0]]
  $region26: #{svgp_forward.2} parent=0
    _
  %s7 = ssub.s32 1, %s5
  %s8 = scalar_select 0, %s7, %s5
  // Predicated region
  $region2: #{svgp_forward.2} parent=0 // pred_check
    _
  $region3: #{svgp_forward.2} parent=0 // pred_check_branch
    %10 = sbr.rel (0) target = $region5
  $region4: #{svgp_forward.2} parent=0 // pred_region
    _
  $region5: #{svgp_forward.2} parent=0 // pred_fallthru
    _
  // Predicated region
  $region6: #{svgp_forward.2} parent=0 // pred_check
    _
  $region7: #{svgp_forward.2} parent=0 // pred_check_branch
    %12 = sbr.rel (0) target = $region9
  $region8: #{svgp_forward.2} parent=0 // pred_region
    _
  $region9: #{svgp_forward.2} parent=0 // pred_fallthru
    _
  %v13 = vld [vmem:[%s0] sm:$0xff]
  %v14 = vld [vmem:[%s0 + $0x8] sm:$0xff]
  %v15 = vmul.f32 %v13, %v13
  %v16 = vmul.f32 %v14, %v14
  %vm17 = vcmask 31744
  %v18 = vsel %vm17, %v15, 0.0
  %19 = vadd.xlane.f32.xlu0 %v18
  %v20 = vpop.xlane.xlu0 %19
  %v21 = vsel %vm17, %v16, 0.0
  %22 = vadd.xlane.f32.xlu0 %v21
  %v23 = vpop.xlane.xlu0 %22
  %v25 = vsel %vm17, 1.0, 0
  %v28 = vsel %vm17, %v15, 0
  %v31 = vsel %vm17, %v16, 0
  %33 = vmatprep.subr.mxu0 0.0
  %v34 = vand.u32 %v28, 4294901760
  %35 = vmatpush1.xpose.msra.mxu0 %v34
  %36 = vmatprep.subr.mxu0 0.0
  %v37 = vand.u32 %v31, 4294901760
  %38 = vmatpush1.xpose.msra.mxu0 %v37
  %39 = vmatprep.subr.mxu0 0.0
  %40 = vmatpush1.xpose.msra.mxu0 0.0
  %41 = vmatprep.subr.mxu0 0.0
  %42 = vmatpush1.xpose.msra.mxu0 0.0
  %43 = vmatprep.subr.mxu0 0.0
  %44 = vmatpush1.xpose.msra.mxu0 0.0
  %45 = vmatprep.subr.mxu0 0.0
  %46 = vmatpush1.xpose.msra.mxu0 0.0
  %47 = vmatprep.subr.mxu0 0.0
  %48 = vmatpush1.xpose.msra.mxu0 0.0
  %49 = vmatprep.subr.mxu0 0.0
  %50 = vmatpush1.xpose.msra.mxu0 0.0
  %51 = vmatprep.subr.mxu0 0.0
  %52 = vmatpush1.xpose.msra.mxu0 0.0
  %53 = vmatprep.subr.mxu0 0.0
  %54 = vmatpush1.xpose.msra.mxu0 0.0
  %55 = vmatprep.subr.mxu0 0.0
  %56 = vmatpush1.xpose.msra.mxu0 0.0
  %57 = vmatprep.subr.mxu0 0.0
  %58 = vmatpush1.xpose.msra.mxu0 0.0
  %59 = vmatprep.subr.mxu0 0.0
  %60 = vmatpush1.xpose.msra.mxu0 0.0
  %61 = vmatprep.subr.mxu0 0.0
  %62 = vmatpush1.xpose.msra.mxu0 0.0
  %63 = vmatprep.subr.mxu0 0.0
  %64 = vmatpush1.xpose.msra.mxu0 0.0
  %65 = vmatprep.subr.mxu0 0.0
  %66 = vmatpush1.xpose.msra.mxu0 0.0
  %67 = vmatprep.subr.mxu0 0.0
  %68 = vmatpush1.xpose.msra.mxu0 0.0
  %69 = vmatprep.subr.mxu0 0.0
  %70 = vmatpush1.xpose.msra.mxu0 0.0
  %71 = vmatprep.subr.mxu0 0.0
  %72 = vmatpush1.xpose.msra.mxu0 0.0
  %73 = vmatprep.subr.mxu0 0.0
  %74 = vmatpush1.xpose.msra.mxu0 0.0
  %75 = vmatprep.subr.mxu0 0.0
  %76 = vmatpush1.xpose.msra.mxu0 0.0
  %77 = vmatprep.subr.mxu0 0.0
  %78 = vmatpush1.xpose.msra.mxu0 0.0
  %79 = vmatprep.subr.mxu0 0.0
  %80 = vmatpush1.xpose.msra.mxu0 0.0
  %81 = vmatprep.subr.mxu0 0.0
  %82 = vmatpush1.xpose.msra.mxu0 0.0
  %83 = vmatprep.subr.mxu0 0.0
  %84 = vmatpush1.xpose.msra.mxu0 0.0
  %85 = vmatprep.subr.mxu0 0.0
  %86 = vmatpush1.xpose.msra.mxu0 0.0
  %87 = vmatprep.subr.mxu0 0.0
  %88 = vmatpush1.xpose.msra.mxu0 0.0
  %89 = vmatprep.subr.mxu0 0.0
  %90 = vmatpush1.xpose.msra.mxu0 0.0
  %91 = vmatprep.subr.mxu0 0.0
  %92 = vmatpush1.xpose.msra.mxu0 0.0
  %93 = vmatprep.subr.mxu0 0.0
  %94 = vmatpush1.xpose.msra.mxu0 0.0
  %95 = vmatprep.subr.mxu0 0.0
  %96 = vmatpush1.xpose.msra.mxu0 0.0
  %97 = vmatprep.subr.mxu0 0.0
  %98 = vmatpush1.xpose.msra.mxu0 0.0
  %99 = vmatprep.mubr.f32.mxu0 0.0
  %v100 = vand.u32 %v25, 4294901760
  %v101 = vsub.f32 %v25, %v100
  %v102 = vand.u32 %v101, 4294901760
  %v103 = vsub.f32 %v101, %v102
  %v104 = vand.u32 %v103, 4294901760
  %105 = vmatmul.mubr.f32.gmra.mrb[0].mxu0 %v104
  %v106 = vpop.f32.mrb[0].mxu0
  %v107 = vadd.f32 0.0, %v106
  %v108 = vpop.f32.mrb[0].mxu0
  %109 = vdwg.mxu0
  %110 = vmatprep.subr.mxu0 0.0
  %v111 = vand.u32 %v28, 4294901760
  %v112 = vsub.f32 %v28, %v111
  %v113 = vand.u32 %v112, 4294901760
  %v114 = vsub.f32 %v112, %v113
  %v115 = vand.u32 %v114, 4294901760
  %116 = vmatpush1.xpose.msra.mxu0 %v115
  %117 = vmatprep.subr.mxu0 0.0
  %v118 = vand.u32 %v31, 4294901760
  %v119 = vsub.f32 %v31, %v118
  %v120 = vand.u32 %v119, 4294901760
  %v121 = vsub.f32 %v119, %v120
  %v122 = vand.u32 %v121, 4294901760
  %123 = vmatpush1.xpose.msra.mxu0 %v122
  %124 = vmatprep.subr.mxu0 0.0
  %125 = vmatpush1.xpose.msra.mxu0 0.0
  %126 = vmatprep.subr.mxu0 0.0
  %127 = vmatpush1.xpose.msra.mxu0 0.0
  %128 = vmatprep.subr.mxu0 0.0
  %129 = vmatpush1.xpose.msra.mxu0 0.0
  %130 = vmatprep.subr.mxu0 0.0
  %131 = vmatpush1.xpose.msra.mxu0 0.0
  %132 = vmatprep.subr.mxu0 0.0
  %133 = vmatpush1.xpose.msra.mxu0 0.0
  %134 = vmatprep.subr.mxu0 0.0
  %135 = vmatpush1.xpose.msra.mxu0 0.0
  %136 = vmatprep.subr.mxu0 0.0
  %137 = vmatpush1.xpose.msra.mxu0 0.0
  %138 = vmatprep.subr.mxu0 0.0
  %139 = vmatpush1.xpose.msra.mxu0 0.0
  %140 = vmatprep.subr.mxu0 0.0
  %141 = vmatpush1.xpose.msra.mxu0 0.0
  %142 = vmatprep.subr.mxu0 0.0
  %143 = vmatpush1.xpose.msra.mxu0 0.0
  %144 = vmatprep.subr.mxu0 0.0
  %145 = vmatpush1.xpose.msra.mxu0 0.0
  %146 = vmatprep.subr.mxu0 0.0
  %147 = vmatpush1.xpose.msra.mxu0 0.0
  %148 = vmatprep.subr.mxu0 0.0
  %149 = vmatpush1.xpose.msra.mxu0 0.0
  %150 = vmatprep.subr.mxu0 0.0
  %151 = vmatpush1.xpose.msra.mxu0 0.0
  %152 = vmatprep.subr.mxu0 0.0
  %153 = vmatpush1.xpose.msra.mxu0 0.0
  %154 = vmatprep.subr.mxu0 0.0
  %155 = vmatpush1.xpose.msra.mxu0 0.0
  %156 = vmatprep.subr.mxu0 0.0
  %157 = vmatpush1.xpose.msra.mxu0 0.0
  %158 = vmatprep.subr.mxu0 0.0
  %159 = vmatpush1.xpose.msra.mxu0 0.0
  %160 = vmatprep.subr.mxu0 0.0
  %161 = vmatpush1.xpose.msra.mxu0 0.0
  %162 = vmatprep.subr.mxu0 0.0
  %163 = vmatpush1.xpose.msra.mxu0 0.0
  %164 = vmatprep.subr.mxu0 0.0
  %165 = vmatpush1.xpose.msra.mxu0 0.0
  %166 = vmatprep.subr.mxu0 0.0
  %167 = vmatpush1.xpose.msra.mxu0 0.0
  %168 = vmatprep.subr.mxu0 0.0
  %169 = vmatpush1.xpose.msra.mxu0 0.0
  %170 = vmatprep.subr.mxu0 0.0
  %171 = vmatpush1.xpose.msra.mxu0 0.0
  %172 = vmatprep.subr.mxu0 0.0
  %173 = vmatpush1.xpose.msra.mxu0 0.0
  %174 = vmatprep.subr.mxu0 0.0
  %175 = vmatpush1.xpose.msra.mxu0 0.0
  %176 = vmatprep.subr.mxu0 0.0
  %177 = vmatpush1.xpose.msra.mxu0 0.0
  %178 = vmatprep.subr.mxu0 0.0
  %179 = vmatpush1.xpose.msra.mxu0 0.0
  %180 = vmatprep.subr.mxu0 0.0
  %181 = vmatpush1.xpose.msra.mxu0 0.0
  %182 = vmatprep.subr.mxu0 0.0
  %183 = vmatpush1.xpose.msra.mxu0 0.0
  %184 = vmatprep.mubr.f32.mxu0 0.0
  %v185 = vand.u32 %v25, 4294901760
  %186 = vmatmul.mubr.f32.gmra.mrb[0].mxu0 %v185
  %v187 = vpop.f32.mrb[0].mxu0
  %v188 = vadd.f32 %v107, %v187
  %v189 = vpop.f32.mrb[0].mxu0
  %190 = vdwg.mxu0
  %191 = vmatprep.subr.mxu0 0.0
  %v192 = vand.u32 %v28, 4294901760
  %v193 = vsub.f32 %v28, %v192
  %194 = vmatpush1.xpose.msra.mxu0 %v193
  %195 = vmatprep.subr.mxu0 0.0
  %v196 = vand.u32 %v31, 4294901760
  %v197 = vsub.f32 %v31, %v196
  %198 = vmatpush1.xpose.msra.mxu0 %v197
  %199 = vmatprep.subr.mxu0 0.0
  %200 = vmatpush1.xpose.msra.mxu0 0.0
  %201 = vmatprep.subr.mxu0 0.0
  %202 = vmatpush1.xpose.msra.mxu0 0.0
  %203 = vmatprep.subr.mxu0 0.0
  %204 = vmatpush1.xpose.msra.mxu0 0.0
  %205 = vmatprep.subr.mxu0 0.0
  %206 = vmatpush1.xpose.msra.mxu0 0.0
  %207 = vmatprep.subr.mxu0 0.0
  %208 = vmatpush1.xpose.msra.mxu0 0.0
  %209 = vmatprep.subr.mxu0 0.0
  %210 = vmatpush1.xpose.msra.mxu0 0.0
  %211 = vmatprep.subr.mxu0 0.0
  %212 = vmatpush1.xpose.msra.mxu0 0.0
  %213 = vmatprep.subr.mxu0 0.0
  %214 = vmatpush1.xpose.msra.mxu0 0.0
  %215 = vmatprep.subr.mxu0 0.0
  %216 = vmatpush1.xpose.msra.mxu0 0.0
  %217 = vmatprep.subr.mxu0 0.0
  %218 = vmatpush1.xpose.msra.mxu0 0.0
  %219 = vmatprep.subr.mxu0 0.0
  %220 = vmatpush1.xpose.msra.mxu0 0.0
  %221 = vmatprep.subr.mxu0 0.0
  %222 = vmatpush1.xpose.msra.mxu0 0.0
  %223 = vmatprep.subr.mxu0 0.0
  %224 = vmatpush1.xpose.msra.mxu0 0.0
  %225 = vmatprep.subr.mxu0 0.0
  %226 = vmatpush1.xpose.msra.mxu0 0.0
  %227 = vmatprep.subr.mxu0 0.0
  %228 = vmatpush1.xpose.msra.mxu0 0.0
  %229 = vmatprep.subr.mxu0 0.0
  %230 = vmatpush1.xpose.msra.mxu0 0.0
  %231 = vmatprep.subr.mxu0 0.0
  %232 = vmatpush1.xpose.msra.mxu0 0.0
  %233 = vmatprep.subr.mxu0 0.0
  %234 = vmatpush1.xpose.msra.mxu0 0.0
  %235 = vmatprep.subr.mxu0 0.0
  %236 = vmatpush1.xpose.msra.mxu0 0.0
  %237 = vmatprep.subr.mxu0 0.0
  %238 = vmatpush1.xpose.msra.mxu0 0.0
  %239 = vmatprep.subr.mxu0 0.0
  %240 = vmatpush1.xpose.msra.mxu0 0.0
  %241 = vmatprep.subr.mxu0 0.0
  %242 = vmatpush1.xpose.msra.mxu0 0.0
  %243 = vmatprep.subr.mxu0 0.0
  %244 = vmatpush1.xpose.msra.mxu0 0.0
  %245 = vmatprep.subr.mxu0 0.0
  %246 = vmatpush1.xpose.msra.mxu0 0.0
  %247 = vmatprep.subr.mxu0 0.0
  %248 = vmatpush1.xpose.msra.mxu0 0.0
  %249 = vmatprep.subr.mxu0 0.0
  %250 = vmatpush1.xpose.msra.mxu0 0.0
  %251 = vmatprep.subr.mxu0 0.0
  %252 = vmatpush1.xpose.msra.mxu0 0.0
  %253 = vmatprep.subr.mxu0 0.0
  %254 = vmatpush1.xpose.msra.mxu0 0.0
  %255 = vmatprep.subr.mxu0 0.0
  %256 = vmatpush1.xpose.msra.mxu0 0.0
  %257 = vmatprep.subr.mxu0 0.0
  %258 = vmatpush1.xpose.msra.mxu0 0.0
  %259 = vmatprep.mubr.f32.mxu0 0.0
  %v260 = vand.u32 %v25, 4294901760
  %v261 = vsub.f32 %v25, %v260
  %262 = vmatmul.mubr.f32.gmra.mrb[0].mxu0 %v261
  %v263 = vpop.f32.mrb[0].mxu0
  %v264 = vadd.f32 %v188, %v263
  %v265 = vpop.f32.mrb[0].mxu0
  %266 = vdwg.mxu0
  %267 = vmatprep.subr.mxu0 0.0
  %v268 = vand.u32 %v28, 4294901760
  %269 = vmatpush1.xpose.msra.mxu0 %v268
  %270 = vmatprep.subr.mxu0 0.0
  %v271 = vand.u32 %v31, 4294901760
  %272 = vmatpush1.xpose.msra.mxu0 %v271
  %273 = vmatprep.subr.mxu0 0.0
  %274 = vmatpush1.xpose.msra.mxu0 0.0
  %275 = vmatprep.subr.mxu0 0.0
  %276 = vmatpush1.xpose.msra.mxu0 0.0
  %277 = vmatprep.subr.mxu0 0.0
  %278 = vmatpush1.xpose.msra.mxu0 0.0
  %279 = vmatprep.subr.mxu0 0.0
  %280 = vmatpush1.xpose.msra.mxu0 0.0
  %281 = vmatprep.subr.mxu0 0.0
  %282 = vmatpush1.xpose.msra.mxu0 0.0
  %283 = vmatprep.subr.mxu0 0.0
  %284 = vmatpush1.xpose.msra.mxu0 0.0
  %285 = vmatprep.subr.mxu0 0.0
  %286 = vmatpush1.xpose.msra.mxu0 0.0
  %287 = vmatprep.subr.mxu0 0.0
  %288 = vmatpush1.xpose.msra.mxu0 0.0
  %289 = vmatprep.subr.mxu0 0.0
  %290 = vmatpush1.xpose.msra.mxu0 0.0
  %291 = vmatprep.subr.mxu0 0.0
  %292 = vmatpush1.xpose.msra.mxu0 0.0
  %293 = vmatprep.subr.mxu0 0.0
  %294 = vmatpush1.xpose.msra.mxu0 0.0
  %295 = vmatprep.subr.mxu0 0.0
  %296 = vmatpush1.xpose.msra.mxu0 0.0
  %297 = vmatprep.subr.mxu0 0.0
  %298 = vmatpush1.xpose.msra.mxu0 0.0
  %299 = vmatprep.subr.mxu0 0.0
  %300 = vmatpush1.xpose.msra.mxu0 0.0
  %301 = vmatprep.subr.mxu0 0.0
  %302 = vmatpush1.xpose.msra.mxu0 0.0
  %303 = vmatprep.subr.mxu0 0.0
  %304 = vmatpush1.xpose.msra.mxu0 0.0
  %305 = vmatprep.subr.mxu0 0.0
  %306 = vmatpush1.xpose.msra.mxu0 0.0
  %307 = vmatprep.subr.mxu0 0.0
  %308 = vmatpush1.xpose.msra.mxu0 0.0
  %309 = vmatprep.subr.mxu0 0.0
  %310 = vmatpush1.xpose.msra.mxu0 0.0
  %311 = vmatprep.subr.mxu0 0.0
  %312 = vmatpush1.xpose.msra.mxu0 0.0
  %313 = vmatprep.subr.mxu0 0.0
  %314 = vmatpush1.xpose.msra.mxu0 0.0
  %315 = vmatprep.subr.mxu0 0.0
  %316 = vmatpush1.xpose.msra.mxu0 0.0
  %317 = vmatprep.subr.mxu0 0.0
  %318 = vmatpush1.xpose.msra.mxu0 0.0
  %319 = vmatprep.subr.mxu0 0.0
  %320 = vmatpush1.xpose.msra.mxu0 0.0
  %321 = vmatprep.subr.mxu0 0.0
  %322 = vmatpush1.xpose.msra.mxu0 0.0
  %323 = vmatprep.subr.mxu0 0.0
  %324 = vmatpush1.xpose.msra.mxu0 0.0
  %325 = vmatprep.subr.mxu0 0.0
  %326 = vmatpush1.xpose.msra.mxu0 0.0
  %327 = vmatprep.subr.mxu0 0.0
  %328 = vmatpush1.xpose.msra.mxu0 0.0
  %329 = vmatprep.subr.mxu0 0.0
  %330 = vmatpush1.xpose.msra.mxu0 0.0
  %331 = vmatprep.subr.mxu0 0.0
  %332 = vmatpush1.xpose.msra.mxu0 0.0
  %333 = vmatprep.mubr.f32.mxu0 0.0
  %v334 = vand.u32 %v25, 4294901760
  %v335 = vsub.f32 %v25, %v334
  %v336 = vand.u32 %v335, 4294901760
  %337 = vmatmul.mubr.f32.gmra.mrb[0].mxu0 %v336
  %v338 = vpop.f32.mrb[0].mxu0
  %v339 = vadd.f32 %v264, %v338
  %v340 = vpop.f32.mrb[0].mxu0
  %341 = vdwg.mxu0
  %342 = vmatprep.subr.mxu0 0.0
  %v343 = vand.u32 %v28, 4294901760
  %v344 = vsub.f32 %v28, %v343
  %v345 = vand.u32 %v344, 4294901760
  %346 = vmatpush1.xpose.msra.mxu0 %v345
  %347 = vmatprep.subr.mxu0 0.0
  %v348 = vand.u32 %v31, 4294901760
  %v349 = vsub.f32 %v31, %v348
  %v350 = vand.u32 %v349, 4294901760
  %351 = vmatpush1.xpose.msra.mxu0 %v350
  %352 = vmatprep.subr.mxu0 0.0
  %353 = vmatpush1.xpose.msra.mxu0 0.0
  %354 = vmatprep.subr.mxu0 0.0
  %355 = vmatpush1.xpose.msra.mxu0 0.0
  %356 = vmatprep.subr.mxu0 0.0
  %357 = vmatpush1.xpose.msra.mxu0 0.0
  %358 = vmatprep.subr.mxu0 0.0
  %359 = vmatpush1.xpose.msra.mxu0 0.0
  %360 = vmatprep.subr.mxu0 0.0
  %361 = vmatpush1.xpose.msra.mxu0 0.0
  %362 = vmatprep.subr.mxu0 0.0
  %363 = vmatpush1.xpose.msra.mxu0 0.0
  %364 = vmatprep.subr.mxu0 0.0
  %365 = vmatpush1.xpose.msra.mxu0 0.0
  %366 = vmatprep.subr.mxu0 0.0
  %367 = vmatpush1.xpose.msra.mxu0 0.0
  %368 = vmatprep.subr.mxu0 0.0
  %369 = vmatpush1.xpose.msra.mxu0 0.0
  %370 = vmatprep.subr.mxu0 0.0
  %371 = vmatpush1.xpose.msra.mxu0 0.0
  %372 = vmatprep.subr.mxu0 0.0
  %373 = vmatpush1.xpose.msra.mxu0 0.0
  %374 = vmatprep.subr.mxu0 0.0
  %375 = vmatpush1.xpose.msra.mxu0 0.0
  %376 = vmatprep.subr.mxu0 0.0
  %377 = vmatpush1.xpose.msra.mxu0 0.0
  %378 = vmatprep.subr.mxu0 0.0
  %379 = vmatpush1.xpose.msra.mxu0 0.0
  %380 = vmatprep.subr.mxu0 0.0
  %381 = vmatpush1.xpose.msra.mxu0 0.0
  %382 = vmatprep.subr.mxu0 0.0
  %383 = vmatpush1.xpose.msra.mxu0 0.0
  %384 = vmatprep.subr.mxu0 0.0
  %385 = vmatpush1.xpose.msra.mxu0 0.0
  %386 = vmatprep.subr.mxu0 0.0
  %387 = vmatpush1.xpose.msra.mxu0 0.0
  %388 = vmatprep.subr.mxu0 0.0
  %389 = vmatpush1.xpose.msra.mxu0 0.0
  %390 = vmatprep.subr.mxu0 0.0
  %391 = vmatpush1.xpose.msra.mxu0 0.0
  %392 = vmatprep.subr.mxu0 0.0
  %393 = vmatpush1.xpose.msra.mxu0 0.0
  %394 = vmatprep.subr.mxu0 0.0
  %395 = vmatpush1.xpose.msra.mxu0 0.0
  %396 = vmatprep.subr.mxu0 0.0
  %397 = vmatpush1.xpose.msra.mxu0 0.0
  %398 = vmatprep.subr.mxu0 0.0
  %399 = vmatpush1.xpose.msra.mxu0 0.0
  %400 = vmatprep.subr.mxu0 0.0
  %401 = vmatpush1.xpose.msra.mxu0 0.0
  %402 = vmatprep.subr.mxu0 0.0
  %403 = vmatpush1.xpose.msra.mxu0 0.0
  %404 = vmatprep.subr.mxu0 0.0
  %405 = vmatpush1.xpose.msra.mxu0 0.0
  %406 = vmatprep.subr.mxu0 0.0
  %407 = vmatpush1.xpose.msra.mxu0 0.0
  %408 = vmatprep.subr.mxu0 0.0
  %409 = vmatpush1.xpose.msra.mxu0 0.0
  %410 = vmatprep.subr.mxu0 0.0
  %411 = vmatpush1.xpose.msra.mxu0 0.0
  %412 = vmatprep.mubr.f32.mxu0 0.0
  %v413 = vand.u32 %v25, 4294901760
  %414 = vmatmul.mubr.f32.gmra.mrb[0].mxu0 %v413
  %v415 = vpop.f32.mrb[0].mxu0
  %v416 = vadd.f32 %v339, %v415
  %v417 = vpop.f32.mrb[0].mxu0
  %418 = vdwg.mxu0
  %419 = vmatprep.subr.mxu0 0.0
  %v420 = vand.u32 %v28, 4294901760
  %421 = vmatpush1.xpose.msra.mxu0 %v420
  %422 = vmatprep.subr.mxu0 0.0
  %v423 = vand.u32 %v31, 4294901760
  %424 = vmatpush1.xpose.msra.mxu0 %v423
  %425 = vmatprep.subr.mxu0 0.0
  %426 = vmatpush1.xpose.msra.mxu0 0.0
  %427 = vmatprep.subr.mxu0 0.0
  %428 = vmatpush1.xpose.msra.mxu0 0.0
  %429 = vmatprep.subr.mxu0 0.0
  %430 = vmatpush1.xpose.msra.mxu0 0.0
  %431 = vmatprep.subr.mxu0 0.0
  %432 = vmatpush1.xpose.msra.mxu0 0.0
  %433 = vmatprep.subr.mxu0 0.0
  %434 = vmatpush1.xpose.msra.mxu0 0.0
  %435 = vmatprep.subr.mxu0 0.0
  %436 = vmatpush1.xpose.msra.mxu0 0.0
  %437 = vmatprep.subr.mxu0 0.0
  %438 = vmatpush1.xpose.msra.mxu0 0.0
  %439 = vmatprep.subr.mxu0 0.0
  %440 = vmatpush1.xpose.msra.mxu0 0.0
  %441 = vmatprep.subr.mxu0 0.0
  %442 = vmatpush1.xpose.msra.mxu0 0.0
  %443 = vmatprep.subr.mxu0 0.0
  %444 = vmatpush1.xpose.msra.mxu0 0.0
  %445 = vmatprep.subr.mxu0 0.0
  %446 = vmatpush1.xpose.msra.mxu0 0.0
  %447 = vmatprep.subr.mxu0 0.0
  %448 = vmatpush1.xpose.msra.mxu0 0.0
  %449 = vmatprep.subr.mxu0 0.0
  %450 = vmatpush1.xpose.msra.mxu0 0.0
  %451 = vmatprep.subr.mxu0 0.0
  %452 = vmatpush1.xpose.msra.mxu0 0.0
  %453 = vmatprep.subr.mxu0 0.0
  %454 = vmatpush1.xpose.msra.mxu0 0.0
  %455 = vmatprep.subr.mxu0 0.0
  %456 = vmatpush1.xpose.msra.mxu0 0.0
  %457 = vmatprep.subr.mxu0 0.0
  %458 = vmatpush1.xpose.msra.mxu0 0.0
  %459 = vmatprep.subr.mxu0 0.0
  %460 = vmatpush1.xpose.msra.mxu0 0.0
  %461 = vmatprep.subr.mxu0 0.0
  %462 = vmatpush1.xpose.msra.mxu0 0.0
  %463 = vmatprep.subr.mxu0 0.0
  %464 = vmatpush1.xpose.msra.mxu0 0.0
  %465 = vmatprep.subr.mxu0 0.0
  %466 = vmatpush1.xpose.msra.mxu0 0.0
  %467 = vmatprep.subr.mxu0 0.0
  %468 = vmatpush1.xpose.msra.mxu0 0.0
  %469 = vmatprep.subr.mxu0 0.0
  %470 = vmatpush1.xpose.msra.mxu0 0.0
  %471 = vmatprep.subr.mxu0 0.0
  %472 = vmatpush1.xpose.msra.mxu0 0.0
  %473 = vmatprep.subr.mxu0 0.0
  %474 = vmatpush1.xpose.msra.mxu0 0.0
  %475 = vmatprep.subr.mxu0 0.0
  %476 = vmatpush1.xpose.msra.mxu0 0.0
  %477 = vmatprep.subr.mxu0 0.0
  %478 = vmatpush1.xpose.msra.mxu0 0.0
  %479 = vmatprep.subr.mxu0 0.0
  %480 = vmatpush1.xpose.msra.mxu0 0.0
  %481 = vmatprep.subr.mxu0 0.0
  %482 = vmatpush1.xpose.msra.mxu0 0.0
  %483 = vmatprep.subr.mxu0 0.0
  %484 = vmatpush1.xpose.msra.mxu0 0.0
  %485 = vmatprep.mubr.f32.mxu0 0.0
  %v486 = vand.u32 %v25, 4294901760
  %487 = vmatmul.mubr.f32.gmra.mrb[0].mxu0 %v486
  %v488 = vpop.f32.mrb[0].mxu0
  %v489 = vadd.f32 %v416, %v488
  %v490 = vpop.f32.mrb[0].mxu0
  %491 = vdwg.mxu0
  %v493 = vsel %vm17, %v13, 0
  %v496 = vsel %vm17, %v14, 0
  %498 = vmatprep.subr.mxu0 0.0
  %v499 = vand.u32 %v493, 4294901760
  %500 = vmatpush1.xpose.msra.mxu0 %v499
  %501 = vmatprep.subr.mxu0 0.0
  %v502 = vand.u32 %v496, 4294901760
  %503 = vmatpush1.xpose.msra.mxu0 %v502
  %504 = vmatprep.subr.mxu0 0.0
  %505 = vmatpush1.xpose.msra.mxu0 0.0
  %506 = vmatprep.subr.mxu0 0.0
  %507 = vmatpush1.xpose.msra.mxu0 0.0
  %508 = vmatprep.subr.mxu0 0.0
  %509 = vmatpush1.xpose.msra.mxu0 0.0
  %510 = vmatprep.subr.mxu0 0.0
  %511 = vmatpush1.xpose.msra.mxu0 0.0
  %512 = vmatprep.subr.mxu0 0.0
  %513 = vmatpush1.xpose.msra.mxu0 0.0
  %514 = vmatprep.subr.mxu0 0.0
  %515 = vmatpush1.xpose.msra.mxu0 0.0
  %516 = vmatprep.subr.mxu0 0.0
  %517 = vmatpush1.xpose.msra.mxu0 0.0
  %518 = vmatprep.subr.mxu0 0.0
  %519 = vmatpush1.xpose.msra.mxu0 0.0
  %520 = vmatprep.subr.mxu0 0.0
  %521 = vmatpush1.xpose.msra.mxu0 0.0
  %522 = vmatprep.subr.mxu0 0.0
  %523 = vmatpush1.xpose.msra.mxu0 0.0
  %524 = vmatprep.subr.mxu0 0.0
  %525 = vmatpush1.xpose.msra.mxu0 0.0
  %526 = vmatprep.subr.mxu0 0.0
  %527 = vmatpush1.xpose.msra.mxu0 0.0
  %528 = vmatprep.subr.mxu0 0.0
  %529 = vmatpush1.xpose.msra.mxu0 0.0
  %530 = vmatprep.subr.mxu0 0.0
  %531 = vmatpush1.xpose.msra.mxu0 0.0
  %532 = vmatprep.subr.mxu0 0.0
  %533 = vmatpush1.xpose.msra.mxu0 0.0
  %534 = vmatprep.subr.mxu0 0.0
  %535 = vmatpush1.xpose.msra.mxu0 0.0
  %536 = vmatprep.subr.mxu0 0.0
  %537 = vmatpush1.xpose.msra.mxu0 0.0
  %538 = vmatprep.subr.mxu0 0.0
  %539 = vmatpush1.xpose.msra.mxu0 0.0
  %540 = vmatprep.subr.mxu0 0.0
  %541 = vmatpush1.xpose.msra.mxu0 0.0
  %542 = vmatprep.subr.mxu0 0.0
  %543 = vmatpush1.xpose.msra.mxu0 0.0
  %544 = vmatprep.subr.mxu0 0.0
  %545 = vmatpush1.xpose.msra.mxu0 0.0
  %546 = vmatprep.subr.mxu0 0.0
  %547 = vmatpush1.xpose.msra.mxu0 0.0
  %548 = vmatprep.subr.mxu0 0.0
  %549 = vmatpush1.xpose.msra.mxu0 0.0
  %550 = vmatprep.subr.mxu0 0.0
  %551 = vmatpush1.xpose.msra.mxu0 0.0
  %552 = vmatprep.subr.mxu0 0.0
  %553 = vmatpush1.xpose.msra.mxu0 0.0
  %554 = vmatprep.subr.mxu0 0.0
  %555 = vmatpush1.xpose.msra.mxu0 0.0
  %556 = vmatprep.subr.mxu0 0.0
  %557 = vmatpush1.xpose.msra.mxu0 0.0
  %558 = vmatprep.subr.mxu0 0.0
  %559 = vmatpush1.xpose.msra.mxu0 0.0
  %560 = vmatprep.subr.mxu0 0.0
  %561 = vmatpush1.xpose.msra.mxu0 0.0
  %562 = vmatprep.subr.mxu0 0.0
  %563 = vmatpush1.xpose.msra.mxu0 0.0
  %564 = vmatprep.mubr.f32.mxu0 0.0
  %v565 = vand.u32 %v493, 4294901760
  %v566 = vsub.f32 %v493, %v565
  %v567 = vand.u32 %v566, 4294901760
  %v568 = vsub.f32 %v566, %v567
  %v569 = vand.u32 %v568, 4294901760
  %570 = vmatmul.mubr.f32.gmra.mrb[0].mxu0 %v569
  %v571 = vpop.f32.mrb[0].mxu0
  %v572 = vadd.f32 0.0, %v571
  %v573 = vpop.f32.mrb[0].mxu0
  %574 = vmatprep.mubr.f32.mxu0 0.0
  %v575 = vand.u32 %v496, 4294901760
  %v576 = vsub.f32 %v496, %v575
  %v577 = vand.u32 %v576, 4294901760
  %v578 = vsub.f32 %v576, %v577
  %v579 = vand.u32 %v578, 4294901760
  %580 = vmatmul.mubr.f32.gmra.mrb[0].mxu0 %v579
  %v581 = vpop.f32.mrb[0].mxu0
  %v582 = vadd.f32 0.0, %v581
  %v583 = vpop.f32.mrb[0].mxu0
  %584 = vdwg.mxu0
  %585 = vmatprep.subr.mxu0 0.0
  %v586 = vand.u32 %v493, 4294901760
  %v587 = vsub.f32 %v493, %v586
  %v588 = vand.u32 %v587, 4294901760
  %v589 = vsub.f32 %v587, %v588
  %v590 = vand.u32 %v589, 4294901760
  %591 = vmatpush1.xpose.msra.mxu0 %v590
  %592 = vmatprep.subr.mxu0 0.0
  %v593 = vand.u32 %v496, 4294901760
  %v594 = vsub.f32 %v496, %v593
  %v595 = vand.u32 %v594, 4294901760
  %v596 = vsub.f32 %v594, %v595
  %v597 = vand.u32 %v596, 4294901760
  %598 = vmatpush1.xpose.msra.mxu0 %v597
  %599 = vmatprep.subr.mxu0 0.0
  %600 = vmatpush1.xpose.msra.mxu0 0.0
  %601 = vmatprep.subr.mxu0 0.0
  %602 = vmatpush1.xpose.msra.mxu0 0.0
  %603 = vmatprep.subr.mxu0 0.0
  %604 = vmatpush1.xpose.msra.mxu0 0.0
  %605 = vmatprep.subr.mxu0 0.0
  %606 = vmatpush1.xpose.msra.mxu0 0.0
  %607 = vmatprep.subr.mxu0 0.0
  %608 = vmatpush1.xpose.msra.mxu0 0.0
  %609 = vmatprep.subr.mxu0 0.0
  %610 = vmatpush1.xpose.msra.mxu0 0.0
  %611 = vmatprep.subr.mxu0 0.0
  %612 = vmatpush1.xpose.msra.mxu0 0.0
  %613 = vmatprep.subr.mxu0 0.0
  %614 = vmatpush1.xpose.msra.mxu0 0.0
  %615 = vmatprep.subr.mxu0 0.0
  %616 = vmatpush1.xpose.msra.mxu0 0.0
  %617 = vmatprep.subr.mxu0 0.0
  %618 = vmatpush1.xpose.msra.mxu0 0.0
  %619 = vmatprep.subr.mxu0 0.0
  %620 = vmatpush1.xpose.msra.mxu0 0.0
  %621 = vmatprep.subr.mxu0 0.0
  %622 = vmatpush1.xpose.msra.mxu0 0.0
  %623 = vmatprep.subr.mxu0 0.0
  %624 = vmatpush1.xpose.msra.mxu0 0.0
  %625 = vmatprep.subr.mxu0 0.0
  %626 = vmatpush1.xpose.msra.mxu0 0.0
  %627 = vmatprep.subr.mxu0 0.0
  %628 = vmatpush1.xpose.msra.mxu0 0.0
  %629 = vmatprep.subr.mxu0 0.0
  %630 = vmatpush1.xpose.msra.mxu0 0.0
  %631 = vmatprep.subr.mxu0 0.0
  %632 = vmatpush1.xpose.msra.mxu0 0.0
  %633 = vmatprep.subr.mxu0 0.0
  %634 = vmatpush1.xpose.msra.mxu0 0.0
  %635 = vmatprep.subr.mxu0 0.0
  %636 = vmatpush1.xpose.msra.mxu0 0.0
  %637 = vmatprep.subr.mxu0 0.0
  %638 = vmatpush1.xpose.msra.mxu0 0.0
  %639 = vmatprep.subr.mxu0 0.0
  %640 = vmatpush1.xpose.msra.mxu0 0.0
  %641 = vmatprep.subr.mxu0 0.0
  %642 = vmatpush1.xpose.msra.mxu0 0.0
  %643 = vmatprep.subr.mxu0 0.0
  %644 = vmatpush1.xpose.msra.mxu0 0.0
  %645 = vmatprep.subr.mxu0 0.0
  %646 = vmatpush1.xpose.msra.mxu0 0.0
  %647 = vmatprep.subr.mxu0 0.0
  %648 = vmatpush1.xpose.msra.mxu0 0.0
  %649 = vmatprep.subr.mxu0 0.0
  %650 = vmatpush1.xpose.msra.mxu0 0.0
  %651 = vmatprep.subr.mxu0 0.0
  %652 = vmatpush1.xpose.msra.mxu0 0.0
  %653 = vmatprep.subr.mxu0 0.0
  %654 = vmatpush1.xpose.msra.mxu0 0.0
  %655 = vmatprep.subr.mxu0 0.0
  %656 = vmatpush1.xpose.msra.mxu0 0.0
  %657 = vmatprep.subr.mxu0 0.0
  %658 = vmatpush1.xpose.msra.mxu0 0.0
  %659 = vmatprep.mubr.f32.mxu0 0.0
  %v660 = vand.u32 %v493, 4294901760
  %661 = vmatmul.mubr.f32.gmra.mrb[0].mxu0 %v660
  %v662 = vpop.f32.mrb[0].mxu0
  %v663 = vadd.f32 %v572, %v662
  %v664 = vpop.f32.mrb[0].mxu0
  %665 = vmatprep.mubr.f32.mxu0 0.0
  %v666 = vand.u32 %v496, 4294901760
  %667 = vmatmul.mubr.f32.gmra.mrb[0].mxu0 %v666
  %v668 = vpop.f32.mrb[0].mxu0
  %v669 = vadd.f32 %v582, %v668
  %v670 = vpop.f32.mrb[0].mxu0
  %671 = vdwg.mxu0
  %672 = vmatprep.subr.mxu0 0.0
  %v673 = vand.u32 %v493, 4294901760
  %v674 = vsub.f32 %v493, %v673
  %675 = vmatpush1.xpose.msra.mxu0 %v674
  %676 = vmatprep.subr.mxu0 0.0
  %v677 = vand.u32 %v496, 4294901760
  %v678 = vsub.f32 %v496, %v677
  %679 = vmatpush1.xpose.msra.mxu0 %v678
  %680 = vmatprep.subr.mxu0 0.0
  %681 = vmatpush1.xpose.msra.mxu0 0.0
  %682 = vmatprep.subr.mxu0 0.0
  %683 = vmatpush1.xpose.msra.mxu0 0.0
  %684 = vmatprep.subr.mxu0 0.0
  %685 = vmatpush1.xpose.msra.mxu0 0.0
  %686 = vmatprep.subr.mxu0 0.0
  %687 = vmatpush1.xpose.msra.mxu0 0.0
  %688 = vmatprep.subr.mxu0 0.0
  %689 = vmatpush1.xpose.msra.mxu0 0.0
  %690 = vmatprep.subr.mxu0 0.0
  %691 = vmatpush1.xpose.msra.mxu0 0.0
  %692 = vmatprep.subr.mxu0 0.0
  %693 = vmatpush1.xpose.msra.mxu0 0.0
  %694 = vmatprep.subr.mxu0 0.0
  %695 = vmatpush1.xpose.msra.mxu0 0.0
  %696 = vmatprep.subr.mxu0 0.0
  %697 = vmatpush1.xpose.msra.mxu0 0.0
  %698 = vmatprep.subr.mxu0 0.0
  %699 = vmatpush1.xpose.msra.mxu0 0.0
  %700 = vmatprep.subr.mxu0 0.0
  %701 = vmatpush1.xpose.msra.mxu0 0.0
  %702 = vmatprep.subr.mxu0 0.0
  %703 = vmatpush1.xpose.msra.mxu0 0.0
  %704 = vmatprep.subr.mxu0 0.0
  %705 = vmatpush1.xpose.msra.mxu0 0.0
  %706 = vmatprep.subr.mxu0 0.0
  %707 = vmatpush1.xpose.msra.mxu0 0.0
  %708 = vmatprep.subr.mxu0 0.0
  %709 = vmatpush1.xpose.msra.mxu0 0.0
  %710 = vmatprep.subr.mxu0 0.0
  %711 = vmatpush1.xpose.msra.mxu0 0.0
  %712 = vmatprep.subr.mxu0 0.0
  %713 = vmatpush1.xpose.msra.mxu0 0.0
  %714 = vmatprep.subr.mxu0 0.0
  %715 = vmatpush1.xpose.msra.mxu0 0.0
  %716 = vmatprep.subr.mxu0 0.0
  %717 = vmatpush1.xpose.msra.mxu0 0.0
  %718 = vmatprep.subr.mxu0 0.0
  %719 = vmatpush1.xpose.msra.mxu0 0.0
  %720 = vmatprep.subr.mxu0 0.0
  %721 = vmatpush1.xpose.msra.mxu0 0.0
  %722 = vmatprep.subr.mxu0 0.0
  %723 = vmatpush1.xpose.msra.mxu0 0.0
  %724 = vmatprep.subr.mxu0 0.0
  %725 = vmatpush1.xpose.msra.mxu0 0.0
  %726 = vmatprep.subr.mxu0 0.0
  %727 = vmatpush1.xpose.msra.mxu0 0.0
  %728 = vmatprep.subr.mxu0 0.0
  %729 = vmatpush1.xpose.msra.mxu0 0.0
  %730 = vmatprep.subr.mxu0 0.0
  %731 = vmatpush1.xpose.msra.mxu0 0.0
  %732 = vmatprep.subr.mxu0 0.0
  %733 = vmatpush1.xpose.msra.mxu0 0.0
  %734 = vmatprep.subr.mxu0 0.0
  %735 = vmatpush1.xpose.msra.mxu0 0.0
  %736 = vmatprep.subr.mxu0 0.0
  %737 = vmatpush1.xpose.msra.mxu0 0.0
  %738 = vmatprep.subr.mxu0 0.0
  %739 = vmatpush1.xpose.msra.mxu0 0.0
  %740 = vmatprep.mubr.f32.mxu0 0.0
  %v741 = vand.u32 %v493, 4294901760
  %v742 = vsub.f32 %v493, %v741
  %743 = vmatmul.mubr.f32.gmra.mrb[0].mxu0 %v742
  %v744 = vpop.f32.mrb[0].mxu0
  %v745 = vadd.f32 %v663, %v744
  %v746 = vpop.f32.mrb[0].mxu0
  %747 = vmatprep.mubr.f32.mxu0 0.0
  %v748 = vand.u32 %v496, 4294901760
  %v749 = vsub.f32 %v496, %v748
  %750 = vmatmul.mubr.f32.gmra.mrb[0].mxu0 %v749
  %v751 = vpop.f32.mrb[0].mxu0
  %v752 = vadd.f32 %v669, %v751
  %v753 = vpop.f32.mrb[0].mxu0
  %754 = vdwg.mxu0
  %755 = vmatprep.subr.mxu0 0.0
  %v756 = vand.u32 %v493, 4294901760
  %757 = vmatpush1.xpose.msra.mxu0 %v756
  %758 = vmatprep.subr.mxu0 0.0
  %v759 = vand.u32 %v496, 4294901760
  %760 = vmatpush1.xpose.msra.mxu0 %v759
  %761 = vmatprep.subr.mxu0 0.0
  %762 = vmatpush1.xpose.msra.mxu0 0.0
  %763 = vmatprep.subr.mxu0 0.0
  %764 = vmatpush1.xpose.msra.mxu0 0.0
  %765 = vmatprep.subr.mxu0 0.0
  %766 = vmatpush1.xpose.msra.mxu0 0.0
  %767 = vmatprep.subr.mxu0 0.0
  %768 = vmatpush1.xpose.msra.mxu0 0.0
  %769 = vmatprep.subr.mxu0 0.0
  %770 = vmatpush1.xpose.msra.mxu0 0.0
  %771 = vmatprep.subr.mxu0 0.0
  %772 = vmatpush1.xpose.msra.mxu0 0.0
  %773 = vmatprep.subr.mxu0 0.0
  %774 = vmatpush1.xpose.msra.mxu0 0.0
  %775 = vmatprep.subr.mxu0 0.0
  %776 = vmatpush1.xpose.msra.mxu0 0.0
  %777 = vmatprep.subr.mxu0 0.0
  %778 = vmatpush1.xpose.msra.mxu0 0.0
  %779 = vmatprep.subr.mxu0 0.0
  %780 = vmatpush1.xpose.msra.mxu0 0.0
  %781 = vmatprep.subr.mxu0 0.0
  %782 = vmatpush1.xpose.msra.mxu0 0.0
  %783 = vmatprep.subr.mxu0 0.0
  %784 = vmatpush1.xpose.msra.mxu0 0.0
  %785 = vmatprep.subr.mxu0 0.0
  %786 = vmatpush1.xpose.msra.mxu0 0.0
  %787 = vmatprep.subr.mxu0 0.0
  %788 = vmatpush1.xpose.msra.mxu0 0.0
  %789 = vmatprep.subr.mxu0 0.0
  %790 = vmatpush1.xpose.msra.mxu0 0.0
  %791 = vmatprep.subr.mxu0 0.0
  %792 = vmatpush1.xpose.msra.mxu0 0.0
  %793 = vmatprep.subr.mxu0 0.0
  %794 = vmatpush1.xpose.msra.mxu0 0.0
  %795 = vmatprep.subr.mxu0 0.0
  %796 = vmatpush1.xpose.msra.mxu0 0.0
  %797 = vmatprep.subr.mxu0 0.0
  %798 = vmatpush1.xpose.msra.mxu0 0.0
  %799 = vmatprep.subr.mxu0 0.0
  %800 = vmatpush1.xpose.msra.mxu0 0.0
  %801 = vmatprep.subr.mxu0 0.0
  %802 = vmatpush1.xpose.msra.mxu0 0.0
  %803 = vmatprep.subr.mxu0 0.0
  %804 = vmatpush1.xpose.msra.mxu0 0.0
  %805 = vmatprep.subr.mxu0 0.0
  %806 = vmatpush1.xpose.msra.mxu0 0.0
  %807 = vmatprep.subr.mxu0 0.0
  %808 = vmatpush1.xpose.msra.mxu0 0.0
  %809 = vmatprep.subr.mxu0 0.0
  %810 = vmatpush1.xpose.msra.mxu0 0.0
  %811 = vmatprep.subr.mxu0 0.0
  %812 = vmatpush1.xpose.msra.mxu0 0.0
  %813 = vmatprep.subr.mxu0 0.0
  %814 = vmatpush1.xpose.msra.mxu0 0.0
  %815 = vmatprep.subr.mxu0 0.0
  %816 = vmatpush1.xpose.msra.mxu0 0.0
  %817 = vmatprep.subr.mxu0 0.0
  %818 = vmatpush1.xpose.msra.mxu0 0.0
  %819 = vmatprep.subr.mxu0 0.0
  %820 = vmatpush1.xpose.msra.mxu0 0.0
  %821 = vmatprep.mubr.f32.mxu0 0.0
  %v822 = vand.u32 %v493, 4294901760
  %v823 = vsub.f32 %v493, %v822
  %v824 = vand.u32 %v823, 4294901760
  %825 = vmatmul.mubr.f32.gmra.mrb[0].mxu0 %v824
  %v826 = vpop.f32.mrb[0].mxu0
  %v827 = vadd.f32 %v745, %v826
  %v828 = vpop.f32.mrb[0].mxu0
  %829 = vmatprep.mubr.f32.mxu0 0.0
  %v830 = vand.u32 %v496, 4294901760
  %v831 = vsub.f32 %v496, %v830
  %v832 = vand.u32 %v831, 4294901760
  %833 = vmatmul.mubr.f32.gmra.mrb[0].mxu0 %v832
  %v834 = vpop.f32.mrb[0].mxu0
  %v835 = vadd.f32 %v752, %v834
  %v836 = vpop.f32.mrb[0].mxu0
  %837 = vdwg.mxu0
  %838 = vmatprep.subr.mxu0 0.0
  %v839 = vand.u32 %v493, 4294901760
  %v840 = vsub.f32 %v493, %v839
  %v841 = vand.u32 %v840, 4294901760
  %842 = vmatpush1.xpose.msra.mxu0 %v841
  %843 = vmatprep.subr.mxu0 0.0
  %v844 = vand.u32 %v496, 4294901760
  %v845 = vsub.f32 %v496, %v844
  %v846 = vand.u32 %v845, 4294901760
  %847 = vmatpush1.xpose.msra.mxu0 %v846
  %848 = vmatprep.subr.mxu0 0.0
  %849 = vmatpush1.xpose.msra.mxu0 0.0
  %850 = vmatprep.subr.mxu0 0.0
  %851 = vmatpush1.xpose.msra.mxu0 0.0
  %852 = vmatprep.subr.mxu0 0.0
  %853 = vmatpush1.xpose.msra.mxu0 0.0
  %854 = vmatprep.subr.mxu0 0.0
  %855 = vmatpush1.xpose.msra.mxu0 0.0
  %856 = vmatprep.subr.mxu0 0.0
  %857 = vmatpush1.xpose.msra.mxu0 0.0
  %858 = vmatprep.subr.mxu0 0.0
  %859 = vmatpush1.xpose.msra.mxu0 0.0
  %860 = vmatprep.subr.mxu0 0.0
  %861 = vmatpush1.xpose.msra.mxu0 0.0
  %862 = vmatprep.subr.mxu0 0.0
  %863 = vmatpush1.xpose.msra.mxu0 0.0
  %864 = vmatprep.subr.mxu0 0.0
  %865 = vmatpush1.xpose.msra.mxu0 0.0
  %866 = vmatprep.subr.mxu0 0.0
  %867 = vmatpush1.xpose.msra.mxu0 0.0
  %868 = vmatprep.subr.mxu0 0.0
  %869 = vmatpush1.xpose.msra.mxu0 0.0
  %870 = vmatprep.subr.mxu0 0.0
  %871 = vmatpush1.xpose.msra.mxu0 0.0
  %872 = vmatprep.subr.mxu0 0.0
  %873 = vmatpush1.xpose.msra.mxu0 0.0
  %874 = vmatprep.subr.mxu0 0.0
  %875 = vmatpush1.xpose.msra.mxu0 0.0
  %876 = vmatprep.subr.mxu0 0.0
  %877 = vmatpush1.xpose.msra.mxu0 0.0
  %878 = vmatprep.subr.mxu0 0.0
  %879 = vmatpush1.xpose.msra.mxu0 0.0
  %880 = vmatprep.subr.mxu0 0.0
  %881 = vmatpush1.xpose.msra.mxu0 0.0
  %882 = vmatprep.subr.mxu0 0.0
  %883 = vmatpush1.xpose.msra.mxu0 0.0
  %884 = vmatprep.subr.mxu0 0.0
  %885 = vmatpush1.xpose.msra.mxu0 0.0
  %886 = vmatprep.subr.mxu0 0.0
  %887 = vmatpush1.xpose.msra.mxu0 0.0
  %888 = vmatprep.subr.mxu0 0.0
  %889 = vmatpush1.xpose.msra.mxu0 0.0
  %890 = vmatprep.subr.mxu0 0.0
  %891 = vmatpush1.xpose.msra.mxu0 0.0
  %892 = vmatprep.subr.mxu0 0.0
  %893 = vmatpush1.xpose.msra.mxu0 0.0
  %894 = vmatprep.subr.mxu0 0.0
  %895 = vmatpush1.xpose.msra.mxu0 0.0
  %896 = vmatprep.subr.mxu0 0.0
  %897 = vmatpush1.xpose.msra.mxu0 0.0
  %898 = vmatprep.subr.mxu0 0.0
  %899 = vmatpush1.xpose.msra.mxu0 0.0
  %900 = vmatprep.subr.mxu0 0.0
  %901 = vmatpush1.xpose.msra.mxu0 0.0
  %902 = vmatprep.subr.mxu0 0.0
  %903 = vmatpush1.xpose.msra.mxu0 0.0
  %904 = vmatprep.subr.mxu0 0.0
  %905 = vmatpush1.xpose.msra.mxu0 0.0
  %906 = vmatprep.subr.mxu0 0.0
  %907 = vmatpush1.xpose.msra.mxu0 0.0
  %908 = vmatprep.mubr.f32.mxu0 0.0
  %v909 = vand.u32 %v493, 4294901760
  %910 = vmatmul.mubr.f32.gmra.mrb[0].mxu0 %v909
  %v911 = vpop.f32.mrb[0].mxu0
  %v912 = vadd.f32 %v827, %v911
  %v913 = vpop.f32.mrb[0].mxu0
  %914 = vmatprep.mubr.f32.mxu0 0.0
  %v915 = vand.u32 %v496, 4294901760
  %916 = vmatmul.mubr.f32.gmra.mrb[0].mxu0 %v915
  %v917 = vpop.f32.mrb[0].mxu0
  %v918 = vadd.f32 %v835, %v917
  %v919 = vpop.f32.mrb[0].mxu0
  %920 = vdwg.mxu0
  %921 = vmatprep.subr.mxu0 0.0
  %v922 = vand.u32 %v493, 4294901760
  %923 = vmatpush1.xpose.msra.mxu0 %v922
  %924 = vmatprep.subr.mxu0 0.0
  %v925 = vand.u32 %v496, 4294901760
  %926 = vmatpush1.xpose.msra.mxu0 %v925
  %927 = vmatprep.subr.mxu0 0.0
  %928 = vmatpush1.xpose.msra.mxu0 0.0
  %929 = vmatprep.subr.mxu0 0.0
  %930 = vmatpush1.xpose.msra.mxu0 0.0
  %931 = vmatprep.subr.mxu0 0.0
  %932 = vmatpush1.xpose.msra.mxu0 0.0
  %933 = vmatprep.subr.mxu0 0.0
  %934 = vmatpush1.xpose.msra.mxu0 0.0
  %935 = vmatprep.subr.mxu0 0.0
  %936 = vmatpush1.xpose.msra.mxu0 0.0
  %937 = vmatprep.subr.mxu0 0.0
  %938 = vmatpush1.xpose.msra.mxu0 0.0
  %939 = vmatprep.subr.mxu0 0.0
  %940 = vmatpush1.xpose.msra.mxu0 0.0
  %941 = vmatprep.subr.mxu0 0.0
  %942 = vmatpush1.xpose.msra.mxu0 0.0
  %943 = vmatprep.subr.mxu0 0.0
  %944 = vmatpush1.xpose.msra.mxu0 0.0
  %945 = vmatprep.subr.mxu0 0.0
  %946 = vmatpush1.xpose.msra.mxu0 0.0
  %947 = vmatprep.subr.mxu0 0.0
  %948 = vmatpush1.xpose.msra.mxu0 0.0
  %949 = vmatprep.subr.mxu0 0.0
  %950 = vmatpush1.xpose.msra.mxu0 0.0
  %951 = vmatprep.subr.mxu0 0.0
  %952 = vmatpush1.xpose.msra.mxu0 0.0
  %953 = vmatprep.subr.mxu0 0.0
  %954 = vmatpush1.xpose.msra.mxu0 0.0
  %955 = vmatprep.subr.mxu0 0.0
  %956 = vmatpush1.xpose.msra.mxu0 0.0
  %957 = vmatprep.subr.mxu0 0.0
  %958 = vmatpush1.xpose.msra.mxu0 0.0
  %959 = vmatprep.subr.mxu0 0.0
  %960 = vmatpush1.xpose.msra.mxu0 0.0
  %961 = vmatprep.subr.mxu0 0.0
  %962 = vmatpush1.xpose.msra.mxu0 0.0
  %963 = vmatprep.subr.mxu0 0.0
  %964 = vmatpush1.xpose.msra.mxu0 0.0
  %965 = vmatprep.subr.mxu0 0.0
  %966 = vmatpush1.xpose.msra.mxu0 0.0
  %967 = vmatprep.subr.mxu0 0.0
  %968 = vmatpush1.xpose.msra.mxu0 0.0
  %969 = vmatprep.subr.mxu0 0.0
  %970 = vmatpush1.xpose.msra.mxu0 0.0
  %971 = vmatprep.subr.mxu0 0.0
  %972 = vmatpush1.xpose.msra.mxu0 0.0
  %973 = vmatprep.subr.mxu0 0.0
  %974 = vmatpush1.xpose.msra.mxu0 0.0
  %975 = vmatprep.subr.mxu0 0.0
  %976 = vmatpush1.xpose.msra.mxu0 0.0
  %977 = vmatprep.subr.mxu0 0.0
  %978 = vmatpush1.xpose.msra.mxu0 0.0
  %979 = vmatprep.subr.mxu0 0.0
  %980 = vmatpush1.xpose.msra.mxu0 0.0
  %981 = vmatprep.subr.mxu0 0.0
  %982 = vmatpush1.xpose.msra.mxu0 0.0
  %983 = vmatprep.subr.mxu0 0.0
  %984 = vmatpush1.xpose.msra.mxu0 0.0
  %985 = vmatprep.subr.mxu0 0.0
  %986 = vmatpush1.xpose.msra.mxu0 0.0
  %987 = vmatprep.mubr.f32.mxu0 0.0
  %v988 = vand.u32 %v493, 4294901760
  %989 = vmatmul.mubr.f32.gmra.mrb[0].mxu0 %v988
  %v990 = vpop.f32.mrb[0].mxu0
  %v991 = vadd.f32 %v912, %v990
  %v992 = vpop.f32.mrb[0].mxu0
  %993 = vmatprep.mubr.f32.mxu0 0.0
  %v994 = vand.u32 %v496, 4294901760
  %995 = vmatmul.mubr.f32.gmra.mrb[0].mxu0 %v994
  %v996 = vpop.f32.mrb[0].mxu0
  %v997 = vadd.f32 %v918, %v996
  %v998 = vpop.f32.mrb[0].mxu0
  %999 = vdwg.mxu0
  %v1000 = vlaneseq
  %v1001 = vshrl.u32 %v1000, 7
  %v1002 = vsub.s32 0, %v1001
  %v1003 = vrot.slane %v489, %v1002
  %v1004 = vadd.f32 %v20, %v1003
  %v1005 = vadd.f32 %v23, %v1003
  %v1006 = vmul.f32 %v991, 2.0
  %v1007 = vmul.f32 %v997, 2.0
  %v1008 = vsub.f32 %v1004, %v1006
  %v1009 = vsub.f32 %v1005, %v1007
  %v1010 = vmax.f32 %v1008, 0.0
  %v1011 = vmax.f32 %v1009, 0.0
  %v1012 = vmul.f32 %v1010, -0.5
  %v1013 = vmul.f32 %v1011, -0.5
  %v1014 = vmul.f32 %v1012, 1.442695
  %v1015 = vpow.pop %v1014
  %v1016 = vmul.f32 %v1013, 1.442695
  %v1017 = vpow.pop %v1016
  %v1018 = vlaneseq
  %v1019 = vshrl.u32 %v1018, 7
  %v1020 = vadd.s32 %v1019, 8
  %v1021 = vlaneseq
  %v1022 = vand.u32 %v1021, 127
  %vm1023 = vcmp.eq.s32.totalorder %v1019, %v1022
  %vm1024 = vcmp.eq.s32.totalorder %v1020, %v1022
  %v1025 = vsel %vm1023, 1, 0
  %v1026 = vsel %vm1024, 1, 0
  %v1027 = vcvt.s32.f32 %v1025
  %v1028 = vcvt.s32.f32 %v1026
  %v1029 = vmul.f32 %v1027, 0.0001
  %v1030 = vmul.f32 %v1028, 0.0001
  %v1031 = vadd.f32 %v1015, %v1029
  %v1032 = vadd.f32 %v1017, %v1030
  %vm1033 = vcmask 130048
  %1034 = vst.msk [vmem:[%s2] sm:$0xff] %vm1033, %v1031
  %1035 = vst.msk [vmem:[%s2 + $0x8] sm:$0xff] %vm1033, %v1032
  %v1036 = vld [vmem:[%s1] sm:$0xff]
  %v1037 = vld [vmem:[%s1 + $0x8] sm:$0xff]
  %v1039 = vsel %vm1033, %v1036, 0
  %v1042 = vsel %vm1033, %v1037, 0
  %1044 = vmatprep.subr.mxu0 0.0
  %v1045 = vand.u32 %v1039, 4294901760
  %1046 = vmatpush1.xpose.msra.mxu0 %v1045
  %1047 = vmatprep.subr.mxu0 0.0
  %v1048 = vand.u32 %v1042, 4294901760
  %1049 = vmatpush1.xpose.msra.mxu0 %v1048
  %1050 = vmatprep.subr.mxu0 0.0
  %1051 = vmatpush1.xpose.msra.mxu0 0.0
  %1052 = vmatprep.subr.mxu0 0.0
  %1053 = vmatpush1.xpose.msra.mxu0 0.0
  %1054 = vmatprep.subr.mxu0 0.0
  %1055 = vmatpush1.xpose.msra.mxu0 0.0
  %1056 = vmatprep.subr.mxu0 0.0
  %1057 = vmatpush1.xpose.msra.mxu0 0.0
  %1058 = vmatprep.subr.mxu0 0.0
  %1059 = vmatpush1.xpose.msra.mxu0 0.0
  %1060 = vmatprep.subr.mxu0 0.0
  %1061 = vmatpush1.xpose.msra.mxu0 0.0
  %1062 = vmatprep.subr.mxu0 0.0
  %1063 = vmatpush1.xpose.msra.mxu0 0.0
  %1064 = vmatprep.subr.mxu0 0.0
  %1065 = vmatpush1.xpose.msra.mxu0 0.0
  %1066 = vmatprep.subr.mxu0 0.0
  %1067 = vmatpush1.xpose.msra.mxu0 0.0
  %1068 = vmatprep.subr.mxu0 0.0
  %1069 = vmatpush1.xpose.msra.mxu0 0.0
  %1070 = vmatprep.subr.mxu0 0.0
  %1071 = vmatpush1.xpose.msra.mxu0 0.0
  %1072 = vmatprep.subr.mxu0 0.0
  %1073 = vmatpush1.xpose.msra.mxu0 0.0
  %1074 = vmatprep.subr.mxu0 0.0
  %1075 = vmatpush1.xpose.msra.mxu0 0.0
  %1076 = vmatprep.subr.mxu0 0.0
  %1077 = vmatpush1.xpose.msra.mxu0 0.0
  %1078 = vmatprep.subr.mxu0 0.0
  %1079 = vmatpush1.xpose.msra.mxu0 0.0
  %1080 = vmatprep.subr.mxu0 0.0
  %1081 = vmatpush1.xpose.msra.mxu0 0.0
  %1082 = vmatprep.subr.mxu0 0.0
  %1083 = vmatpush1.xpose.msra.mxu0 0.0
  %1084 = vmatprep.subr.mxu0 0.0
  %1085 = vmatpush1.xpose.msra.mxu0 0.0
  %1086 = vmatprep.subr.mxu0 0.0
  %1087 = vmatpush1.xpose.msra.mxu0 0.0
  %1088 = vmatprep.subr.mxu0 0.0
  %1089 = vmatpush1.xpose.msra.mxu0 0.0
  %1090 = vmatprep.subr.mxu0 0.0
  %1091 = vmatpush1.xpose.msra.mxu0 0.0
  %1092 = vmatprep.subr.mxu0 0.0
  %1093 = vmatpush1.xpose.msra.mxu0 0.0
  %1094 = vmatprep.subr.mxu0 0.0
  %1095 = vmatpush1.xpose.msra.mxu0 0.0
  %1096 = vmatprep.subr.mxu0 0.0
  %1097 = vmatpush1.xpose.msra.mxu0 0.0
  %1098 = vmatprep.subr.mxu0 0.0
  %1099 = vmatpush1.xpose.msra.mxu0 0.0
  %1100 = vmatprep.subr.mxu0 0.0
  %1101 = vmatpush1.xpose.msra.mxu0 0.0
  %1102 = vmatprep.subr.mxu0 0.0
  %1103 = vmatpush1.xpose.msra.mxu0 0.0
  %1104 = vmatprep.subr.mxu0 0.0
  %1105 = vmatpush1.xpose.msra.mxu0 0.0
  %1106 = vmatprep.subr.mxu0 0.0
  %1107 = vmatpush1.xpose.msra.mxu0 0.0
  %1108 = vmatprep.subr.mxu0 0.0
  %1109 = vmatpush1.xpose.msra.mxu0 0.0
  %1110 = vmatprep.mubr.f32.mxu0 0.0
  %v1111 = vand.u32 %v1039, 4294901760
  %v1112 = vsub.f32 %v1039, %v1111
  %v1113 = vand.u32 %v1112, 4294901760
  %v1114 = vsub.f32 %v1112, %v1113
  %v1115 = vand.u32 %v1114, 4294901760
  %1116 = vmatmul.mubr.f32.gmra.mrb[0].mxu0 %v1115
  %v1117 = vpop.f32.mrb[0].mxu0
  %v1118 = vadd.f32 0.0, %v1117
  %v1119 = vpop.f32.mrb[0].mxu0
  %1120 = vmatprep.mubr.f32.mxu0 0.0
  %v1121 = vand.u32 %v1042, 4294901760
  %v1122 = vsub.f32 %v1042, %v1121
  %v1123 = vand.u32 %v1122, 4294901760
  %v1124 = vsub.f32 %v1122, %v1123
  %v1125 = vand.u32 %v1124, 4294901760
  %1126 = vmatmul.mubr.f32.gmra.mrb[0].mxu0 %v1125
  %v1127 = vpop.f32.mrb[0].mxu0
  %v1128 = vadd.f32 0.0, %v1127
  %v1129 = vpop.f32.mrb[0].mxu0
  %1130 = vdwg.mxu0
  %1131 = vmatprep.subr.mxu0 0.0
  %v1132 = vand.u32 %v1039, 4294901760
  %v1133 = vsub.f32 %v1039, %v1132
  %v1134 = vand.u32 %v1133, 4294901760
  %v1135 = vsub.f32 %v1133, %v1134
  %v1136 = vand.u32 %v1135, 4294901760
  %1137 = vmatpush1.xpose.msra.mxu0 %v1136
  %1138 = vmatprep.subr.mxu0 0.0
  %v1139 = vand.u32 %v1042, 4294901760
  %v1140 = vsub.f32 %v1042, %v1139
  %v1141 = vand.u32 %v1140, 4294901760
  %v1142 = vsub.f32 %v1140, %v1141
  %v1143 = vand.u32 %v1142, 4294901760
  %1144 = vmatpush1.xpose.msra.mxu0 %v1143
  %1145 = vmatprep.subr.mxu0 0.0
  %1146 = vmatpush1.xpose.msra.mxu0 0.0
  %1147 = vmatprep.subr.mxu0 0.0
  %1148 = vmatpush1.xpose.msra.mxu0 0.0
  %1149 = vmatprep.subr.mxu0 0.0
  %1150 = vmatpush1.xpose.msra.mxu0 0.0
  %1151 = vmatprep.subr.mxu0 0.0
  %1152 = vmatpush1.xpose.msra.mxu0 0.0
  %1153 = vmatprep.subr.mxu0 0.0
  %1154 = vmatpush1.xpose.msra.mxu0 0.0
  %1155 = vmatprep.subr.mxu0 0.0
  %1156 = vmatpush1.xpose.msra.mxu0 0.0
  %1157 = vmatprep.subr.mxu0 0.0
  %1158 = vmatpush1.xpose.msra.mxu0 0.0
  %1159 = vmatprep.subr.mxu0 0.0
  %1160 = vmatpush1.xpose.msra.mxu0 0.0
  %1161 = vmatprep.subr.mxu0 0.0
  %1162 = vmatpush1.xpose.msra.mxu0 0.0
  %1163 = vmatprep.subr.mxu0 0.0
  %1164 = vmatpush1.xpose.msra.mxu0 0.0
  %1165 = vmatprep.subr.mxu0 0.0
  %1166 = vmatpush1.xpose.msra.mxu0 0.0
  %1167 = vmatprep.subr.mxu0 0.0
  %1168 = vmatpush1.xpose.msra.mxu0 0.0
  %1169 = vmatprep.subr.mxu0 0.0
  %1170 = vmatpush1.xpose.msra.mxu0 0.0
  %1171 = vmatprep.subr.mxu0 0.0
  %1172 = vmatpush1.xpose.msra.mxu0 0.0
  %1173 = vmatprep.subr.mxu0 0.0
  %1174 = vmatpush1.xpose.msra.mxu0 0.0
  %1175 = vmatprep.subr.mxu0 0.0
  %1176 = vmatpush1.xpose.msra.mxu0 0.0
  %1177 = vmatprep.subr.mxu0 0.0
  %1178 = vmatpush1.xpose.msra.mxu0 0.0
  %1179 = vmatprep.subr.mxu0 0.0
  %1180 = vmatpush1.xpose.msra.mxu0 0.0
  %1181 = vmatprep.subr.mxu0 0.0
  %1182 = vmatpush1.xpose.msra.mxu0 0.0
  %1183 = vmatprep.subr.mxu0 0.0
  %1184 = vmatpush1.xpose.msra.mxu0 0.0
  %1185 = vmatprep.subr.mxu0 0.0
  %1186 = vmatpush1.xpose.msra.mxu0 0.0
  %1187 = vmatprep.subr.mxu0 0.0
  %1188 = vmatpush1.xpose.msra.mxu0 0.0
  %1189 = vmatprep.subr.mxu0 0.0
  %1190 = vmatpush1.xpose.msra.mxu0 0.0
  %1191 = vmatprep.subr.mxu0 0.0
  %1192 = vmatpush1.xpose.msra.mxu0 0.0
  %1193 = vmatprep.subr.mxu0 0.0
  %1194 = vmatpush1.xpose.msra.mxu0 0.0
  %1195 = vmatprep.subr.mxu0 0.0
  %1196 = vmatpush1.xpose.msra.mxu0 0.0
  %1197 = vmatprep.subr.mxu0 0.0
  %1198 = vmatpush1.xpose.msra.mxu0 0.0
  %1199 = vmatprep.subr.mxu0 0.0
  %1200 = vmatpush1.xpose.msra.mxu0 0.0
  %1201 = vmatprep.subr.mxu0 0.0
  %1202 = vmatpush1.xpose.msra.mxu0 0.0
  %1203 = vmatprep.subr.mxu0 0.0
  %1204 = vmatpush1.xpose.msra.mxu0 0.0
  %1205 = vmatprep.mubr.f32.mxu0 0.0
  %v1206 = vand.u32 %v1039, 4294901760
  %1207 = vmatmul.mubr.f32.gmra.mrb[0].mxu0 %v1206
  %v1208 = vpop.f32.mrb[0].mxu0
  %v1209 = vadd.f32 %v1118, %v1208
  %v1210 = vpop.f32.mrb[0].mxu0
  %1211 = vmatprep.mubr.f32.mxu0 0.0
  %v1212 = vand.u32 %v1042, 4294901760
  %1213 = vmatmul.mubr.f32.gmra.mrb[0].mxu0 %v1212
  %v1214 = vpop.f32.mrb[0].mxu0
  %v1215 = vadd.f32 %v1128, %v1214
  %v1216 = vpop.f32.mrb[0].mxu0
  %1217 = vdwg.mxu0
  %1218 = vmatprep.subr.mxu0 0.0
  %v1219 = vand.u32 %v1039, 4294901760
  %v1220 = vsub.f32 %v1039, %v1219
  %1221 = vmatpush1.xpose.msra.mxu0 %v1220
  %1222 = vmatprep.subr.mxu0 0.0
  %v1223 = vand.u32 %v1042, 4294901760
  %v1224 = vsub.f32 %v1042, %v1223
  %1225 = vmatpush1.xpose.msra.mxu0 %v1224
  %1226 = vmatprep.subr.mxu0 0.0
  %1227 = vmatpush1.xpose.msra.mxu0 0.0
  %1228 = vmatprep.subr.mxu0 0.0
  %1229 = vmatpush1.xpose.msra.mxu0 0.0
  %1230 = vmatprep.subr.mxu0 0.0
  %1231 = vmatpush1.xpose.msra.mxu0 0.0
  %1232 = vmatprep.subr.mxu0 0.0
  %1233 = vmatpush1.xpose.msra.mxu0 0.0
  %1234 = vmatprep.subr.mxu0 0.0
  %1235 = vmatpush1.xpose.msra.mxu0 0.0
  %1236 = vmatprep.subr.mxu0 0.0
  %1237 = vmatpush1.xpose.msra.mxu0 0.0
  %1238 = vmatprep.subr.mxu0 0.0
  %1239 = vmatpush1.xpose.msra.mxu0 0.0
  %1240 = vmatprep.subr.mxu0 0.0
  %1241 = vmatpush1.xpose.msra.mxu0 0.0
  %1242 = vmatprep.subr.mxu0 0.0
  %1243 = vmatpush1.xpose.msra.mxu0 0.0
  %1244 = vmatprep.subr.mxu0 0.0
  %1245 = vmatpush1.xpose.msra.mxu0 0.0
  %1246 = vmatprep.subr.mxu0 0.0
  %1247 = vmatpush1.xpose.msra.mxu0 0.0
  %1248 = vmatprep.subr.mxu0 0.0
  %1249 = vmatpush1.xpose.msra.mxu0 0.0
  %1250 = vmatprep.subr.mxu0 0.0
  %1251 = vmatpush1.xpose.msra.mxu0 0.0
  %1252 = vmatprep.subr.mxu0 0.0
  %1253 = vmatpush1.xpose.msra.mxu0 0.0
  %1254 = vmatprep.subr.mxu0 0.0
  %1255 = vmatpush1.xpose.msra.mxu0 0.0
  %1256 = vmatprep.subr.mxu0 0.0
  %1257 = vmatpush1.xpose.msra.mxu0 0.0
  %1258 = vmatprep.subr.mxu0 0.0
  %1259 = vmatpush1.xpose.msra.mxu0 0.0
  %1260 = vmatprep.subr.mxu0 0.0
  %1261 = vmatpush1.xpose.msra.mxu0 0.0
  %1262 = vmatprep.subr.mxu0 0.0
  %1263 = vmatpush1.xpose.msra.mxu0 0.0
  %1264 = vmatprep.subr.mxu0 0.0
  %1265 = vmatpush1.xpose.msra.mxu0 0.0
  %1266 = vmatprep.subr.mxu0 0.0
  %1267 = vmatpush1.xpose.msra.mxu0 0.0
  %1268 = vmatprep.subr.mxu0 0.0
  %1269 = vmatpush1.xpose.msra.mxu0 0.0
  %1270 = vmatprep.subr.mxu0 0.0
  %1271 = vmatpush1.xpose.msra.mxu0 0.0
  %1272 = vmatprep.subr.mxu0 0.0
  %1273 = vmatpush1.xpose.msra.mxu0 0.0
  %1274 = vmatprep.subr.mxu0 0.0
  %1275 = vmatpush1.xpose.msra.mxu0 0.0
  %1276 = vmatprep.subr.mxu0 0.0
  %1277 = vmatpush1.xpose.msra.mxu0 0.0
  %1278 = vmatprep.subr.mxu0 0.0
  %1279 = vmatpush1.xpose.msra.mxu0 0.0
  %1280 = vmatprep.subr.mxu0 0.0
  %1281 = vmatpush1.xpose.msra.mxu0 0.0
  %1282 = vmatprep.subr.mxu0 0.0
  %1283 = vmatpush1.xpose.msra.mxu0 0.0
  %1284 = vmatprep.subr.mxu0 0.0
  %1285 = vmatpush1.xpose.msra.mxu0 0.0
  %1286 = vmatprep.mubr.f32.mxu0 0.0
  %v1287 = vand.u32 %v1039, 4294901760
  %v1288 = vsub.f32 %v1039, %v1287
  %1289 = vmatmul.mubr.f32.gmra.mrb[0].mxu0 %v1288
  %v1290 = vpop.f32.mrb[0].mxu0
  %v1291 = vadd.f32 %v1209, %v1290
  %v1292 = vpop.f32.mrb[0].mxu0
  %1293 = vmatprep.mubr.f32.mxu0 0.0
  %v1294 = vand.u32 %v1042, 4294901760
  %v1295 = vsub.f32 %v1042, %v1294
  %1296 = vmatmul.mubr.f32.gmra.mrb[0].mxu0 %v1295
  %v1297 = vpop.f32.mrb[0].mxu0
  %v1298 = vadd.f32 %v1215, %v1297
  %v1299 = vpop.f32.mrb[0].mxu0
  %1300 = vdwg.mxu0
  %1301 = vmatprep.subr.mxu0 0.0
  %v1302 = vand.u32 %v1039, 4294901760
  %1303 = vmatpush1.xpose.msra.mxu0 %v1302
  %1304 = vmatprep.subr.mxu0 0.0
  %v1305 = vand.u32 %v1042, 4294901760
  %1306 = vmatpush1.xpose.msra.mxu0 %v1305
  %1307 = vmatprep.subr.mxu0 0.0
  %1308 = vmatpush1.xpose.msra.mxu0 0.0
  %1309 = vmatprep.subr.mxu0 0.0
  %1310 = vmatpush1.xpose.msra.mxu0 0.0
  %1311 = vmatprep.subr.mxu0 0.0
  %1312 = vmatpush1.xpose.msra.mxu0 0.0
  %1313 = vmatprep.subr.mxu0 0.0
  %1314 = vmatpush1.xpose.msra.mxu0 0.0
  %1315 = vmatprep.subr.mxu0 0.0
  %1316 = vmatpush1.xpose.msra.mxu0 0.0
  %1317 = vmatprep.subr.mxu0 0.0
  %1318 = vmatpush1.xpose.msra.mxu0 0.0
  %1319 = vmatprep.subr.mxu0 0.0
  %1320 = vmatpush1.xpose.msra.mxu0 0.0
  %1321 = vmatprep.subr.mxu0 0.0
  %1322 = vmatpush1.xpose.msra.mxu0 0.0
  %1323 = vmatprep.subr.mxu0 0.0
  %1324 = vmatpush1.xpose.msra.mxu0 0.0
  %1325 = vmatprep.subr.mxu0 0.0
  %1326 = vmatpush1.xpose.msra.mxu0 0.0
  %1327 = vmatprep.subr.mxu0 0.0
  %1328 = vmatpush1.xpose.msra.mxu0 0.0
  %1329 = vmatprep.subr.mxu0 0.0
  %1330 = vmatpush1.xpose.msra.mxu0 0.0
  %1331 = vmatprep.subr.mxu0 0.0
  %1332 = vmatpush1.xpose.msra.mxu0 0.0
  %1333 = vmatprep.subr.mxu0 0.0
  %1334 = vmatpush1.xpose.msra.mxu0 0.0
  %1335 = vmatprep.subr.mxu0 0.0
  %1336 = vmatpush1.xpose.msra.mxu0 0.0
  %1337 = vmatprep.subr.mxu0 0.0
  %1338 = vmatpush1.xpose.msra.mxu0 0.0
  %1339 = vmatprep.subr.mxu0 0.0
  %1340 = vmatpush1.xpose.msra.mxu0 0.0
  %1341 = vmatprep.subr.mxu0 0.0
  %1342 = vmatpush1.xpose.msra.mxu0 0.0
  %1343 = vmatprep.subr.mxu0 0.0
  %1344 = vmatpush1.xpose.msra.mxu0 0.0
  %1345 = vmatprep.subr.mxu0 0.0
  %1346 = vmatpush1.xpose.msra.mxu0 0.0
  %1347 = vmatprep.subr.mxu0 0.0
  %1348 = vmatpush1.xpose.msra.mxu0 0.0
  %1349 = vmatprep.subr.mxu0 0.0
  %1350 = vmatpush1.xpose.msra.mxu0 0.0
  %1351 = vmatprep.subr.mxu0 0.0
  %1352 = vmatpush1.xpose.msra.mxu0 0.0
  %1353 = vmatprep.subr.mxu0 0.0
  %1354 = vmatpush1.xpose.msra.mxu0 0.0
  %1355 = vmatprep.subr.mxu0 0.0
  %1356 = vmatpush1.xpose.msra.mxu0 0.0
  %1357 = vmatprep.subr.mxu0 0.0
  %1358 = vmatpush1.xpose.msra.mxu0 0.0
  %1359 = vmatprep.subr.mxu0 0.0
  %1360 = vmatpush1.xpose.msra.mxu0 0.0
  %1361 = vmatprep.subr.mxu0 0.0
  %1362 = vmatpush1.xpose.msra.mxu0 0.0
  %1363 = vmatprep.subr.mxu0 0.0
  %1364 = vmatpush1.xpose.msra.mxu0 0.0
  %1365 = vmatprep.subr.mxu0 0.0
  %1366 = vmatpush1.xpose.msra.mxu0 0.0
  %1367 = vmatprep.mubr.f32.mxu0 0.0
  %v1368 = vand.u32 %v1039, 4294901760
  %v1369 = vsub.f32 %v1039, %v1368
  %v1370 = vand.u32 %v1369, 4294901760
  %1371 = vmatmul.mubr.f32.gmra.mrb[0].mxu0 %v1370
  %v1372 = vpop.f32.mrb[0].mxu0
  %v1373 = vadd.f32 %v1291, %v1372
  %v1374 = vpop.f32.mrb[0].mxu0
  %1375 = vmatprep.mubr.f32.mxu0 0.0
  %v1376 = vand.u32 %v1042, 4294901760
  %v1377 = vsub.f32 %v1042, %v1376
  %v1378 = vand.u32 %v1377, 4294901760
  %1379 = vmatmul.mubr.f32.gmra.mrb[0].mxu0 %v1378
  %v1380 = vpop.f32.mrb[0].mxu0
  %v1381 = vadd.f32 %v1298, %v1380
  %v1382 = vpop.f32.mrb[0].mxu0
  %1383 = vdwg.mxu0
  %1384 = vmatprep.subr.mxu0 0.0
  %v1385 = vand.u32 %v1039, 4294901760
  %v1386 = vsub.f32 %v1039, %v1385
  %v1387 = vand.u32 %v1386, 4294901760
  %1388 = vmatpush1.xpose.msra.mxu0 %v1387
  %1389 = vmatprep.subr.mxu0 0.0
  %v1390 = vand.u32 %v1042, 4294901760
  %v1391 = vsub.f32 %v1042, %v1390
  %v1392 = vand.u32 %v1391, 4294901760
  %1393 = vmatpush1.xpose.msra.mxu0 %v1392
  %1394 = vmatprep.subr.mxu0 0.0
  %1395 = vmatpush1.xpose.msra.mxu0 0.0
  %1396 = vmatprep.subr.mxu0 0.0
  %1397 = vmatpush1.xpose.msra.mxu0 0.0
  %1398 = vmatprep.subr.mxu0 0.0
  %1399 = vmatpush1.xpose.msra.mxu0 0.0
  %1400 = vmatprep.subr.mxu0 0.0
  %1401 = vmatpush1.xpose.msra.mxu0 0.0
  %1402 = vmatprep.subr.mxu0 0.0
  %1403 = vmatpush1.xpose.msra.mxu0 0.0
  %1404 = vmatprep.subr.mxu0 0.0
  %1405 = vmatpush1.xpose.msra.mxu0 0.0
  %1406 = vmatprep.subr.mxu0 0.0
  %1407 = vmatpush1.xpose.msra.mxu0 0.0
  %1408 = vmatprep.subr.mxu0 0.0
  %1409 = vmatpush1.xpose.msra.mxu0 0.0
  %1410 = vmatprep.subr.mxu0 0.0
  %1411 = vmatpush1.xpose.msra.mxu0 0.0
  %1412 = vmatprep.subr.mxu0 0.0
  %1413 = vmatpush1.xpose.msra.mxu0 0.0
  %1414 = vmatprep.subr.mxu0 0.0
  %1415 = vmatpush1.xpose.msra.mxu0 0.0
  %1416 = vmatprep.subr.mxu0 0.0
  %1417 = vmatpush1.xpose.msra.mxu0 0.0
  %1418 = vmatprep.subr.mxu0 0.0
  %1419 = vmatpush1.xpose.msra.mxu0 0.0
  %1420 = vmatprep.subr.mxu0 0.0
  %1421 = vmatpush1.xpose.msra.mxu0 0.0
  %1422 = vmatprep.subr.mxu0 0.0
  %1423 = vmatpush1.xpose.msra.mxu0 0.0
  %1424 = vmatprep.subr.mxu0 0.0
  %1425 = vmatpush1.xpose.msra.mxu0 0.0
  %1426 = vmatprep.subr.mxu0 0.0
  %1427 = vmatpush1.xpose.msra.mxu0 0.0
  %1428 = vmatprep.subr.mxu0 0.0
  %1429 = vmatpush1.xpose.msra.mxu0 0.0
  %1430 = vmatprep.subr.mxu0 0.0
  %1431 = vmatpush1.xpose.msra.mxu0 0.0
  %1432 = vmatprep.subr.mxu0 0.0
  %1433 = vmatpush1.xpose.msra.mxu0 0.0
  %1434 = vmatprep.subr.mxu0 0.0
  %1435 = vmatpush1.xpose.msra.mxu0 0.0
  %1436 = vmatprep.subr.mxu0 0.0
  %1437 = vmatpush1.xpose.msra.mxu0 0.0
  %1438 = vmatprep.subr.mxu0 0.0
  %1439 = vmatpush1.xpose.msra.mxu0 0.0
  %1440 = vmatprep.subr.mxu0 0.0
  %1441 = vmatpush1.xpose.msra.mxu0 0.0
  %1442 = vmatprep.subr.mxu0 0.0
  %1443 = vmatpush1.xpose.msra.mxu0 0.0
  %1444 = vmatprep.subr.mxu0 0.0
  %1445 = vmatpush1.xpose.msra.mxu0 0.0
  %1446 = vmatprep.subr.mxu0 0.0
  %1447 = vmatpush1.xpose.msra.mxu0 0.0
  %1448 = vmatprep.subr.mxu0 0.0
  %1449 = vmatpush1.xpose.msra.mxu0 0.0
  %1450 = vmatprep.subr.mxu0 0.0
  %1451 = vmatpush1.xpose.msra.mxu0 0.0
  %1452 = vmatprep.subr.mxu0 0.0
  %1453 = vmatpush1.xpose.msra.mxu0 0.0
  %1454 = vmatprep.mubr.f32.mxu0 0.0
  %v1455 = vand.u32 %v1039, 4294901760
  %1456 = vmatmul.mubr.f32.gmra.mrb[0].mxu0 %v1455
  %v1457 = vpop.f32.mrb[0].mxu0
  %v1458 = vadd.f32 %v1373, %v1457
  %v1459 = vpop.f32.mrb[0].mxu0
  %1460 = vmatprep.mubr.f32.mxu0 0.0
  %v1461 = vand.u32 %v1042, 4294901760
  %1462 = vmatmul.mubr.f32.gmra.mrb[0].mxu0 %v1461
  %v1463 = vpop.f32.mrb[0].mxu0
  %v1464 = vadd.f32 %v1381, %v1463
  %v1465 = vpop.f32.mrb[0].mxu0
  %1466 = vdwg.mxu0
  %1467 = vmatprep.subr.mxu0 0.0
  %v1468 = vand.u32 %v1039, 4294901760
  %1469 = vmatpush1.xpose.msra.mxu0 %v1468
  %1470 = vmatprep.subr.mxu0 0.0
  %v1471 = vand.u32 %v1042, 4294901760
  %1472 = vmatpush1.xpose.msra.mxu0 %v1471
  %1473 = vmatprep.subr.mxu0 0.0
  %1474 = vmatpush1.xpose.msra.mxu0 0.0
  %1475 = vmatprep.subr.mxu0 0.0
  %1476 = vmatpush1.xpose.msra.mxu0 0.0
  %1477 = vmatprep.subr.mxu0 0.0
  %1478 = vmatpush1.xpose.msra.mxu0 0.0
  %1479 = vmatprep.subr.mxu0 0.0
  %1480 = vmatpush1.xpose.msra.mxu0 0.0
  %1481 = vmatprep.subr.mxu0 0.0
  %1482 = vmatpush1.xpose.msra.mxu0 0.0
  %1483 = vmatprep.subr.mxu0 0.0
  %1484 = vmatpush1.xpose.msra.mxu0 0.0
  %1485 = vmatprep.subr.mxu0 0.0
  %1486 = vmatpush1.xpose.msra.mxu0 0.0
  %1487 = vmatprep.subr.mxu0 0.0
  %1488 = vmatpush1.xpose.msra.mxu0 0.0
  %1489 = vmatprep.subr.mxu0 0.0
  %1490 = vmatpush1.xpose.msra.mxu0 0.0
  %1491 = vmatprep.subr.mxu0 0.0
  %1492 = vmatpush1.xpose.msra.mxu0 0.0
  %1493 = vmatprep.subr.mxu0 0.0
  %1494 = vmatpush1.xpose.msra.mxu0 0.0
  %1495 = vmatprep.subr.mxu0 0.0
  %1496 = vmatpush1.xpose.msra.mxu0 0.0
  %1497 = vmatprep.subr.mxu0 0.0
  %1498 = vmatpush1.xpose.msra.mxu0 0.0
  %1499 = vmatprep.subr.mxu0 0.0
  %1500 = vmatpush1.xpose.msra.mxu0 0.0
  %1501 = vmatprep.subr.mxu0 0.0
  %1502 = vmatpush1.xpose.msra.mxu0 0.0
  %1503 = vmatprep.subr.mxu0 0.0
  %1504 = vmatpush1.xpose.msra.mxu0 0.0
  %1505 = vmatprep.subr.mxu0 0.0
  %1506 = vmatpush1.xpose.msra.mxu0 0.0
  %1507 = vmatprep.subr.mxu0 0.0
  %1508 = vmatpush1.xpose.msra.mxu0 0.0
  %1509 = vmatprep.subr.mxu0 0.0
  %1510 = vmatpush1.xpose.msra.mxu0 0.0
  %1511 = vmatprep.subr.mxu0 0.0
  %1512 = vmatpush1.xpose.msra.mxu0 0.0
  %1513 = vmatprep.subr.mxu0 0.0
  %1514 = vmatpush1.xpose.msra.mxu0 0.0
  %1515 = vmatprep.subr.mxu0 0.0
  %1516 = vmatpush1.xpose.msra.mxu0 0.0
  %1517 = vmatprep.subr.mxu0 0.0
  %1518 = vmatpush1.xpose.msra.mxu0 0.0
  %1519 = vmatprep.subr.mxu0 0.0
  %1520 = vmatpush1.xpose.msra.mxu0 0.0
  %1521 = vmatprep.subr.mxu0 0.0
  %1522 = vmatpush1.xpose.msra.mxu0 0.0
  %1523 = vmatprep.subr.mxu0 0.0
  %1524 = vmatpush1.xpose.msra.mxu0 0.0
  %1525 = vmatprep.subr.mxu0 0.0
  %1526 = vmatpush1.xpose.msra.mxu0 0.0
  %1527 = vmatprep.subr.mxu0 0.0
  %1528 = vmatpush1.xpose.msra.mxu0 0.0
  %1529 = vmatprep.subr.mxu0 0.0
  %1530 = vmatpush1.xpose.msra.mxu0 0.0
  %1531 = vmatprep.subr.mxu0 0.0
  %1532 = vmatpush1.xpose.msra.mxu0 0.0
  %1533 = vmatprep.mubr.f32.mxu0 0.0
  %v1534 = vand.u32 %v1039, 4294901760
  %1535 = vmatmul.mubr.f32.gmra.mrb[0].mxu0 %v1534
  %v1536 = vpop.f32.mrb[0].mxu0
  %v1537 = vadd.f32 %v1458, %v1536
  %v1538 = vpop.f32.mrb[0].mxu0
  %1539 = vmatprep.mubr.f32.mxu0 0.0
  %v1540 = vand.u32 %v1042, 4294901760
  %1541 = vmatmul.mubr.f32.gmra.mrb[0].mxu0 %v1540
  %v1542 = vpop.f32.mrb[0].mxu0
  %v1543 = vadd.f32 %v1464, %v1542
  %v1544 = vpop.f32.mrb[0].mxu0
  %1545 = vdwg.mxu0
  %v1546 = vsub.f32 %v1537, %v1015
  %v1547 = vsub.f32 %v1543, %v1017
  %1548 = vst.msk [vmem:[%s3] sm:$0xff] %vm1033, %v1546
  %1549 = vst.msk [vmem:[%s3 + $0x8] sm:$0xff] %vm1033, %v1547
  // Predicated region
  $region10: #{svgp_forward.2} parent=0 // pred_check
    _
  $region11: #{svgp_forward.2} parent=0 // pred_check_branch
    %1551 = sbr.rel (0) target = $region13
  $region12: #{svgp_forward.2} parent=0 // pred_region
    _
  $region13: #{svgp_forward.2} parent=0 // pred_fallthru
    _
  // Predicated region
  $region14: #{svgp_forward.2} parent=0 // pred_check
    _
  $region15: #{svgp_forward.2} parent=0 // pred_check_branch
    %1553 = sbr.rel (0) target = $region17
  $region16: #{svgp_forward.2} parent=0 // pred_region
    _
  $region17: #{svgp_forward.2} parent=0 // pred_fallthru
    _
  // Predicated region
  $region18: #{svgp_forward.2} parent=0 // pred_check
    _
  $region19: #{svgp_forward.2} parent=0 // pred_check_branch
    %1555 = sbr.rel (0) target = $region21
  $region20: #{svgp_forward.2} parent=0 // pred_region
    _
  $region21: #{svgp_forward.2} parent=0 // pred_fallthru
    _
  // Predicated region
  $region22: #{svgp_forward.2} parent=0 // pred_check
    _
  $region23: #{svgp_forward.2} parent=0 // pred_check_branch
    %1557 = sbr.rel (0) target = $region25
  $region24: #{svgp_forward.2} parent=0 // pred_region
    _
  $region25: #{svgp_forward.2} parent=0 // pred_fallthru
    _

// kernel: svgp_forward.3
$region0: #{svgp_forward.3}
  #allocation0 [shape = 'u32[]', space=smem, size = 0x4, offset = 0x4, fixed_abs, tag = 'smem constant byte address 0x4 - core index']
  #allocation1 [shape = 'u32[144,128]{1,0:T(1,128)}', space=vmem, size = 0x12000, scoped, tag = 'internal scratch']
  %s0 = inlined_call_operand.vmem [shape: f32[16,4], index: 0, kind: input, shape index: {}]
  %s1 = inlined_call_operand.vmem [shape: f32[4,1024], index: 1, kind: input, shape index: {}]
  %s2 = inlined_call_operand.vmem [shape: f32[17,16], index: 2, kind: input, shape index: {}]
  %s3 = inlined_call_operand.vmem [shape: f32[2,1024], index: 3, kind: output, shape index: {}]
  %s4 = sld [smem:[#allocation0]]
  $region45: #{svgp_forward.3} parent=0
    _
  %s6 = ssub.s32 1, %s4
  %s7 = scalar_select 0, %s6, %s4
  loop: start=0, step=1, limit=4
  $region2: #{svgp_forward.3} parent=0 // loop_pre_header
    _
  $region3: #{svgp_forward.3} parent=0 // loop_header
    %s9 = sphi 0, %s13
    %p10 = scmp.ge.s32.totalorder %s9, 4
    %s17 = sphi 0, %s17
    %s19 = sphi 0, %s17
    %s20 = sphi 0, %s19
    %s34 = sphi 0, %s20
    %s40 = sphi 0, %s42
    %s43 = sphi 0, %s40
    %s44 = sphi 0, %s43
    %s60 = sphi 0, %s44
    %s64 = sphi 0, %s64
    %s66 = sphi 0, %s64
    %s67 = sphi 0, %s66
    %s81 = sphi 0, %s67
    %s87 = sphi 0, %s89
    %s90 = sphi 0, %s87
    %s91 = sphi 0, %s90
    %s107 = sphi 0, %s91
  $region4: #{svgp_forward.3} parent=0 // loop_header_branch
    %12 = sbr.rel (%p10) target = $region8
  $region5: #{svgp_forward.3} parent=0 // loop_body
    %s14 = ssub.s32 %s9, 1
    %s15 = ssub.s32 %s9, 2
    %s16 = sadd.s32 %s9, 1
    %s18 = sadd.s32 %s17, 1
    %p21 = scmp.eq.s32.totalorder %s9, 1
    %p22 = scmp.ne.s32.totalorder %s17, %s19
    %p23 = scmp.eq.s32.totalorder %s9, 0
    %p24 = por %p22, %p23
    %p25 = scmp.ne.s32.totalorder %s17, %s19
    %p26 = scmp.eq.s32.totalorder %s14, 1
    %p27 = por %p25, %p26
    %p28 = scmp.ne.s32.totalorder %s19, %s20
    %p29 = scmp.eq.s32.totalorder %s14, 0
    %p30 = por %p28, %p29
    %p31 = scmp.ne.s32.totalorder %s19, %s20
    %p32 = scmp.eq.s32.totalorder %s15, 1
    %p33 = por %p31, %p32
    %p35 = scmp.ne.s32.totalorder %s20, %s34
    %p36 = scmp.eq.s32.totalorder %s15, 0
    %p37 = por %p35, %p36
    %s38 = ssub.s32 %s9, %s16
    %p39 = scmp.eq.s32.totalorder %s38, 0
    %s41 = sadd.s32 %s40, 1
    %s42 = scalar_select %p39, %s40, %s41
    %p45 = pneg %p39
    %p46 = scmp.eq.s32.totalorder %s9, 1
    %p47 = por %p45, %p46
    %p48 = scmp.ne.s32.totalorder %s40, %s43
    %p49 = scmp.eq.s32.totalorder %s9, 0
    %p50 = por %p48, %p49
    %p51 = scmp.ne.s32.totalorder %s40, %s43
    %p52 = scmp.eq.s32.totalorder %s14, 1
    %p53 = por %p51, %p52
    %p54 = scmp.ne.s32.totalorder %s43, %s44
    %p55 = scmp.eq.s32.totalorder %s14, 0
    %p56 = por %p54, %p55
    %p57 = scmp.ne.s32.totalorder %s43, %s44
    %p58 = scmp.eq.s32.totalorder %s15, 1
    %p59 = por %p57, %p58
    %p61 = scmp.ne.s32.totalorder %s44, %s60
    %p62 = scmp.eq.s32.totalorder %s15, 0
    %p63 = por %p61, %p62
    %s65 = sadd.s32 %s64, 1
    %p68 = scmp.eq.s32.totalorder %s9, 1
    %p69 = scmp.ne.s32.totalorder %s64, %s66
    %p70 = scmp.eq.s32.totalorder %s9, 0
    %p71 = por %p69, %p70
    %p72 = scmp.ne.s32.totalorder %s64, %s66
    %p73 = scmp.eq.s32.totalorder %s14, 1
    %p74 = por %p72, %p73
    %p75 = scmp.ne.s32.totalorder %s66, %s67
    %p76 = scmp.eq.s32.totalorder %s14, 0
    %p77 = por %p75, %p76
    %p78 = scmp.ne.s32.totalorder %s66, %s67
    %p79 = scmp.eq.s32.totalorder %s15, 1
    %p80 = por %p78, %p79
    %p82 = scmp.ne.s32.totalorder %s67, %s81
    %p83 = scmp.eq.s32.totalorder %s15, 0
    %p84 = por %p82, %p83
    %s85 = ssub.s32 %s9, %s16
    %p86 = scmp.eq.s32.totalorder %s85, 0
    %s88 = sadd.s32 %s87, 1
    %s89 = scalar_select %p86, %s87, %s88
    %p92 = pneg %p86
    %p93 = scmp.eq.s32.totalorder %s9, 1
    %p94 = por %p92, %p93
    %p95 = scmp.ne.s32.totalorder %s87, %s90
    %p96 = scmp.eq.s32.totalorder %s9, 0
    %p97 = por %p95, %p96
    %p98 = scmp.ne.s32.totalorder %s87, %s90
    %p99 = scmp.eq.s32.totalorder %s14, 1
    %p100 = por %p98, %p99
    %p101 = scmp.ne.s32.totalorder %s90, %s91
    %p102 = scmp.eq.s32.totalorder %s14, 0
    %p103 = por %p101, %p102
    %p104 = scmp.ne.s32.totalorder %s90, %s91
    %p105 = scmp.eq.s32.totalorder %s15, 1
    %p106 = por %p104, %p105
    %p108 = scmp.ne.s32.totalorder %s91, %s107
    %p109 = scmp.eq.s32.totalorder %s15, 0
    %p110 = por %p108, %p109
    %p111 = scmp.le.s32.totalorder 1, %s9
    %p112 = scmp.lt.s32.totalorder %s9, 3
    %p113 = pnand %p111, %p112
    %p114 = pneg %p113
    // Predicated region
    $region9: #{svgp_forward.3} parent=5 // pred_check
      _
    $region10: #{svgp_forward.3} parent=5 // pred_check_branch
      %116 = sbr.rel (%p113) target = $region12
    $region11: #{svgp_forward.3} parent=5 // pred_region
      %s117 = ssub.s32 %s9, 1
      // Predicated region
      $region13: #{svgp_forward.3} parent=11 // pred_check
        %p118 = pneg %p30
      $region14: #{svgp_forward.3} parent=11 // pred_check_branch
        %120 = sbr.rel (%p118) target = $region16
      $region15: #{svgp_forward.3} parent=11 // pred_region
        _
      $region16: #{svgp_forward.3} parent=11 // pred_fallthru
        _
      // Predicated region
      $region17: #{svgp_forward.3} parent=11 // pred_check
        %p121 = pneg %p77
      $region18: #{svgp_forward.3} parent=11 // pred_check_branch
        %123 = sbr.rel (%p121) target = $region20
      $region19: #{svgp_forward.3} parent=11 // pred_region
        _
      $region20: #{svgp_forward.3} parent=11 // pred_fallthru
        _
    $region12: #{svgp_forward.3} parent=5 // pred_fallthru
      _
    %p124 = scmp.lt.s32.totalorder %s9, 2
    // Predicated region
    $region21: #{svgp_forward.3} parent=5 // pred_check
      %p125 = pneg %p124
    $region22: #{svgp_forward.3} parent=5 // pred_check_branch
      %127 = sbr.rel (%p125) target = $region24
    $region23: #{svgp_forward.3} parent=5 // pred_region
      // Predicated region
      $region25: #{svgp_forward.3} parent=23 // pred_check
        %p128 = pneg %p50
      $region26: #{svgp_forward.3} parent=23 // pred_check_branch
        %130 = sbr.rel (%p128) target = $region28
      $region27: #{svgp_forward.3} parent=23 // pred_region
        %s131 = smul.u32 4, %s9
        %p132 = scmp.lt.s32.totalorder %s131, 7
        %s133 = scalar_select %p132, %s131, 7
        %s134 = smul.addr %s133, 4
        %s135 = scalar_lea.vmem %s1, %s134
        %s136 = smul.u32 4, %s9
      $region28: #{svgp_forward.3} parent=23 // pred_fallthru
        _
    $region24: #{svgp_forward.3} parent=5 // pred_fallthru
      _
    %p137 = scmp.le.s32.totalorder 1, %s9
    %p138 = scmp.lt.s32.totalorder %s9, 3
    %p139 = pnand %p137, %p138
    %p140 = pneg %p139
    // Predicated region
    $region29: #{svgp_forward.3} parent=5 // pred_check
      _
    $region30: #{svgp_forward.3} parent=5 // pred_check_branch
      %142 = sbr.rel (%p139) target = $region32
    $region31: #{svgp_forward.3} parent=5 // pred_region
      %s143 = ssub.s32 %s9, 1
      %p144 = pneg %p30
      %p145 = pneg %p27
      %s146 = smul.u32 4, %s14
      %p147 = scmp.lt.s32.totalorder %s146, 7
      %s148 = scalar_select %p147, %s146, 7
      %s149 = smul.addr %s148, 4
      %s150 = scalar_lea.vmem %s1, %s149
      %p151 = pneg %p56
      %p152 = pneg %p53
      %p153 = pneg %p77
      %p154 = pneg %p74
      %p155 = pneg %p103
      %p156 = pneg %p100
      %s157 = smul.u32 4, %s14
      %p158 = scmp.lt.s32.totalorder %s157, 7
      %s159 = scalar_select %p158, %s157, 7
      %s160 = smul.addr %s159, 2
      %s161 = scalar_lea.vmem %s3, %s160
      %s162 = smul.u32 4, %s14
      %p163 = scmp.lt.s32.totalorder %s162, 7
      %s164 = scalar_select %p163, %s162, 7
      %s165 = smul.addr %s164, 4
      %s166 = scalar_lea.vmem %s1, %s165
      %s167 = smul.u32 4, %s14
      %s168 = smul.u32 4, %s14
      %p169 = scmp.lt.s32.totalorder %s168, 7
      %s170 = scalar_select %p169, %s168, 7
      %s171 = smul.addr %s170, 2
      %s172 = scalar_lea.vmem %s3, %s171
      %s173 = smul.u32 4, %s14
      %v174 = vld [vmem:[%s0] sm:$0xff]
      %v175 = vld [vmem:[%s0 + $0x8] sm:$0xff]
      %v176 = vld [vmem:[%s166] sm:$0xff]
      %v177 = vld [vmem:[%s166 + $0x8] sm:$0xff]
      %179 = vset.pattern.permute.xlu0 0
      %180 = vperm.xlu0 %179, %v174
      %v181 = vpop.permute.xlu0 %180
      %184 = vset.pattern.permute.xlu0 0
      %185 = vperm.xlu0 %184, %v175
      %v186 = vpop.permute.xlu0 %185
      %v190 = vlaneseq
      %v191 = vshrl.u32 %v190, 7
      %v192 = vsub.s32 0, %v191
      %v193 = vrot.slane %v176, %v192
      %v194 = vlaneseq
      %v195 = vshrl.u32 %v194, 7
      %v196 = vsub.s32 4, %v195
      %v197 = vrot.slane %v176, %v196
      %v198 = vlaneseq
      %v199 = vshrl.u32 %v198, 7
      %v200 = vsub.s32 0, %v199
      %v201 = vrot.slane %v177, %v200
      %v202 = vlaneseq
      %v203 = vshrl.u32 %v202, 7
      %v204 = vsub.s32 4, %v203
      %v205 = vrot.slane %v177, %v204
      %v210 = vlaneseq
      %v211 = vshrl.u32 %v210, 7
      %v212 = vsub.s32 0, %v211
      %v213 = vrot.slane %v193, %v212
      %v214 = vlaneseq
      %v215 = vshrl.u32 %v214, 7
      %v216 = vsub.s32 0, %v215
      %v217 = vrot.slane %v197, %v216
      %v218 = vlaneseq
      %v219 = vshrl.u32 %v218, 7
      %v220 = vsub.s32 0, %v219
      %v221 = vrot.slane %v201, %v220
      %v222 = vlaneseq
      %v223 = vshrl.u32 %v222, 7
      %v224 = vsub.s32 0, %v223
      %v225 = vrot.slane %v205, %v224
      %v226 = vsub.f32 %v181, %v213
      %v227 = vsub.f32 %v181, %v217
      %v228 = vsub.f32 %v181, %v221
      %v229 = vsub.f32 %v181, %v225
      %v230 = vsub.f32 %v186, %v213
      %v231 = vsub.f32 %v186, %v217
      %v232 = vsub.f32 %v186, %v221
      %v233 = vsub.f32 %v186, %v225
      %v234 = vmul.f32 %v226, %v226
      %v235 = vmul.f32 %v227, %v227
      %v236 = vmul.f32 %v228, %v228
      %v237 = vmul.f32 %v229, %v229
      %v238 = vmul.f32 %v230, %v230
      %v239 = vmul.f32 %v231, %v231
      %v240 = vmul.f32 %v232, %v232
      %v241 = vmul.f32 %v233, %v233
      %v242 = vadd.f32 %v234, 0.0
      %v243 = vadd.f32 %v235, 0.0
      %v244 = vadd.f32 %v236, 0.0
      %v245 = vadd.f32 %v237, 0.0
      %v246 = vadd.f32 %v238, 0.0
      %v247 = vadd.f32 %v239, 0.0
      %v248 = vadd.f32 %v240, 0.0
      %v249 = vadd.f32 %v241, 0.0
      %250 = vset.pattern.permute.xlu0 1
      %251 = vperm.xlu0 %250, %v174
      %v252 = vpop.permute.xlu0 %251
      %254 = vset.pattern.permute.xlu0 1
      %255 = vperm.xlu0 %254, %v175
      %v256 = vpop.permute.xlu0 %255
      %v258 = vlaneseq
      %v259 = vshrl.u32 %v258, 7
      %v260 = vsub.s32 1, %v259
      %v261 = vrot.slane %v176, %v260
      %v262 = vlaneseq
      %v263 = vshrl.u32 %v262, 7
      %v264 = vsub.s32 5, %v263
      %v265 = vrot.slane %v176, %v264
      %v266 = vlaneseq
      %v267 = vshrl.u32 %v266, 7
      %v268 = vsub.s32 1, %v267
      %v269 = vrot.slane %v177, %v268
      %v270 = vlaneseq
      %v271 = vshrl.u32 %v270, 7
      %v272 = vsub.s32 5, %v271
      %v273 = vrot.slane %v177, %v272
      %v278 = vlaneseq
      %v279 = vshrl.u32 %v278, 7
      %v280 = vsub.s32 1, %v279
      %v281 = vrot.slane %v261, %v280
      %v282 = vlaneseq
      %v283 = vshrl.u32 %v282, 7
      %v284 = vsub.s32 1, %v283
      %v285 = vrot.slane %v265, %v284
      %v286 = vlaneseq
      %v287 = vshrl.u32 %v286, 7
      %v288 = vsub.s32 1, %v287
      %v289 = vrot.slane %v269, %v288
      %v290 = vlaneseq
      %v291 = vshrl.u32 %v290, 7
      %v292 = vsub.s32 1, %v291
      %v293 = vrot.slane %v273, %v292
      %v294 = vsub.f32 %v252, %v281
      %v295 = vsub.f32 %v252, %v285
      %v296 = vsub.f32 %v252, %v289
      %v297 = vsub.f32 %v252, %v293
      %v298 = vsub.f32 %v256, %v281
      %v299 = vsub.f32 %v256, %v285
      %v300 = vsub.f32 %v256, %v289
      %v301 = vsub.f32 %v256, %v293
      %v302 = vmul.f32 %v294, %v294
      %v303 = vmul.f32 %v295, %v295
      %v304 = vmul.f32 %v296, %v296
      %v305 = vmul.f32 %v297, %v297
      %v306 = vmul.f32 %v298, %v298
      %v307 = vmul.f32 %v299, %v299
      %v308 = vmul.f32 %v300, %v300
      %v309 = vmul.f32 %v301, %v301
      %v310 = vadd.f32 %v242, %v302
      %v311 = vadd.f32 %v243, %v303
      %v312 = vadd.f32 %v244, %v304
      %v313 = vadd.f32 %v245, %v305
      %v314 = vadd.f32 %v246, %v306
      %v315 = vadd.f32 %v247, %v307
      %v316 = vadd.f32 %v248, %v308
      %v317 = vadd.f32 %v249, %v309
      %318 = vset.pattern.permute.xlu0 2
      %319 = vperm.xlu0 %318, %v174
      %v320 = vpop.permute.xlu0 %319
      %322 = vset.pattern.permute.xlu0 2
      %323 = vperm.xlu0 %322, %v175
      %v324 = vpop.permute.xlu0 %323
      %v326 = vlaneseq
      %v327 = vshrl.u32 %v326, 7
      %v328 = vsub.s32 2, %v327
      %v329 = vrot.slane %v176, %v328
      %v330 = vlaneseq
      %v331 = vshrl.u32 %v330, 7
      %v332 = vsub.s32 6, %v331
      %v333 = vrot.slane %v176, %v332
      %v334 = vlaneseq
      %v335 = vshrl.u32 %v334, 7
      %v336 = vsub.s32 2, %v335
      %v337 = vrot.slane %v177, %v336
      %v338 = vlaneseq
      %v339 = vshrl.u32 %v338, 7
      %v340 = vsub.s32 6, %v339
      %v341 = vrot.slane %v177, %v340
      %v346 = vlaneseq
      %v347 = vshrl.u32 %v346, 7
      %v348 = vsub.s32 2, %v347
      %v349 = vrot.slane %v329, %v348
      %v350 = vlaneseq
      %v351 = vshrl.u32 %v350, 7
      %v352 = vsub.s32 2, %v351
      %v353 = vrot.slane %v333, %v352
      %v354 = vlaneseq
      %v355 = vshrl.u32 %v354, 7
      %v356 = vsub.s32 2, %v355
      %v357 = vrot.slane %v337, %v356
      %v358 = vlaneseq
      %v359 = vshrl.u32 %v358, 7
      %v360 = vsub.s32 2, %v359
      %v361 = vrot.slane %v341, %v360
      %v362 = vsub.f32 %v320, %v349
      %v363 = vsub.f32 %v320, %v353
      %v364 = vsub.f32 %v320, %v357
      %v365 = vsub.f32 %v320, %v361
      %v366 = vsub.f32 %v324, %v349
      %v367 = vsub.f32 %v324, %v353
      %v368 = vsub.f32 %v324, %v357
      %v369 = vsub.f32 %v324, %v361
      %v370 = vmul.f32 %v362, %v362
      %v371 = vmul.f32 %v363, %v363
      %v372 = vmul.f32 %v364, %v364
      %v373 = vmul.f32 %v365, %v365
      %v374 = vmul.f32 %v366, %v366
      %v375 = vmul.f32 %v367, %v367
      %v376 = vmul.f32 %v368, %v368
      %v377 = vmul.f32 %v369, %v369
      %v378 = vadd.f32 %v310, %v370
      %v379 = vadd.f32 %v311, %v371
      %v380 = vadd.f32 %v312, %v372
      %v381 = vadd.f32 %v313, %v373
      %v382 = vadd.f32 %v314, %v374
      %v383 = vadd.f32 %v315, %v375
      %v384 = vadd.f32 %v316, %v376
      %v385 = vadd.f32 %v317, %v377
      %386 = vset.pattern.permute.xlu0 3
      %387 = vperm.xlu0 %386, %v174
      %v388 = vpop.permute.xlu0 %387
      %390 = vset.pattern.permute.xlu0 3
      %391 = vperm.xlu0 %390, %v175
      %v392 = vpop.permute.xlu0 %391
      %v394 = vlaneseq
      %v395 = vshrl.u32 %v394, 7
      %v396 = vsub.s32 3, %v395
      %v397 = vrot.slane %v176, %v396
      %v398 = vlaneseq
      %v399 = vshrl.u32 %v398, 7
      %v400 = vsub.s32 7, %v399
      %v401 = vrot.slane %v176, %v400
      %v402 = vlaneseq
      %v403 = vshrl.u32 %v402, 7
      %v404 = vsub.s32 3, %v403
      %v405 = vrot.slane %v177, %v404
      %v406 = vlaneseq
      %v407 = vshrl.u32 %v406, 7
      %v408 = vsub.s32 7, %v407
      %v409 = vrot.slane %v177, %v408
      %v414 = vlaneseq
      %v415 = vshrl.u32 %v414, 7
      %v416 = vsub.s32 3, %v415
      %v417 = vrot.slane %v397, %v416
      %v418 = vlaneseq
      %v419 = vshrl.u32 %v418, 7
      %v420 = vsub.s32 3, %v419
      %v421 = vrot.slane %v401, %v420
      %v422 = vlaneseq
      %v423 = vshrl.u32 %v422, 7
      %v424 = vsub.s32 3, %v423
      %v425 = vrot.slane %v405, %v424
      %v426 = vlaneseq
      %v427 = vshrl.u32 %v426, 7
      %v428 = vsub.s32 3, %v427
      %v429 = vrot.slane %v409, %v428
      %v430 = vsub.f32 %v388, %v417
      %v431 = vsub.f32 %v388, %v421
      %v432 = vsub.f32 %v388, %v425
      %v433 = vsub.f32 %v388, %v429
      %v434 = vsub.f32 %v392, %v417
      %v435 = vsub.f32 %v392, %v421
      %v436 = vsub.f32 %v392, %v425
      %v437 = vsub.f32 %v392, %v429
      %v438 = vmul.f32 %v430, %v430
      %v439 = vmul.f32 %v431, %v431
      %v440 = vmul.f32 %v432, %v432
      %v441 = vmul.f32 %v433, %v433
      %v442 = vmul.f32 %v434, %v434
      %v443 = vmul.f32 %v435, %v435
      %v444 = vmul.f32 %v436, %v436
      %v445 = vmul.f32 %v437, %v437
      %v446 = vadd.f32 %v378, %v438
      %v447 = vadd.f32 %v379, %v439
      %v448 = vadd.f32 %v380, %v440
      %v449 = vadd.f32 %v381, %v441
      %v450 = vadd.f32 %v382, %v442
      %v451 = vadd.f32 %v383, %v443
      %v452 = vadd.f32 %v384, %v444
      %v453 = vadd.f32 %v385, %v445
      %v454 = vmul.f32 %v446, -0.5
      %v455 = vmul.f32 %v447, -0.5
      %v456 = vmul.f32 %v448, -0.5
      %v457 = vmul.f32 %v449, -0.5
      %v458 = vmul.f32 %v450, -0.5
      %v459 = vmul.f32 %v451, -0.5
      %v460 = vmul.f32 %v452, -0.5
      %v461 = vmul.f32 %v453, -0.5
      %v462 = vmul.f32 %v454, 1.442695
      %v463 = vpow.pop %v462
      %v464 = vmul.f32 %v455, 1.442695
      %v465 = vpow.pop %v464
      %v466 = vmul.f32 %v456, 1.442695
      %v467 = vpow.pop %v466
      %v468 = vmul.f32 %v457, 1.442695
      %v469 = vpow.pop %v468
      %v470 = vmul.f32 %v458, 1.442695
      %v471 = vpow.pop %v470
      %v472 = vmul.f32 %v459, 1.442695
      %v473 = vpow.pop %v472
      %v474 = vmul.f32 %v460, 1.442695
      %v475 = vpow.pop %v474
      %v476 = vmul.f32 %v461, 1.442695
      %v477 = vpow.pop %v476
      %v478 = vld [vmem:[%s2] sm:$0xff]
      %v479 = vld [vmem:[%s2 + $0x8] sm:$0xff]
      %v480 = vld [vmem:[%s2 + $0x10] sm:$0x1]
      %vm481 = vcmask 130048
      %v483 = vsel %vm481, %v478, 0
      %v486 = vsel %vm481, %v479, 0
      %v489 = vsel %vm481, %v480, 0
      %v491 = vand.u32 %v465, 4294901760
      %492 = vmatprep.subr.mxu0 %v491
      %v493 = vand.u32 %v463, 4294901760
      %494 = vmatpush1.msra.mxu0 %v493
      %v495 = vand.u32 %v473, 4294901760
      %496 = vmatprep.subr.mxu0 %v495
      %v497 = vand.u32 %v471, 4294901760
      %498 = vmatpush1.msra.mxu0 %v497
      %499 = vmatprep.subr.mxu0 0.0
      %500 = vmatpush1.msra.mxu0 0.0
      %501 = vmatprep.subr.mxu0 0.0
      %502 = vmatpush1.msra.mxu0 0.0
      %503 = vmatprep.subr.mxu0 0.0
      %504 = vmatpush1.msra.mxu0 0.0
      %505 = vmatprep.subr.mxu0 0.0
      %506 = vmatpush1.msra.mxu0 0.0
      %507 = vmatprep.subr.mxu0 0.0
      %508 = vmatpush1.msra.mxu0 0.0
      %509 = vmatprep.subr.mxu0 0.0
      %510 = vmatpush1.msra.mxu0 0.0
      %511 = vmatprep.subr.mxu0 0.0
      %512 = vmatpush1.msra.mxu0 0.0
      %513 = vmatprep.subr.mxu0 0.0
      %514 = vmatpush1.msra.mxu0 0.0
      %515 = vmatprep.subr.mxu0 0.0
      %516 = vmatpush1.msra.mxu0 0.0
      %517 = vmatprep.subr.mxu0 0.0
      %518 = vmatpush1.msra.mxu0 0.0
      %519 = vmatprep.subr.mxu0 0.0
      %520 = vmatpush1.msra.mxu0 0.0
      %521 = vmatprep.subr.mxu0 0.0
      %522 = vmatpush1.msra.mxu0 0.0
      %523 = vmatprep.subr.mxu0 0.0
      %524 = vmatpush1.msra.mxu0 0.0
      %525 = vmatprep.subr.mxu0 0.0
      %526 = vmatpush1.msra.mxu0 0.0
      %527 = vmatprep.subr.mxu0 0.0
      %528 = vmatpush1.msra.mxu0 0.0
      %529 = vmatprep.subr.mxu0 0.0
      %530 = vmatpush1.msra.mxu0 0.0
      %531 = vmatprep.subr.mxu0 0.0
      %532 = vmatpush1.msra.mxu0 0.0
      %533 = vmatprep.subr.mxu0 0.0
      %534 = vmatpush1.msra.mxu0 0.0
      %535 = vmatprep.subr.mxu0 0.0
      %536 = vmatpush1.msra.mxu0 0.0
      %537 = vmatprep.subr.mxu0 0.0
      %538 = vmatpush1.msra.mxu0 0.0
      %539 = vmatprep.subr.mxu0 0.0
      %540 = vmatpush1.msra.mxu0 0.0
      %541 = vmatprep.subr.mxu0 0.0
      %542 = vmatpush1.msra.mxu0 0.0
      %543 = vmatprep.subr.mxu0 0.0
      %544 = vmatpush1.msra.mxu0 0.0
      %545 = vmatprep.subr.mxu0 0.0
      %546 = vmatpush1.msra.mxu0 0.0
      %547 = vmatprep.subr.mxu0 0.0
      %548 = vmatpush1.msra.mxu0 0.0
      %549 = vmatprep.subr.mxu0 0.0
      %550 = vmatpush1.msra.mxu0 0.0
      %551 = vmatprep.subr.mxu0 0.0
      %552 = vmatpush1.msra.mxu0 0.0
      %553 = vmatprep.subr.mxu0 0.0
      %554 = vmatpush1.msra.mxu0 0.0
      %555 = vmatprep.subr.mxu0 0.0
      %556 = vmatpush1.msra.mxu0 0.0
      %557 = vmatprep.subr.mxu0 0.0
      %558 = vmatpush1.msra.mxu0 0.0
      %559 = vmatprep.mubr.f32.mxu0 0.0
      %v560 = vand.u32 %v483, 4294901760
      %v561 = vsub.f32 %v483, %v560
      %v562 = vand.u32 %v561, 4294901760
      %v563 = vsub.f32 %v561, %v562
      %v564 = vand.u32 %v563, 4294901760
      %565 = vmatmul.mubr.f32.gmra.mrb[0].mxu0 %v564
      %v566 = vpop.f32.mrb[0].mxu0
      %v567 = vadd.f32 0.0, %v566
      %v568 = vpop.f32.mrb[0].mxu0
      %v569 = vadd.f32 0.0, %v568
      %570 = vmatprep.mubr.f32.mxu0 0.0
      %v571 = vand.u32 %v486, 4294901760
      %v572 = vsub.f32 %v486, %v571
      %v573 = vand.u32 %v572, 4294901760
      %v574 = vsub.f32 %v572, %v573
      %v575 = vand.u32 %v574, 4294901760
      %576 = vmatmul.mubr.f32.gmra.mrb[0].mxu0 %v575
      %v577 = vpop.f32.mrb[0].mxu0
      %v578 = vadd.f32 0.0, %v577
      %v579 = vpop.f32.mrb[0].mxu0
      %v580 = vadd.f32 0.0, %v579
      %581 = vmatprep.mubr.f32.mxu0 0.0
      %v582 = vand.u32 %v489, 4294901760
      %v583 = vsub.f32 %v489, %v582
      %v584 = vand.u32 %v583, 4294901760
      %v585 = vsub.f32 %v583, %v584
      %v586 = vand.u32 %v585, 4294901760
      %587 = vmatmul.mubr.f32.gmra.mrb[0].mxu0 %v586
      %v588 = vpop.f32.mrb[0].mxu0
      %v589 = vadd.f32 0.0, %v588
      %v590 = vpop.f32.mrb[0].mxu0
      %v591 = vadd.f32 0.0, %v590
      %592 = vdwg.mxu0
      %v593 = vand.u32 %v465, 4294901760
      %v594 = vsub.f32 %v465, %v593
      %v595 = vand.u32 %v594, 4294901760
      %v596 = vsub.f32 %v594, %v595
      %v597 = vand.u32 %v596, 4294901760
      %598 = vmatprep.subr.mxu0 %v597
      %v599 = vand.u32 %v463, 4294901760
      %v600 = vsub.f32 %v463, %v599
      %v601 = vand.u32 %v600, 4294901760
      %v602 = vsub.f32 %v600, %v601
      %v603 = vand.u32 %v602, 4294901760
      %604 = vmatpush1.msra.mxu0 %v603
      %v605 = vand.u32 %v473, 4294901760
      %v606 = vsub.f32 %v473, %v605
      %v607 = vand.u32 %v606, 4294901760
      %v608 = vsub.f32 %v606, %v607
      %v609 = vand.u32 %v608, 4294901760
      %610 = vmatprep.subr.mxu0 %v609
      %v611 = vand.u32 %v471, 4294901760
      %v612 = vsub.f32 %v471, %v611
      %v613 = vand.u32 %v612, 4294901760
      %v614 = vsub.f32 %v612, %v613
      %v615 = vand.u32 %v614, 4294901760
      %616 = vmatpush1.msra.mxu0 %v615
      %617 = vmatprep.subr.mxu0 0.0
      %618 = vmatpush1.msra.mxu0 0.0
      %619 = vmatprep.subr.mxu0 0.0
      %620 = vmatpush1.msra.mxu0 0.0
      %621 = vmatprep.subr.mxu0 0.0
      %622 = vmatpush1.msra.mxu0 0.0
      %623 = vmatprep.subr.mxu0 0.0
      %624 = vmatpush1.msra.mxu0 0.0
      %625 = vmatprep.subr.mxu0 0.0
      %626 = vmatpush1.msra.mxu0 0.0
      %627 = vmatprep.subr.mxu0 0.0
      %628 = vmatpush1.msra.mxu0 0.0
      %629 = vmatprep.subr.mxu0 0.0
      %630 = vmatpush1.msra.mxu0 0.0
      %631 = vmatprep.subr.mxu0 0.0
      %632 = vmatpush1.msra.mxu0 0.0
      %633 = vmatprep.subr.mxu0 0.0
      %634 = vmatpush1.msra.mxu0 0.0
      %635 = vmatprep.subr.mxu0 0.0
      %636 = vmatpush1.msra.mxu0 0.0
      %637 = vmatprep.subr.mxu0 0.0
      %638 = vmatpush1.msra.mxu0 0.0
      %639 = vmatprep.subr.mxu0 0.0
      %640 = vmatpush1.msra.mxu0 0.0
      %641 = vmatprep.subr.mxu0 0.0
      %642 = vmatpush1.msra.mxu0 0.0
      %643 = vmatprep.subr.mxu0 0.0
      %644 = vmatpush1.msra.mxu0 0.0
      %645 = vmatprep.subr.mxu0 0.0
      %646 = vmatpush1.msra.mxu0 0.0
      %647 = vmatprep.subr.mxu0 0.0
      %648 = vmatpush1.msra.mxu0 0.0
      %649 = vmatprep.subr.mxu0 0.0
      %650 = vmatpush1.msra.mxu0 0.0
      %651 = vmatprep.subr.mxu0 0.0
      %652 = vmatpush1.msra.mxu0 0.0
      %653 = vmatprep.subr.mxu0 0.0
      %654 = vmatpush1.msra.mxu0 0.0
      %655 = vmatprep.subr.mxu0 0.0
      %656 = vmatpush1.msra.mxu0 0.0
      %657 = vmatprep.subr.mxu0 0.0
      %658 = vmatpush1.msra.mxu0 0.0
      %659 = vmatprep.subr.mxu0 0.0
      %660 = vmatpush1.msra.mxu0 0.0
      %661 = vmatprep.subr.mxu0 0.0
      %662 = vmatpush1.msra.mxu0 0.0
      %663 = vmatprep.subr.mxu0 0.0
      %664 = vmatpush1.msra.mxu0 0.0
      %665 = vmatprep.subr.mxu0 0.0
      %666 = vmatpush1.msra.mxu0 0.0
      %667 = vmatprep.subr.mxu0 0.0
      %668 = vmatpush1.msra.mxu0 0.0
      %669 = vmatprep.subr.mxu0 0.0
      %670 = vmatpush1.msra.mxu0 0.0
      %671 = vmatprep.subr.mxu0 0.0
      %672 = vmatpush1.msra.mxu0 0.0
      %673 = vmatprep.subr.mxu0 0.0
      %674 = vmatpush1.msra.mxu0 0.0
      %675 = vmatprep.subr.mxu0 0.0
      %676 = vmatpush1.msra.mxu0 0.0
      %677 = vmatprep.mubr.f32.mxu0 0.0
      %v678 = vand.u32 %v483, 4294901760
      %679 = vmatmul.mubr.f32.gmra.mrb[0].mxu0 %v678
      %v680 = vpop.f32.mrb[0].mxu0
      %v681 = vadd.f32 %v567, %v680
      %v682 = vpop.f32.mrb[0].mxu0
      %v683 = vadd.f32 %v569, %v682
      %684 = vmatprep.mubr.f32.mxu0 0.0
      %v685 = vand.u32 %v486, 4294901760
      %686 = vmatmul.mubr.f32.gmra.mrb[0].mxu0 %v685
      %v687 = vpop.f32.mrb[0].mxu0
      %v688 = vadd.f32 %v578, %v687
      %v689 = vpop.f32.mrb[0].mxu0
      %v690 = vadd.f32 %v580, %v689
      %691 = vmatprep.mubr.f32.mxu0 0.0
      %v692 = vand.u32 %v489, 4294901760
      %693 = vmatmul.mubr.f32.gmra.mrb[0].mxu0 %v692
      %v694 = vpop.f32.mrb[0].mxu0
      %v695 = vadd.f32 %v589, %v694
      %v696 = vpop.f32.mrb[0].mxu0
      %v697 = vadd.f32 %v591, %v696
      %698 = vdwg.mxu0
      %v699 = vand.u32 %v465, 4294901760
      %v700 = vsub.f32 %v465, %v699
      %701 = vmatprep.subr.mxu0 %v700
      %v702 = vand.u32 %v463, 4294901760
      %v703 = vsub.f32 %v463, %v702
      %704 = vmatpush1.msra.mxu0 %v703
      %v705 = vand.u32 %v473, 4294901760
      %v706 = vsub.f32 %v473, %v705
      %707 = vmatprep.subr.mxu0 %v706
      %v708 = vand.u32 %v471, 4294901760
      %v709 = vsub.f32 %v471, %v708
      %710 = vmatpush1.msra.mxu0 %v709
      %711 = vmatprep.subr.mxu0 0.0
      %712 = vmatpush1.msra.mxu0 0.0
      %713 = vmatprep.subr.mxu0 0.0
      %714 = vmatpush1.msra.mxu0 0.0
      %715 = vmatprep.subr.mxu0 0.0
      %716 = vmatpush1.msra.mxu0 0.0
      %717 = vmatprep.subr.mxu0 0.0
      %718 = vmatpush1.msra.mxu0 0.0
      %719 = vmatprep.subr.mxu0 0.0
      %720 = vmatpush1.msra.mxu0 0.0
      %721 = vmatprep.subr.mxu0 0.0
      %722 = vmatpush1.msra.mxu0 0.0
      %723 = vmatprep.subr.mxu0 0.0
      %724 = vmatpush1.msra.mxu0 0.0
      %725 = vmatprep.subr.mxu0 0.0
      %726 = vmatpush1.msra.mxu0 0.0
      %727 = vmatprep.subr.mxu0 0.0
      %728 = vmatpush1.msra.mxu0 0.0
      %729 = vmatprep.subr.mxu0 0.0
      %730 = vmatpush1.msra.mxu0 0.0
      %731 = vmatprep.subr.mxu0 0.0
      %732 = vmatpush1.msra.mxu0 0.0
      %733 = vmatprep.subr.mxu0 0.0
      %734 = vmatpush1.msra.mxu0 0.0
      %735 = vmatprep.subr.mxu0 0.0
      %736 = vmatpush1.msra.mxu0 0.0
      %737 = vmatprep.subr.mxu0 0.0
      %738 = vmatpush1.msra.mxu0 0.0
      %739 = vmatprep.subr.mxu0 0.0
      %740 = vmatpush1.msra.mxu0 0.0
      %741 = vmatprep.subr.mxu0 0.0
      %742 = vmatpush1.msra.mxu0 0.0
      %743 = vmatprep.subr.mxu0 0.0
      %744 = vmatpush1.msra.mxu0 0.0
      %745 = vmatprep.subr.mxu0 0.0
      %746 = vmatpush1.msra.mxu0 0.0
      %747 = vmatprep.subr.mxu0 0.0
      %748 = vmatpush1.msra.mxu0 0.0
      %749 = vmatprep.subr.mxu0 0.0
      %750 = vmatpush1.msra.mxu0 0.0
      %751 = vmatprep.subr.mxu0 0.0
      %752 = vmatpush1.msra.mxu0 0.0
      %753 = vmatprep.subr.mxu0 0.0
      %754 = vmatpush1.msra.mxu0 0.0
      %755 = vmatprep.subr.mxu0 0.0
      %756 = vmatpush1.msra.mxu0 0.0
      %757 = vmatprep.subr.mxu0 0.0
      %758 = vmatpush1.msra.mxu0 0.0
      %759 = vmatprep.subr.mxu0 0.0
      %760 = vmatpush1.msra.mxu0 0.0
      %761 = vmatprep.subr.mxu0 0.0
      %762 = vmatpush1.msra.mxu0 0.0
      %763 = vmatprep.subr.mxu0 0.0
      %764 = vmatpush1.msra.mxu0 0.0
      %765 = vmatprep.subr.mxu0 0.0
      %766 = vmatpush1.msra.mxu0 0.0
      %767 = vmatprep.subr.mxu0 0.0
      %768 = vmatpush1.msra.mxu0 0.0
      %769 = vmatprep.subr.mxu0 0.0
      %770 = vmatpush1.msra.mxu0 0.0
      %771 = vmatprep.mubr.f32.mxu0 0.0
      %v772 = vand.u32 %v483, 4294901760
      %v773 = vsub.f32 %v483, %v772
      %774 = vmatmul.mubr.f32.gmra.mrb[0].mxu0 %v773
      %v775 = vpop.f32.mrb[0].mxu0
      %v776 = vadd.f32 %v681, %v775
      %v777 = vpop.f32.mrb[0].mxu0
      %v778 = vadd.f32 %v683, %v777
      %779 = vmatprep.mubr.f32.mxu0 0.0
      %v780 = vand.u32 %v486, 4294901760
      %v781 = vsub.f32 %v486, %v780
      %782 = vmatmul.mubr.f32.gmra.mrb[0].mxu0 %v781
      %v783 = vpop.f32.mrb[0].mxu0
      %v784 = vadd.f32 %v688, %v783
      %v785 = vpop.f32.mrb[0].mxu0
      %v786 = vadd.f32 %v690, %v785
      %787 = vmatprep.mubr.f32.mxu0 0.0
      %v788 = vand.u32 %v489, 4294901760
      %v789 = vsub.f32 %v489, %v788
      %790 = vmatmul.mubr.f32.gmra.mrb[0].mxu0 %v789
      %v791 = vpop.f32.mrb[0].mxu0
      %v792 = vadd.f32 %v695, %v791
      %v793 = vpop.f32.mrb[0].mxu0
      %v794 = vadd.f32 %v697, %v793
      %795 = vdwg.mxu0
      %v796 = vand.u32 %v465, 4294901760
      %797 = vmatprep.subr.mxu0 %v796
      %v798 = vand.u32 %v463, 4294901760
      %799 = vmatpush1.msra.mxu0 %v798
      %v800 = vand.u32 %v473, 4294901760
      %801 = vmatprep.subr.mxu0 %v800
      %v802 = vand.u32 %v471, 4294901760
      %803 = vmatpush1.msra.mxu0 %v802
      %804 = vmatprep.subr.mxu0 0.0
      %805 = vmatpush1.msra.mxu0 0.0
      %806 = vmatprep.subr.mxu0 0.0
      %807 = vmatpush1.msra.mxu0 0.0
      %808 = vmatprep.subr.mxu0 0.0
      %809 = vmatpush1.msra.mxu0 0.0
      %810 = vmatprep.subr.mxu0 0.0
      %811 = vmatpush1.msra.mxu0 0.0
      %812 = vmatprep.subr.mxu0 0.0
      %813 = vmatpush1.msra.mxu0 0.0
      %814 = vmatprep.subr.mxu0 0.0
      %815 = vmatpush1.msra.mxu0 0.0
      %816 = vmatprep.subr.mxu0 0.0
      %817 = vmatpush1.msra.mxu0 0.0
      %818 = vmatprep.subr.mxu0 0.0
      %819 = vmatpush1.msra.mxu0 0.0
      %820 = vmatprep.subr.mxu0 0.0
      %821 = vmatpush1.msra.mxu0 0.0
      %822 = vmatprep.subr.mxu0 0.0
      %823 = vmatpush1.msra.mxu0 0.0
      %824 = vmatprep.subr.mxu0 0.0
      %825 = vmatpush1.msra.mxu0 0.0
      %826 = vmatprep.subr.mxu0 0.0
      %827 = vmatpush1.msra.mxu0 0.0
      %828 = vmatprep.subr.mxu0 0.0
      %829 = vmatpush1.msra.mxu0 0.0
      %830 = vmatprep.subr.mxu0 0.0
      %831 = vmatpush1.msra.mxu0 0.0
      %832 = vmatprep.subr.mxu0 0.0
      %833 = vmatpush1.msra.mxu0 0.0
      %834 = vmatprep.subr.mxu0 0.0
      %835 = vmatpush1.msra.mxu0 0.0
      %836 = vmatprep.subr.mxu0 0.0
      %837 = vmatpush1.msra.mxu0 0.0
      %838 = vmatprep.subr.mxu0 0.0
      %839 = vmatpush1.msra.mxu0 0.0
      %840 = vmatprep.subr.mxu0 0.0
      %841 = vmatpush1.msra.mxu0 0.0
      %842 = vmatprep.subr.mxu0 0.0
      %843 = vmatpush1.msra.mxu0 0.0
      %844 = vmatprep.subr.mxu0 0.0
      %845 = vmatpush1.msra.mxu0 0.0
      %846 = vmatprep.subr.mxu0 0.0
      %847 = vmatpush1.msra.mxu0 0.0
      %848 = vmatprep.subr.mxu0 0.0
      %849 = vmatpush1.msra.mxu0 0.0
      %850 = vmatprep.subr.mxu0 0.0
      %851 = vmatpush1.msra.mxu0 0.0
      %852 = vmatprep.subr.mxu0 0.0
      %853 = vmatpush1.msra.mxu0 0.0
      %854 = vmatprep.subr.mxu0 0.0
      %855 = vmatpush1.msra.mxu0 0.0
      %856 = vmatprep.subr.mxu0 0.0
      %857 = vmatpush1.msra.mxu0 0.0
      %858 = vmatprep.subr.mxu0 0.0
      %859 = vmatpush1.msra.mxu0 0.0
      %860 = vmatprep.subr.mxu0 0.0
      %861 = vmatpush1.msra.mxu0 0.0
      %862 = vmatprep.subr.mxu0 0.0
      %863 = vmatpush1.msra.mxu0 0.0
      %864 = vmatprep.mubr.f32.mxu0 0.0
      %v865 = vand.u32 %v483, 4294901760
      %v866 = vsub.f32 %v483, %v865
      %v867 = vand.u32 %v866, 4294901760
      %868 = vmatmul.mubr.f32.gmra.mrb[0].mxu0 %v867
      %v869 = vpop.f32.mrb[0].mxu0
      %v870 = vadd.f32 %v776, %v869
      %v871 = vpop.f32.mrb[0].mxu0
      %v872 = vadd.f32 %v778, %v871
      %873 = vmatprep.mubr.f32.mxu0 0.0
      %v874 = vand.u32 %v486, 4294901760
      %v875 = vsub.f32 %v486, %v874
      %v876 = vand.u32 %v875, 4294901760
      %877 = vmatmul.mubr.f32.gmra.mrb[0].mxu0 %v876
      %v878 = vpop.f32.mrb[0].mxu0
      %v879 = vadd.f32 %v784, %v878
      %v880 = vpop.f32.mrb[0].mxu0
      %v881 = vadd.f32 %v786, %v880
      %882 = vmatprep.mubr.f32.mxu0 0.0
      %v883 = vand.u32 %v489, 4294901760
      %v884 = vsub.f32 %v489, %v883
      %v885 = vand.u32 %v884, 4294901760
      %886 = vmatmul.mubr.f32.gmra.mrb[0].mxu0 %v885
      %v887 = vpop.f32.mrb[0].mxu0
      %v888 = vadd.f32 %v792, %v887
      %v889 = vpop.f32.mrb[0].mxu0
      %v890 = vadd.f32 %v794, %v889
      %891 = vdwg.mxu0
      %v892 = vand.u32 %v465, 4294901760
      %v893 = vsub.f32 %v465, %v892
      %v894 = vand.u32 %v893, 4294901760
      %895 = vmatprep.subr.mxu0 %v894
      %v896 = vand.u32 %v463, 4294901760
      %v897 = vsub.f32 %v463, %v896
      %v898 = vand.u32 %v897, 4294901760
      %899 = vmatpush1.msra.mxu0 %v898
      %v900 = vand.u32 %v473, 4294901760
      %v901 = vsub.f32 %v473, %v900
      %v902 = vand.u32 %v901, 4294901760
      %903 = vmatprep.subr.mxu0 %v902
      %v904 = vand.u32 %v471, 4294901760
      %v905 = vsub.f32 %v471, %v904
      %v906 = vand.u32 %v905, 4294901760
      %907 = vmatpush1.msra.mxu0 %v906
      %908 = vmatprep.subr.mxu0 0.0
      %909 = vmatpush1.msra.mxu0 0.0
      %910 = vmatprep.subr.mxu0 0.0
      %911 = vmatpush1.msra.mxu0 0.0
      %912 = vmatprep.subr.mxu0 0.0
      %913 = vmatpush1.msra.mxu0 0.0
      %914 = vmatprep.subr.mxu0 0.0
      %915 = vmatpush1.msra.mxu0 0.0
      %916 = vmatprep.subr.mxu0 0.0
      %917 = vmatpush1.msra.mxu0 0.0
      %918 = vmatprep.subr.mxu0 0.0
      %919 = vmatpush1.msra.mxu0 0.0
      %920 = vmatprep.subr.mxu0 0.0
      %921 = vmatpush1.msra.mxu0 0.0
      %922 = vmatprep.subr.mxu0 0.0
      %923 = vmatpush1.msra.mxu0 0.0
      %924 = vmatprep.subr.mxu0 0.0
      %925 = vmatpush1.msra.mxu0 0.0
      %926 = vmatprep.subr.mxu0 0.0
      %927 = vmatpush1.msra.mxu0 0.0
      %928 = vmatprep.subr.mxu0 0.0
      %929 = vmatpush1.msra.mxu0 0.0
      %930 = vmatprep.subr.mxu0 0.0
      %931 = vmatpush1.msra.mxu0 0.0
      %932 = vmatprep.subr.mxu0 0.0
      %933 = vmatpush1.msra.mxu0 0.0
      %934 = vmatprep.subr.mxu0 0.0
      %935 = vmatpush1.msra.mxu0 0.0
      %936 = vmatprep.subr.mxu0 0.0
      %937 = vmatpush1.msra.mxu0 0.0
      %938 = vmatprep.subr.mxu0 0.0
      %939 = vmatpush1.msra.mxu0 0.0
      %940 = vmatprep.subr.mxu0 0.0
      %941 = vmatpush1.msra.mxu0 0.0
      %942 = vmatprep.subr.mxu0 0.0
      %943 = vmatpush1.msra.mxu0 0.0
      %944 = vmatprep.subr.mxu0 0.0
      %945 = vmatpush1.msra.mxu0 0.0
      %946 = vmatprep.subr.mxu0 0.0
      %947 = vmatpush1.msra.mxu0 0.0
      %948 = vmatprep.subr.mxu0 0.0
      %949 = vmatpush1.msra.mxu0 0.0
      %950 = vmatprep.subr.mxu0 0.0
      %951 = vmatpush1.msra.mxu0 0.0
      %952 = vmatprep.subr.mxu0 0.0
      %953 = vmatpush1.msra.mxu0 0.0
      %954 = vmatprep.subr.mxu0 0.0
      %955 = vmatpush1.msra.mxu0 0.0
      %956 = vmatprep.subr.mxu0 0.0
      %957 = vmatpush1.msra.mxu0 0.0
      %958 = vmatprep.subr.mxu0 0.0
      %959 = vmatpush1.msra.mxu0 0.0
      %960 = vmatprep.subr.mxu0 0.0
      %961 = vmatpush1.msra.mxu0 0.0
      %962 = vmatprep.subr.mxu0 0.0
      %963 = vmatpush1.msra.mxu0 0.0
      %964 = vmatprep.subr.mxu0 0.0
      %965 = vmatpush1.msra.mxu0 0.0
      %966 = vmatprep.subr.mxu0 0.0
      %967 = vmatpush1.msra.mxu0 0.0
      %968 = vmatprep.mubr.f32.mxu0 0.0
      %v969 = vand.u32 %v483, 4294901760
      %970 = vmatmul.mubr.f32.gmra.mrb[0].mxu0 %v969
      %v971 = vpop.f32.mrb[0].mxu0
      %v972 = vadd.f32 %v870, %v971
      %v973 = vpop.f32.mrb[0].mxu0
      %v974 = vadd.f32 %v872, %v973
      %975 = vmatprep.mubr.f32.mxu0 0.0
      %v976 = vand.u32 %v486, 4294901760
      %977 = vmatmul.mubr.f32.gmra.mrb[0].mxu0 %v976
      %v978 = vpop.f32.mrb[0].mxu0
      %v979 = vadd.f32 %v879, %v978
      %v980 = vpop.f32.mrb[0].mxu0
      %v981 = vadd.f32 %v881, %v980
      %982 = vmatprep.mubr.f32.mxu0 0.0
      %v983 = vand.u32 %v489, 4294901760
      %984 = vmatmul.mubr.f32.gmra.mrb[0].mxu0 %v983
      %v985 = vpop.f32.mrb[0].mxu0
      %v986 = vadd.f32 %v888, %v985
      %v987 = vpop.f32.mrb[0].mxu0
      %v988 = vadd.f32 %v890, %v987
      %989 = vdwg.mxu0
      %v990 = vand.u32 %v465, 4294901760
      %991 = vmatprep.subr.mxu0 %v990
      %v992 = vand.u32 %v463, 4294901760
      %993 = vmatpush1.msra.mxu0 %v992
      %v994 = vand.u32 %v473, 4294901760
      %995 = vmatprep.subr.mxu0 %v994
      %v996 = vand.u32 %v471, 4294901760
      %997 = vmatpush1.msra.mxu0 %v996
      %998 = vmatprep.subr.mxu0 0.0
      %999 = vmatpush1.msra.mxu0 0.0
      %1000 = vmatprep.subr.mxu0 0.0
      %1001 = vmatpush1.msra.mxu0 0.0
      %1002 = vmatprep.subr.mxu0 0.0
      %1003 = vmatpush1.msra.mxu0 0.0
      %1004 = vmatprep.subr.mxu0 0.0
      %1005 = vmatpush1.msra.mxu0 0.0
      %1006 = vmatprep.subr.mxu0 0.0
      %1007 = vmatpush1.msra.mxu0 0.0
      %1008 = vmatprep.subr.mxu0 0.0
      %1009 = vmatpush1.msra.mxu0 0.0
      %1010 = vmatprep.subr.mxu0 0.0
      %1011 = vmatpush1.msra.mxu0 0.0
      %1012 = vmatprep.subr.mxu0 0.0
      %1013 = vmatpush1.msra.mxu0 0.0
      %1014 = vmatprep.subr.mxu0 0.0
      %1015 = vmatpush1.msra.mxu0 0.0
      %1016 = vmatprep.subr.mxu0 0.0
      %1017 = vmatpush1.msra.mxu0 0.0
      %1018 = vmatprep.subr.mxu0 0.0
      %1019 = vmatpush1.msra.mxu0 0.0
      %1020 = vmatprep.subr.mxu0 0.0
      %1021 = vmatpush1.msra.mxu0 0.0
      %1022 = vmatprep.subr.mxu0 0.0
      %1023 = vmatpush1.msra.mxu0 0.0
      %1024 = vmatprep.subr.mxu0 0.0
      %1025 = vmatpush1.msra.mxu0 0.0
      %1026 = vmatprep.subr.mxu0 0.0
      %1027 = vmatpush1.msra.mxu0 0.0
      %1028 = vmatprep.subr.mxu0 0.0
      %1029 = vmatpush1.msra.mxu0 0.0
      %1030 = vmatprep.subr.mxu0 0.0
      %1031 = vmatpush1.msra.mxu0 0.0
      %1032 = vmatprep.subr.mxu0 0.0
      %1033 = vmatpush1.msra.mxu0 0.0
      %1034 = vmatprep.subr.mxu0 0.0
      %1035 = vmatpush1.msra.mxu0 0.0
      %1036 = vmatprep.subr.mxu0 0.0
      %1037 = vmatpush1.msra.mxu0 0.0
      %1038 = vmatprep.subr.mxu0 0.0
      %1039 = vmatpush1.msra.mxu0 0.0
      %1040 = vmatprep.subr.mxu0 0.0
      %1041 = vmatpush1.msra.mxu0 0.0
      %1042 = vmatprep.subr.mxu0 0.0
      %1043 = vmatpush1.msra.mxu0 0.0
      %1044 = vmatprep.subr.mxu0 0.0
      %1045 = vmatpush1.msra.mxu0 0.0
      %1046 = vmatprep.subr.mxu0 0.0
      %1047 = vmatpush1.msra.mxu0 0.0
      %1048 = vmatprep.subr.mxu0 0.0
      %1049 = vmatpush1.msra.mxu0 0.0
      %1050 = vmatprep.subr.mxu0 0.0
      %1051 = vmatpush1.msra.mxu0 0.0
      %1052 = vmatprep.subr.mxu0 0.0
      %1053 = vmatpush1.msra.mxu0 0.0
      %1054 = vmatprep.subr.mxu0 0.0
      %1055 = vmatpush1.msra.mxu0 0.0
      %1056 = vmatprep.subr.mxu0 0.0
      %1057 = vmatpush1.msra.mxu0 0.0
      %1058 = vmatprep.mubr.f32.mxu0 0.0
      %v1059 = vand.u32 %v483, 4294901760
      %1060 = vmatmul.mubr.f32.gmra.mrb[0].mxu0 %v1059
      %v1061 = vpop.f32.mrb[0].mxu0
      %v1062 = vadd.f32 %v972, %v1061
      %v1063 = vpop.f32.mrb[0].mxu0
      %v1064 = vadd.f32 %v974, %v1063
      %1065 = vmatprep.mubr.f32.mxu0 0.0
      %v1066 = vand.u32 %v486, 4294901760
      %1067 = vmatmul.mubr.f32.gmra.mrb[0].mxu0 %v1066
      %v1068 = vpop.f32.mrb[0].mxu0
      %v1069 = vadd.f32 %v979, %v1068
      %v1070 = vpop.f32.mrb[0].mxu0
      %v1071 = vadd.f32 %v981, %v1070
      %1072 = vmatprep.mubr.f32.mxu0 0.0
      %v1073 = vand.u32 %v489, 4294901760
      %1074 = vmatmul.mubr.f32.gmra.mrb[0].mxu0 %v1073
      %v1075 = vpop.f32.mrb[0].mxu0
      %v1076 = vadd.f32 %v986, %v1075
      %v1077 = vpop.f32.mrb[0].mxu0
      %v1078 = vadd.f32 %v988, %v1077
      %1079 = vdwg.mxu0
      %v1080 = vand.u32 %v469, 4294901760
      %1081 = vmatprep.subr.mxu0 %v1080
      %v1082 = vand.u32 %v467, 4294901760
      %1083 = vmatpush1.msra.mxu0 %v1082
      %v1084 = vand.u32 %v477, 4294901760
      %1085 = vmatprep.subr.mxu0 %v1084
      %v1086 = vand.u32 %v475, 4294901760
      %1087 = vmatpush1.msra.mxu0 %v1086
      %1088 = vmatprep.subr.mxu0 0.0
      %1089 = vmatpush1.msra.mxu0 0.0
      %1090 = vmatprep.subr.mxu0 0.0
      %1091 = vmatpush1.msra.mxu0 0.0
      %1092 = vmatprep.subr.mxu0 0.0
      %1093 = vmatpush1.msra.mxu0 0.0
      %1094 = vmatprep.subr.mxu0 0.0
      %1095 = vmatpush1.msra.mxu0 0.0
      %1096 = vmatprep.subr.mxu0 0.0
      %1097 = vmatpush1.msra.mxu0 0.0
      %1098 = vmatprep.subr.mxu0 0.0
      %1099 = vmatpush1.msra.mxu0 0.0
      %1100 = vmatprep.subr.mxu0 0.0
      %1101 = vmatpush1.msra.mxu0 0.0
      %1102 = vmatprep.subr.mxu0 0.0
      %1103 = vmatpush1.msra.mxu0 0.0
      %1104 = vmatprep.subr.mxu0 0.0
      %1105 = vmatpush1.msra.mxu0 0.0
      %1106 = vmatprep.subr.mxu0 0.0
      %1107 = vmatpush1.msra.mxu0 0.0
      %1108 = vmatprep.subr.mxu0 0.0
      %1109 = vmatpush1.msra.mxu0 0.0
      %1110 = vmatprep.subr.mxu0 0.0
      %1111 = vmatpush1.msra.mxu0 0.0
      %1112 = vmatprep.subr.mxu0 0.0
      %1113 = vmatpush1.msra.mxu0 0.0
      %1114 = vmatprep.subr.mxu0 0.0
      %1115 = vmatpush1.msra.mxu0 0.0
      %1116 = vmatprep.subr.mxu0 0.0
      %1117 = vmatpush1.msra.mxu0 0.0
      %1118 = vmatprep.subr.mxu0 0.0
      %1119 = vmatpush1.msra.mxu0 0.0
      %1120 = vmatprep.subr.mxu0 0.0
      %1121 = vmatpush1.msra.mxu0 0.0
      %1122 = vmatprep.subr.mxu0 0.0
      %1123 = vmatpush1.msra.mxu0 0.0
      %1124 = vmatprep.subr.mxu0 0.0
      %1125 = vmatpush1.msra.mxu0 0.0
      %1126 = vmatprep.subr.mxu0 0.0
      %1127 = vmatpush1.msra.mxu0 0.0
      %1128 = vmatprep.subr.mxu0 0.0
      %1129 = vmatpush1.msra.mxu0 0.0
      %1130 = vmatprep.subr.mxu0 0.0
      %1131 = vmatpush1.msra.mxu0 0.0
      %1132 = vmatprep.subr.mxu0 0.0
      %1133 = vmatpush1.msra.mxu0 0.0
      %1134 = vmatprep.subr.mxu0 0.0
      %1135 = vmatpush1.msra.mxu0 0.0
      %1136 = vmatprep.subr.mxu0 0.0
      %1137 = vmatpush1.msra.mxu0 0.0
      %1138 = vmatprep.subr.mxu0 0.0
      %1139 = vmatpush1.msra.mxu0 0.0
      %1140 = vmatprep.subr.mxu0 0.0
      %1141 = vmatpush1.msra.mxu0 0.0
      %1142 = vmatprep.subr.mxu0 0.0
      %1143 = vmatpush1.msra.mxu0 0.0
      %1144 = vmatprep.subr.mxu0 0.0
      %1145 = vmatpush1.msra.mxu0 0.0
      %1146 = vmatprep.subr.mxu0 0.0
      %1147 = vmatpush1.msra.mxu0 0.0
      %1148 = vmatprep.mubr.f32.mxu0 0.0
      %v1149 = vand.u32 %v483, 4294901760
      %v1150 = vsub.f32 %v483, %v1149
      %v1151 = vand.u32 %v1150, 4294901760
      %v1152 = vsub.f32 %v1150, %v1151
      %v1153 = vand.u32 %v1152, 4294901760
      %1154 = vmatmul.mubr.f32.gmra.mrb[0].mxu0 %v1153
      %v1155 = vpop.f32.mrb[0].mxu0
      %v1156 = vadd.f32 0.0, %v1155
      %v1157 = vpop.f32.mrb[0].mxu0
      %v1158 = vadd.f32 0.0, %v1157
      %1159 = vmatprep.mubr.f32.mxu0 0.0
      %v1160 = vand.u32 %v486, 4294901760
      %v1161 = vsub.f32 %v486, %v1160
      %v1162 = vand.u32 %v1161, 4294901760
      %v1163 = vsub.f32 %v1161, %v1162
      %v1164 = vand.u32 %v1163, 4294901760
      %1165 = vmatmul.mubr.f32.gmra.mrb[0].mxu0 %v1164
      %v1166 = vpop.f32.mrb[0].mxu0
      %v1167 = vadd.f32 0.0, %v1166
      %v1168 = vpop.f32.mrb[0].mxu0
      %v1169 = vadd.f32 0.0, %v1168
      %1170 = vmatprep.mubr.f32.mxu0 0.0
      %v1171 = vand.u32 %v489, 4294901760
      %v1172 = vsub.f32 %v489, %v1171
      %v1173 = vand.u32 %v1172, 4294901760
      %v1174 = vsub.f32 %v1172, %v1173
      %v1175 = vand.u32 %v1174, 4294901760
      %1176 = vmatmul.mubr.f32.gmra.mrb[0].mxu0 %v1175
      %v1177 = vpop.f32.mrb[0].mxu0
      %v1178 = vadd.f32 0.0, %v1177
      %v1179 = vpop.f32.mrb[0].mxu0
      %v1180 = vadd.f32 0.0, %v1179
      %1181 = vdwg.mxu0
      %v1182 = vand.u32 %v469, 4294901760
      %v1183 = vsub.f32 %v469, %v1182
      %v1184 = vand.u32 %v1183, 4294901760
      %v1185 = vsub.f32 %v1183, %v1184
      %v1186 = vand.u32 %v1185, 4294901760
      %1187 = vmatprep.subr.mxu0 %v1186
      %v1188 = vand.u32 %v467, 4294901760
      %v1189 = vsub.f32 %v467, %v1188
      %v1190 = vand.u32 %v1189, 4294901760
      %v1191 = vsub.f32 %v1189, %v1190
      %v1192 = vand.u32 %v1191, 4294901760
      %1193 = vmatpush1.msra.mxu0 %v1192
      %v1194 = vand.u32 %v477, 4294901760
      %v1195 = vsub.f32 %v477, %v1194
      %v1196 = vand.u32 %v1195, 4294901760
      %v1197 = vsub.f32 %v1195, %v1196
      %v1198 = vand.u32 %v1197, 4294901760
      %1199 = vmatprep.subr.mxu0 %v1198
      %v1200 = vand.u32 %v475, 4294901760
      %v1201 = vsub.f32 %v475, %v1200
      %v1202 = vand.u32 %v1201, 4294901760
      %v1203 = vsub.f32 %v1201, %v1202
      %v1204 = vand.u32 %v1203, 4294901760
      %1205 = vmatpush1.msra.mxu0 %v1204
      %1206 = vmatprep.subr.mxu0 0.0
      %1207 = vmatpush1.msra.mxu0 0.0
      %1208 = vmatprep.subr.mxu0 0.0
      %1209 = vmatpush1.msra.mxu0 0.0
      %1210 = vmatprep.subr.mxu0 0.0
      %1211 = vmatpush1.msra.mxu0 0.0
      %1212 = vmatprep.subr.mxu0 0.0
      %1213 = vmatpush1.msra.mxu0 0.0
      %1214 = vmatprep.subr.mxu0 0.0
      %1215 = vmatpush1.msra.mxu0 0.0
      %1216 = vmatprep.subr.mxu0 0.0
      %1217 = vmatpush1.msra.mxu0 0.0
      %1218 = vmatprep.subr.mxu0 0.0
      %1219 = vmatpush1.msra.mxu0 0.0
      %1220 = vmatprep.subr.mxu0 0.0
      %1221 = vmatpush1.msra.mxu0 0.0
      %1222 = vmatprep.subr.mxu0 0.0
      %1223 = vmatpush1.msra.mxu0 0.0
      %1224 = vmatprep.subr.mxu0 0.0
      %1225 = vmatpush1.msra.mxu0 0.0
      %1226 = vmatprep.subr.mxu0 0.0
      %1227 = vmatpush1.msra.mxu0 0.0
      %1228 = vmatprep.subr.mxu0 0.0
      %1229 = vmatpush1.msra.mxu0 0.0
      %1230 = vmatprep.subr.mxu0 0.0
      %1231 = vmatpush1.msra.mxu0 0.0
      %1232 = vmatprep.subr.mxu0 0.0
      %1233 = vmatpush1.msra.mxu0 0.0
      %1234 = vmatprep.subr.mxu0 0.0
      %1235 = vmatpush1.msra.mxu0 0.0
      %1236 = vmatprep.subr.mxu0 0.0
      %1237 = vmatpush1.msra.mxu0 0.0
      %1238 = vmatprep.subr.mxu0 0.0
      %1239 = vmatpush1.msra.mxu0 0.0
      %1240 = vmatprep.subr.mxu0 0.0
      %1241 = vmatpush1.msra.mxu0 0.0
      %1242 = vmatprep.subr.mxu0 0.0
      %1243 = vmatpush1.msra.mxu0 0.0
      %1244 = vmatprep.subr.mxu0 0.0
      %1245 = vmatpush1.msra.mxu0 0.0
      %1246 = vmatprep.subr.mxu0 0.0
      %1247 = vmatpush1.msra.mxu0 0.0
      %1248 = vmatprep.subr.mxu0 0.0
      %1249 = vmatpush1.msra.mxu0 0.0
      %1250 = vmatprep.subr.mxu0 0.0
      %1251 = vmatpush1.msra.mxu0 0.0
      %1252 = vmatprep.subr.mxu0 0.0
      %1253 = vmatpush1.msra.mxu0 0.0
      %1254 = vmatprep.subr.mxu0 0.0
      %1255 = vmatpush1.msra.mxu0 0.0
      %1256 = vmatprep.subr.mxu0 0.0
      %1257 = vmatpush1.msra.mxu0 0.0
      %1258 = vmatprep.subr.mxu0 0.0
      %1259 = vmatpush1.msra.mxu0 0.0
      %1260 = vmatprep.subr.mxu0 0.0
      %1261 = vmatpush1.msra.mxu0 0.0
      %1262 = vmatprep.subr.mxu0 0.0
      %1263 = vmatpush1.msra.mxu0 0.0
      %1264 = vmatprep.subr.mxu0 0.0
      %1265 = vmatpush1.msra.mxu0 0.0
      %1266 = vmatprep.mubr.f32.mxu0 0.0
      %v1267 = vand.u32 %v483, 4294901760
      %1268 = vmatmul.mubr.f32.gmra.mrb[0].mxu0 %v1267
      %v1269 = vpop.f32.mrb[0].mxu0
      %v1270 = vadd.f32 %v1156, %v1269
      %v1271 = vpop.f32.mrb[0].mxu0
      %v1272 = vadd.f32 %v1158, %v1271
      %1273 = vmatprep.mubr.f32.mxu0 0.0
      %v1274 = vand.u32 %v486, 4294901760
      %1275 = vmatmul.mubr.f32.gmra.mrb[0].mxu0 %v1274
      %v1276 = vpop.f32.mrb[0].mxu0
      %v1277 = vadd.f32 %v1167, %v1276
      %v1278 = vpop.f32.mrb[0].mxu0
      %v1279 = vadd.f32 %v1169, %v1278
      %1280 = vmatprep.mubr.f32.mxu0 0.0
      %v1281 = vand.u32 %v489, 4294901760
      %1282 = vmatmul.mubr.f32.gmra.mrb[0].mxu0 %v1281
      %v1283 = vpop.f32.mrb[0].mxu0
      %v1284 = vadd.f32 %v1178, %v1283
      %v1285 = vpop.f32.mrb[0].mxu0
      %v1286 = vadd.f32 %v1180, %v1285
      %1287 = vdwg.mxu0
      %v1288 = vand.u32 %v469, 4294901760
      %v1289 = vsub.f32 %v469, %v1288
      %1290 = vmatprep.subr.mxu0 %v1289
      %v1291 = vand.u32 %v467, 4294901760
      %v1292 = vsub.f32 %v467, %v1291
      %1293 = vmatpush1.msra.mxu0 %v1292
      %v1294 = vand.u32 %v477, 4294901760
      %v1295 = vsub.f32 %v477, %v1294
      %1296 = vmatprep.subr.mxu0 %v1295
      %v1297 = vand.u32 %v475, 4294901760
      %v1298 = vsub.f32 %v475, %v1297
      %1299 = vmatpush1.msra.mxu0 %v1298
      %1300 = vmatprep.subr.mxu0 0.0
      %1301 = vmatpush1.msra.mxu0 0.0
      %1302 = vmatprep.subr.mxu0 0.0
      %1303 = vmatpush1.msra.mxu0 0.0
      %1304 = vmatprep.subr.mxu0 0.0
      %1305 = vmatpush1.msra.mxu0 0.0
      %1306 = vmatprep.subr.mxu0 0.0
      %1307 = vmatpush1.msra.mxu0 0.0
      %1308 = vmatprep.subr.mxu0 0.0
      %1309 = vmatpush1.msra.mxu0 0.0
      %1310 = vmatprep.subr.mxu0 0.0
      %1311 = vmatpush1.msra.mxu0 0.0
      %1312 = vmatprep.subr.mxu0 0.0
      %1313 = vmatpush1.msra.mxu0 0.0
      %1314 = vmatprep.subr.mxu0 0.0
      %1315 = vmatpush1.msra.mxu0 0.0
      %1316 = vmatprep.subr.mxu0 0.0
      %1317 = vmatpush1.msra.mxu0 0.0
      %1318 = vmatprep.subr.mxu0 0.0
      %1319 = vmatpush1.msra.mxu0 0.0
      %1320 = vmatprep.subr.mxu0 0.0
      %1321 = vmatpush1.msra.mxu0 0.0
      %1322 = vmatprep.subr.mxu0 0.0
      %1323 = vmatpush1.msra.mxu0 0.0
      %1324 = vmatprep.subr.mxu0 0.0
      %1325 = vmatpush1.msra.mxu0 0.0
      %1326 = vmatprep.subr.mxu0 0.0
      %1327 = vmatpush1.msra.mxu0 0.0
      %1328 = vmatprep.subr.mxu0 0.0
      %1329 = vmatpush1.msra.mxu0 0.0
      %1330 = vmatprep.subr.mxu0 0.0
      %1331 = vmatpush1.msra.mxu0 0.0
      %1332 = vmatprep.subr.mxu0 0.0
      %1333 = vmatpush1.msra.mxu0 0.0
      %1334 = vmatprep.subr.mxu0 0.0
      %1335 = vmatpush1.msra.mxu0 0.0
      %1336 = vmatprep.subr.mxu0 0.0
      %1337 = vmatpush1.msra.mxu0 0.0
      %1338 = vmatprep.subr.mxu0 0.0
      %1339 = vmatpush1.msra.mxu0 0.0
      %1340 = vmatprep.subr.mxu0 0.0
      %1341 = vmatpush1.msra.mxu0 0.0
      %1342 = vmatprep.subr.mxu0 0.0
      %1343 = vmatpush1.msra.mxu0 0.0
      %1344 = vmatprep.subr.mxu0 0.0
      %1345 = vmatpush1.msra.mxu0 0.0
      %1346 = vmatprep.subr.mxu0 0.0
      %1347 = vmatpush1.msra.mxu0 0.0
      %1348 = vmatprep.subr.mxu0 0.0
      %1349 = vmatpush1.msra.mxu0 0.0
      %1350 = vmatprep.subr.mxu0 0.0
      %1351 = vmatpush1.msra.mxu0 0.0
      %1352 = vmatprep.subr.mxu0 0.0
      %1353 = vmatpush1.msra.mxu0 0.0
      %1354 = vmatprep.subr.mxu0 0.0
      %1355 = vmatpush1.msra.mxu0 0.0
      %1356 = vmatprep.subr.mxu0 0.0
      %1357 = vmatpush1.msra.mxu0 0.0
      %1358 = vmatprep.subr.mxu0 0.0
      %1359 = vmatpush1.msra.mxu0 0.0
      %1360 = vmatprep.mubr.f32.mxu0 0.0
      %v1361 = vand.u32 %v483, 4294901760
      %v1362 = vsub.f32 %v483, %v1361
      %1363 = vmatmul.mubr.f32.gmra.mrb[0].mxu0 %v1362
      %v1364 = vpop.f32.mrb[0].mxu0
      %v1365 = vadd.f32 %v1270, %v1364
      %v1366 = vpop.f32.mrb[0].mxu0
      %v1367 = vadd.f32 %v1272, %v1366
      %1368 = vmatprep.mubr.f32.mxu0 0.0
      %v1369 = vand.u32 %v486, 4294901760
      %v1370 = vsub.f32 %v486, %v1369
      %1371 = vmatmul.mubr.f32.gmra.mrb[0].mxu0 %v1370
      %v1372 = vpop.f32.mrb[0].mxu0
      %v1373 = vadd.f32 %v1277, %v1372
      %v1374 = vpop.f32.mrb[0].mxu0
      %v1375 = vadd.f32 %v1279, %v1374
      %1376 = vmatprep.mubr.f32.mxu0 0.0
      %v1377 = vand.u32 %v489, 4294901760
      %v1378 = vsub.f32 %v489, %v1377
      %1379 = vmatmul.mubr.f32.gmra.mrb[0].mxu0 %v1378
      %v1380 = vpop.f32.mrb[0].mxu0
      %v1381 = vadd.f32 %v1284, %v1380
      %v1382 = vpop.f32.mrb[0].mxu0
      %v1383 = vadd.f32 %v1286, %v1382
      %1384 = vdwg.mxu0
      %v1385 = vand.u32 %v469, 4294901760
      %1386 = vmatprep.subr.mxu0 %v1385
      %v1387 = vand.u32 %v467, 4294901760
      %1388 = vmatpush1.msra.mxu0 %v1387
      %v1389 = vand.u32 %v477, 4294901760
      %1390 = vmatprep.subr.mxu0 %v1389
      %v1391 = vand.u32 %v475, 4294901760
      %1392 = vmatpush1.msra.mxu0 %v1391
      %1393 = vmatprep.subr.mxu0 0.0
      %1394 = vmatpush1.msra.mxu0 0.0
      %1395 = vmatprep.subr.mxu0 0.0
      %1396 = vmatpush1.msra.mxu0 0.0
      %1397 = vmatprep.subr.mxu0 0.0
      %1398 = vmatpush1.msra.mxu0 0.0
      %1399 = vmatprep.subr.mxu0 0.0
      %1400 = vmatpush1.msra.mxu0 0.0
      %1401 = vmatprep.subr.mxu0 0.0
      %1402 = vmatpush1.msra.mxu0 0.0
      %1403 = vmatprep.subr.mxu0 0.0
      %1404 = vmatpush1.msra.mxu0 0.0
      %1405 = vmatprep.subr.mxu0 0.0
      %1406 = vmatpush1.msra.mxu0 0.0
      %1407 = vmatprep.subr.mxu0 0.0
      %1408 = vmatpush1.msra.mxu0 0.0
      %1409 = vmatprep.subr.mxu0 0.0
      %1410 = vmatpush1.msra.mxu0 0.0
      %1411 = vmatprep.subr.mxu0 0.0
      %1412 = vmatpush1.msra.mxu0 0.0
      %1413 = vmatprep.subr.mxu0 0.0
      %1414 = vmatpush1.msra.mxu0 0.0
      %1415 = vmatprep.subr.mxu0 0.0
      %1416 = vmatpush1.msra.mxu0 0.0
      %1417 = vmatprep.subr.mxu0 0.0
      %1418 = vmatpush1.msra.mxu0 0.0
      %1419 = vmatprep.subr.mxu0 0.0
      %1420 = vmatpush1.msra.mxu0 0.0
      %1421 = vmatprep.subr.mxu0 0.0
      %1422 = vmatpush1.msra.mxu0 0.0
      %1423 = vmatprep.subr.mxu0 0.0
      %1424 = vmatpush1.msra.mxu0 0.0
      %1425 = vmatprep.subr.mxu0 0.0
      %1426 = vmatpush1.msra.mxu0 0.0
      %1427 = vmatprep.subr.mxu0 0.0
      %1428 = vmatpush1.msra.mxu0 0.0
      %1429 = vmatprep.subr.mxu0 0.0
      %1430 = vmatpush1.msra.mxu0 0.0
      %1431 = vmatprep.subr.mxu0 0.0
      %1432 = vmatpush1.msra.mxu0 0.0
      %1433 = vmatprep.subr.mxu0 0.0
      %1434 = vmatpush1.msra.mxu0 0.0
      %1435 = vmatprep.subr.mxu0 0.0
      %1436 = vmatpush1.msra.mxu0 0.0
      %1437 = vmatprep.subr.mxu0 0.0
      %1438 = vmatpush1.msra.mxu0 0.0
      %1439 = vmatprep.subr.mxu0 0.0
      %1440 = vmatpush1.msra.mxu0 0.0
      %1441 = vmatprep.subr.mxu0 0.0
      %1442 = vmatpush1.msra.mxu0 0.0
      %1443 = vmatprep.subr.mxu0 0.0
      %1444 = vmatpush1.msra.mxu0 0.0
      %1445 = vmatprep.subr.mxu0 0.0
      %1446 = vmatpush1.msra.mxu0 0.0
      %1447 = vmatprep.subr.mxu0 0.0
      %1448 = vmatpush1.msra.mxu0 0.0
      %1449 = vmatprep.subr.mxu0 0.0
      %1450 = vmatpush1.msra.mxu0 0.0
      %1451 = vmatprep.subr.mxu0 0.0
      %1452 = vmatpush1.msra.mxu0 0.0
      %1453 = vmatprep.mubr.f32.mxu0 0.0
      %v1454 = vand.u32 %v483, 4294901760
      %v1455 = vsub.f32 %v483, %v1454
      %v1456 = vand.u32 %v1455, 4294901760
      %1457 = vmatmul.mubr.f32.gmra.mrb[0].mxu0 %v1456
      %v1458 = vpop.f32.mrb[0].mxu0
      %v1459 = vadd.f32 %v1365, %v1458
      %v1460 = vpop.f32.mrb[0].mxu0
      %v1461 = vadd.f32 %v1367, %v1460
      %1462 = vmatprep.mubr.f32.mxu0 0.0
      %v1463 = vand.u32 %v486, 4294901760
      %v1464 = vsub.f32 %v486, %v1463
      %v1465 = vand.u32 %v1464, 4294901760
      %1466 = vmatmul.mubr.f32.gmra.mrb[0].mxu0 %v1465
      %v1467 = vpop.f32.mrb[0].mxu0
      %v1468 = vadd.f32 %v1373, %v1467
      %v1469 = vpop.f32.mrb[0].mxu0
      %v1470 = vadd.f32 %v1375, %v1469
      %1471 = vmatprep.mubr.f32.mxu0 0.0
      %v1472 = vand.u32 %v489, 4294901760
      %v1473 = vsub.f32 %v489, %v1472
      %v1474 = vand.u32 %v1473, 4294901760
      %1475 = vmatmul.mubr.f32.gmra.mrb[0].mxu0 %v1474
      %v1476 = vpop.f32.mrb[0].mxu0
      %v1477 = vadd.f32 %v1381, %v1476
      %v1478 = vpop.f32.mrb[0].mxu0
      %v1479 = vadd.f32 %v1383, %v1478
      %1480 = vdwg.mxu0
      %v1481 = vand.u32 %v469, 4294901760
      %v1482 = vsub.f32 %v469, %v1481
      %v1483 = vand.u32 %v1482, 4294901760
      %1484 = vmatprep.subr.mxu0 %v1483
      %v1485 = vand.u32 %v467, 4294901760
      %v1486 = vsub.f32 %v467, %v1485
      %v1487 = vand.u32 %v1486, 4294901760
      %1488 = vmatpush1.msra.mxu0 %v1487
      %v1489 = vand.u32 %v477, 4294901760
      %v1490 = vsub.f32 %v477, %v1489
      %v1491 = vand.u32 %v1490, 4294901760
      %1492 = vmatprep.subr.mxu0 %v1491
      %v1493 = vand.u32 %v475, 4294901760
      %v1494 = vsub.f32 %v475, %v1493
      %v1495 = vand.u32 %v1494, 4294901760
      %1496 = vmatpush1.msra.mxu0 %v1495
      %1497 = vmatprep.subr.mxu0 0.0
      %1498 = vmatpush1.msra.mxu0 0.0
      %1499 = vmatprep.subr.mxu0 0.0
      %1500 = vmatpush1.msra.mxu0 0.0
      %1501 = vmatprep.subr.mxu0 0.0
      %1502 = vmatpush1.msra.mxu0 0.0
      %1503 = vmatprep.subr.mxu0 0.0
      %1504 = vmatpush1.msra.mxu0 0.0
      %1505 = vmatprep.subr.mxu0 0.0
      %1506 = vmatpush1.msra.mxu0 0.0
      %1507 = vmatprep.subr.mxu0 0.0
      %1508 = vmatpush1.msra.mxu0 0.0
      %1509 = vmatprep.subr.mxu0 0.0
      %1510 = vmatpush1.msra.mxu0 0.0
      %1511 = vmatprep.subr.mxu0 0.0
      %1512 = vmatpush1.msra.mxu0 0.0
      %1513 = vmatprep.subr.mxu0 0.0
      %1514 = vmatpush1.msra.mxu0 0.0
      %1515 = vmatprep.subr.mxu0 0.0
      %1516 = vmatpush1.msra.mxu0 0.0
      %1517 = vmatprep.subr.mxu0 0.0
      %1518 = vmatpush1.msra.mxu0 0.0
      %1519 = vmatprep.subr.mxu0 0.0
      %1520 = vmatpush1.msra.mxu0 0.0
      %1521 = vmatprep.subr.mxu0 0.0
      %1522 = vmatpush1.msra.mxu0 0.0
      %1523 = vmatprep.subr.mxu0 0.0
      %1524 = vmatpush1.msra.mxu0 0.0
      %1525 = vmatprep.subr.mxu0 0.0
      %1526 = vmatpush1.msra.mxu0 0.0
      %1527 = vmatprep.subr.mxu0 0.0
      %1528 = vmatpush1.msra.mxu0 0.0
      %1529 = vmatprep.subr.mxu0 0.0
      %1530 = vmatpush1.msra.mxu0 0.0
      %1531 = vmatprep.subr.mxu0 0.0
      %1532 = vmatpush1.msra.mxu0 0.0
      %1533 = vmatprep.subr.mxu0 0.0
      %1534 = vmatpush1.msra.mxu0 0.0
      %1535 = vmatprep.subr.mxu0 0.0
      %1536 = vmatpush1.msra.mxu0 0.0
      %1537 = vmatprep.subr.mxu0 0.0
      %1538 = vmatpush1.msra.mxu0 0.0
      %1539 = vmatprep.subr.mxu0 0.0
      %1540 = vmatpush1.msra.mxu0 0.0
      %1541 = vmatprep.subr.mxu0 0.0
      %1542 = vmatpush1.msra.mxu0 0.0
      %1543 = vmatprep.subr.mxu0 0.0
      %1544 = vmatpush1.msra.mxu0 0.0
      %1545 = vmatprep.subr.mxu0 0.0
      %1546 = vmatpush1.msra.mxu0 0.0
      %1547 = vmatprep.subr.mxu0 0.0
      %1548 = vmatpush1.msra.mxu0 0.0
      %1549 = vmatprep.subr.mxu0 0.0
      %1550 = vmatpush1.msra.mxu0 0.0
      %1551 = vmatprep.subr.mxu0 0.0
      %1552 = vmatpush1.msra.mxu0 0.0
      %1553 = vmatprep.subr.mxu0 0.0
      %1554 = vmatpush1.msra.mxu0 0.0
      %1555 = vmatprep.subr.mxu0 0.0
      %1556 = vmatpush1.msra.mxu0 0.0
      %1557 = vmatprep.mubr.f32.mxu0 0.0
      %v1558 = vand.u32 %v483, 4294901760
      %1559 = vmatmul.mubr.f32.gmra.mrb[0].mxu0 %v1558
      %v1560 = vpop.f32.mrb[0].mxu0
      %v1561 = vadd.f32 %v1459, %v1560
      %v1562 = vpop.f32.mrb[0].mxu0
      %v1563 = vadd.f32 %v1461, %v1562
      %1564 = vmatprep.mubr.f32.mxu0 0.0
      %v1565 = vand.u32 %v486, 4294901760
      %1566 = vmatmul.mubr.f32.gmra.mrb[0].mxu0 %v1565
      %v1567 = vpop.f32.mrb[0].mxu0
      %v1568 = vadd.f32 %v1468, %v1567
      %v1569 = vpop.f32.mrb[0].mxu0
      %v1570 = vadd.f32 %v1470, %v1569
      %1571 = vmatprep.mubr.f32.mxu0 0.0
      %v1572 = vand.u32 %v489, 4294901760
      %1573 = vmatmul.mubr.f32.gmra.mrb[0].mxu0 %v1572
      %v1574 = vpop.f32.mrb[0].mxu0
      %v1575 = vadd.f32 %v1477, %v1574
      %v1576 = vpop.f32.mrb[0].mxu0
      %v1577 = vadd.f32 %v1479, %v1576
      %1578 = vdwg.mxu0
      %v1579 = vand.u32 %v469, 4294901760
      %1580 = vmatprep.subr.mxu0 %v1579
      %v1581 = vand.u32 %v467, 4294901760
      %1582 = vmatpush1.msra.mxu0 %v1581
      %v1583 = vand.u32 %v477, 4294901760
      %1584 = vmatprep.subr.mxu0 %v1583
      %v1585 = vand.u32 %v475, 4294901760
      %1586 = vmatpush1.msra.mxu0 %v1585
      %1587 = vmatprep.subr.mxu0 0.0
      %1588 = vmatpush1.msra.mxu0 0.0
      %1589 = vmatprep.subr.mxu0 0.0
      %1590 = vmatpush1.msra.mxu0 0.0
      %1591 = vmatprep.subr.mxu0 0.0
      %1592 = vmatpush1.msra.mxu0 0.0
      %1593 = vmatprep.subr.mxu0 0.0
      %1594 = vmatpush1.msra.mxu0 0.0
      %1595 = vmatprep.subr.mxu0 0.0
      %1596 = vmatpush1.msra.mxu0 0.0
      %1597 = vmatprep.subr.mxu0 0.0
      %1598 = vmatpush1.msra.mxu0 0.0
      %1599 = vmatprep.subr.mxu0 0.0
      %1600 = vmatpush1.msra.mxu0 0.0
      %1601 = vmatprep.subr.mxu0 0.0
      %1602 = vmatpush1.msra.mxu0 0.0
      %1603 = vmatprep.subr.mxu0 0.0
      %1604 = vmatpush1.msra.mxu0 0.0
      %1605 = vmatprep.subr.mxu0 0.0
      %1606 = vmatpush1.msra.mxu0 0.0
      %1607 = vmatprep.subr.mxu0 0.0
      %1608 = vmatpush1.msra.mxu0 0.0
      %1609 = vmatprep.subr.mxu0 0.0
      %1610 = vmatpush1.msra.mxu0 0.0
      %1611 = vmatprep.subr.mxu0 0.0
      %1612 = vmatpush1.msra.mxu0 0.0
      %1613 = vmatprep.subr.mxu0 0.0
      %1614 = vmatpush1.msra.mxu0 0.0
      %1615 = vmatprep.subr.mxu0 0.0
      %1616 = vmatpush1.msra.mxu0 0.0
      %1617 = vmatprep.subr.mxu0 0.0
      %1618 = vmatpush1.msra.mxu0 0.0
      %1619 = vmatprep.subr.mxu0 0.0
      %1620 = vmatpush1.msra.mxu0 0.0
      %1621 = vmatprep.subr.mxu0 0.0
      %1622 = vmatpush1.msra.mxu0 0.0
      %1623 = vmatprep.subr.mxu0 0.0
      %1624 = vmatpush1.msra.mxu0 0.0
      %1625 = vmatprep.subr.mxu0 0.0
      %1626 = vmatpush1.msra.mxu0 0.0
      %1627 = vmatprep.subr.mxu0 0.0
      %1628 = vmatpush1.msra.mxu0 0.0
      %1629 = vmatprep.subr.mxu0 0.0
      %1630 = vmatpush1.msra.mxu0 0.0
      %1631 = vmatprep.subr.mxu0 0.0
      %1632 = vmatpush1.msra.mxu0 0.0
      %1633 = vmatprep.subr.mxu0 0.0
      %1634 = vmatpush1.msra.mxu0 0.0
      %1635 = vmatprep.subr.mxu0 0.0
      %1636 = vmatpush1.msra.mxu0 0.0
      %1637 = vmatprep.subr.mxu0 0.0
      %1638 = vmatpush1.msra.mxu0 0.0
      %1639 = vmatprep.subr.mxu0 0.0
      %1640 = vmatpush1.msra.mxu0 0.0
      %1641 = vmatprep.subr.mxu0 0.0
      %1642 = vmatpush1.msra.mxu0 0.0
      %1643 = vmatprep.subr.mxu0 0.0
      %1644 = vmatpush1.msra.mxu0 0.0
      %1645 = vmatprep.subr.mxu0 0.0
      %1646 = vmatpush1.msra.mxu0 0.0
      %1647 = vmatprep.mubr.f32.mxu0 0.0
      %v1648 = vand.u32 %v483, 4294901760
      %1649 = vmatmul.mubr.f32.gmra.mrb[0].mxu0 %v1648
      %v1650 = vpop.f32.mrb[0].mxu0
      %v1651 = vadd.f32 %v1561, %v1650
      %v1652 = vpop.f32.mrb[0].mxu0
      %v1653 = vadd.f32 %v1563, %v1652
      %1654 = vmatprep.mubr.f32.mxu0 0.0
      %v1655 = vand.u32 %v486, 4294901760
      %1656 = vmatmul.mubr.f32.gmra.mrb[0].mxu0 %v1655
      %v1657 = vpop.f32.mrb[0].mxu0
      %v1658 = vadd.f32 %v1568, %v1657
      %v1659 = vpop.f32.mrb[0].mxu0
      %v1660 = vadd.f32 %v1570, %v1659
      %1661 = vmatprep.mubr.f32.mxu0 0.0
      %v1662 = vand.u32 %v489, 4294901760
      %1663 = vmatmul.mubr.f32.gmra.mrb[0].mxu0 %v1662
      %v1664 = vpop.f32.mrb[0].mxu0
      %v1665 = vadd.f32 %v1575, %v1664
      %v1666 = vpop.f32.mrb[0].mxu0
      %v1667 = vadd.f32 %v1577, %v1666
      %1668 = vdwg.mxu0
      %v1669 = vmul.f32 %v1062, %v463
      %v1670 = vmul.f32 %v1064, %v465
      %v1671 = vmul.f32 %v1651, %v467
      %v1672 = vmul.f32 %v1653, %v469
      %v1673 = vmul.f32 %v1069, %v471
      %v1674 = vmul.f32 %v1071, %v473
      %v1675 = vmul.f32 %v1658, %v475
      %v1676 = vmul.f32 %v1660, %v477
      %v1677 = vadd.f32 %v1669, %v1673
      %v1678 = vrot.slane %v1677, 4
      %v1679 = vadd.f32 %v1677, %v1678
      %v1680 = vrot.slane %v1679, 2
      %v1681 = vadd.f32 %v1679, %v1680
      %v1682 = vrot.slane %v1681, 1
      %v1683 = vadd.f32 %v1681, %v1682
      %v1684 = vadd.f32 %v1670, %v1674
      %v1685 = vrot.slane %v1684, 4
      %v1686 = vadd.f32 %v1684, %v1685
      %v1687 = vrot.slane %v1686, 2
      %v1688 = vadd.f32 %v1686, %v1687
      %v1689 = vrot.slane %v1688, 1
      %v1690 = vadd.f32 %v1688, %v1689
      %v1691 = vadd.f32 %v1671, %v1675
      %v1692 = vrot.slane %v1691, 4
      %v1693 = vadd.f32 %v1691, %v1692
      %v1694 = vrot.slane %v1693, 2
      %v1695 = vadd.f32 %v1693, %v1694
      %v1696 = vrot.slane %v1695, 1
      %v1697 = vadd.f32 %v1695, %v1696
      %v1698 = vadd.f32 %v1672, %v1676
      %v1699 = vrot.slane %v1698, 4
      %v1700 = vadd.f32 %v1698, %v1699
      %v1701 = vrot.slane %v1700, 2
      %v1702 = vadd.f32 %v1700, %v1701
      %v1703 = vrot.slane %v1702, 1
      %v1704 = vadd.f32 %v1702, %v1703
      %v1705 = vadd.f32 %v1683, 1.0
      %v1706 = vadd.f32 %v1690, 1.0
      %v1707 = vadd.f32 %v1697, 1.0
      %v1708 = vadd.f32 %v1704, 1.0
      %vm1709 = vcmask 1040384
      %v1710 = vsel %vm1709, %v1076, %v1705
      %v1711 = vsel %vm1709, %v1078, %v1706
      %v1712 = vsel %vm1709, %v1665, %v1707
      %v1713 = vsel %vm1709, %v1667, %v1708
      %v1718 = vcombine.low %v1710, %v1711
      %v1719 = vcombine.low %v1712, %v1713
      %v1721 = vunpack.c.l.s4 1983009808
      %v1722 = vunpack.c.0.s8 %v1721
      %v1723 = vlaneseq
      %v1724 = vshrl.u32 %v1723, 7
      %v1725 = vsub.s32 %v1722, %v1724
      %v1726 = vrot.slane %v1718, %v1725
      %v1728 = vunpack.c.l.s4 1983009808
      %v1729 = vunpack.c.0.s8 %v1728
      %v1730 = vlaneseq
      %v1731 = vshrl.u32 %v1730, 7
      %v1732 = vsub.s32 %v1729, %v1731
      %v1733 = vrot.slane %v1719, %v1732
      %v1734 = vcombine.low %v1726, %v1733
      %1736 = vst [vmem:[%s172] sm:$0xff] %v1734
      %s1737 = smul.u32 4, %s14
      %p1738 = scmp.lt.s32.totalorder %s1737, 7
      %s1739 = scalar_select %p1738, %s1737, 7
      %s1740 = smul.addr %s1739, 2
      %s1741 = scalar_lea.vmem %s3, %s1740
      // Predicated region
      $region33: #{svgp_forward.3} parent=31 // pred_check
        %p1742 = pneg %p100
      $region34: #{svgp_forward.3} parent=31 // pred_check_branch
        %1744 = sbr.rel (%p1742) target = $region36
      $region35: #{svgp_forward.3} parent=31 // pred_region
        %s1745 = smul.u32 4, %s14
      $region36: #{svgp_forward.3} parent=31 // pred_fallthru
        _
    $region32: #{svgp_forward.3} parent=5 // pred_fallthru
      _
    %p1746 = scmp.le.s32.totalorder 2, %s9
    // Predicated region
    $region37: #{svgp_forward.3} parent=5 // pred_check
      %p1747 = pneg %p1746
    $region38: #{svgp_forward.3} parent=5 // pred_check_branch
      %1749 = sbr.rel (%p1747) target = $region40
    $region39: #{svgp_forward.3} parent=5 // pred_region
      %s1750 = ssub.s32 %s9, 2
      // Predicated region
      $region41: #{svgp_forward.3} parent=39 // pred_check
        %p1751 = pneg %p106
      $region42: #{svgp_forward.3} parent=39 // pred_check_branch
        %1753 = sbr.rel (%p1751) target = $region44
      $region43: #{svgp_forward.3} parent=39 // pred_region
        %s1754 = smul.u32 4, %s15
        %p1755 = scmp.lt.s32.totalorder %s1754, 7
        %s1756 = scalar_select %p1755, %s1754, 7
        %s1757 = smul.addr %s1756, 2
        %s1758 = scalar_lea.vmem %s3, %s1757
      $region44: #{svgp_forward.3} parent=39 // pred_fallthru
        _
    $region40: #{svgp_forward.3} parent=5 // pred_fallthru
      _
  $region6: #{svgp_forward.3} parent=0 // loop_footer
    %s13 = sadd.s32 1, %s9
  $region7: #{svgp_forward.3} parent=0 // loop_footer_branch
    %8 = sbr.rel target = $region3
  $region8: #{svgp_forward.3} parent=0 // loop_exit
    _

</llo_original>
